<compile_context>
chip_gen: v6e
topology: v6e:2x2x1
jax: 0.10.0
libtpu: 0.0.40
codegen_flags: <defaults>
</compile_context>

<pallas_src>
import functools

import jax
import jax.numpy as jnp
from jax.experimental import pallas as pl
from jax.experimental.pallas import tpu as pltpu


def _ws_head_kernel(x_ref, w1_ref, g1_ref, b1_ref, w2_ref, g2_ref, b2_ref,
                    o_ref,
                    s1_ref, s1sq_ref, scale1_ref, shift1_ref,
                    s2_ref, s2sq_ref, scale2_ref, shift2_ref, pool_ref,
                    *, eps, inv_m, inv_hw):
    """Three-phase streaming kernel over (phase, image, pixel-tile).

    x_ref : (1, 256, T)   channels-major pixel tile of one image (f32)
    w1_ref: (256, 256)    head_1 weight (C_out, C_in), bf16
    g1/b1 : (256, 1)      bn1 gamma / beta (f32)
    w2_ref: (NCp, 256)    head_2 weight (padded C_out, C_in), bf16
    g2/b2 : (NCp, 1)      bn2 gamma / beta (padded, f32)
    o_ref : (NCp, N)      per-image sigmoid-GAP scores (resident accumulator)
    """
    phase = pl.program_id(0)
    n = pl.program_id(1)
    t = pl.program_id(2)
    last_n = pl.num_programs(1) - 1
    last_t = pl.num_programs(2) - 1

    # One-time init of all cross-step accumulators and the resident output.
    @pl.when((phase == 0) & (n == 0) & (t == 0))
    def _init():
        o_ref[...] = jnp.zeros_like(o_ref)
        s1_ref[...] = jnp.zeros_like(s1_ref)
        s1sq_ref[...] = jnp.zeros_like(s1sq_ref)
        s2_ref[...] = jnp.zeros_like(s2_ref)
        s2sq_ref[...] = jnp.zeros_like(s2sq_ref)

    # head_1: 1x1 conv == (Cout,Cin) x (Cin,P) MXU matmul, bf16 in / f32 acc.
    x_bf = x_ref[0].astype(jnp.bfloat16)                      # (256, T)
    h = jnp.dot(w1_ref[...], x_bf,
                preferred_element_type=jnp.float32)           # (256, T) f32

    # ---- phase 0: bn1 batch statistics (one-pass sum / sum-of-squares) ----
    @pl.when(phase == 0)
    def _phase0():
        s1_ref[...] += jnp.sum(h, axis=1, keepdims=True)
        s1sq_ref[...] += jnp.sum(h * h, axis=1, keepdims=True)

        @pl.when((n == last_n) & (t == last_t))
        def _finalize_bn1():
            mu = s1_ref[...] * inv_m
            var = jnp.maximum(s1sq_ref[...] * inv_m - mu * mu, 0.0)
            sc = g1_ref[...] * jax.lax.rsqrt(var + eps)
            scale1_ref[...] = sc
            shift1_ref[...] = b1_ref[...] - mu * sc

    # ---- phases 1 & 2 share: bn1 apply, relu, head_2 matmul ----
    @pl.when(phase > 0)
    def _phase12():
        hr = jnp.maximum(h * scale1_ref[...] + shift1_ref[...], 0.0)
        z = jnp.dot(w2_ref[...], hr.astype(jnp.bfloat16),
                    preferred_element_type=jnp.float32)       # (NCp, T) f32

        # phase 1: bn2 batch statistics
        @pl.when(phase == 1)
        def _phase1():
            s2_ref[...] += jnp.sum(z, axis=1, keepdims=True)
            s2sq_ref[...] += jnp.sum(z * z, axis=1, keepdims=True)

            @pl.when((n == last_n) & (t == last_t))
            def _finalize_bn2():
                mu = s2_ref[...] * inv_m
                var = jnp.maximum(s2sq_ref[...] * inv_m - mu * mu, 0.0)
                sc = g2_ref[...] * jax.lax.rsqrt(var + eps)
                scale2_ref[...] = sc
                shift2_ref[...] = b2_ref[...] - mu * sc

        # phase 2: bn2 apply, sigmoid, per-image global average pool
        @pl.when(phase == 2)
        def _phase2():
            zn = z * scale2_ref[...] + shift2_ref[...]
            s = 1.0 / (1.0 + jnp.exp(-zn))                    # exp on the EUP

            @pl.when(t == 0)
            def _reset_pool():
                pool_ref[...] = jnp.zeros_like(pool_ref)

            pool_ref[...] += jnp.sum(s, axis=1, keepdims=True)

            @pl.when(t == last_t)
            def _emit():
                col = jax.lax.broadcasted_iota(jnp.int32, o_ref.shape, 1)
                o_ref[...] += jnp.where(col == n,
                                        pool_ref[...] * inv_hw, 0.0)


def _ws_head_scores(feat_p6, params, *, eps=1e-5):
    """conv1x1 -> BN -> ReLU -> conv1x1 -> BN -> sigmoid -> GAP via Pallas."""
    n_img, c_in, hgt, wid = feat_p6.shape
    assert c_in == 256
    hw = hgt * wid
    w1, g1, b1 = params["w1"], params["g1"], params["b1"]
    w2, g2, b2 = params["w2"], params["g2"], params["b2"]
    num_class = w2.shape[0]

    # channels-major layout straight from NCHW (free reshape, no transpose).
    x3d = feat_p6.reshape(n_img, c_in, hw)

    # pad class dim to a sublane multiple; padded rows have w=0, gamma=0, beta=0
    # -> their normalized output is exactly 0 (sliced off below).
    nc_pad = max(8, ((num_class + 7) // 8) * 8)
    pad = nc_pad - num_class
    w2p = jnp.pad(w2, ((0, pad), (0, 0)))
    g2p = jnp.pad(g2, (0, pad)).reshape(nc_pad, 1)
    b2p = jnp.pad(b2, (0, pad)).reshape(nc_pad, 1)

    # bf16 weights for the MXU (accumulation stays f32 in-kernel).
    w1_bf = w1.astype(jnp.bfloat16)
    w2p_bf = w2p.astype(jnp.bfloat16)
    g1_2d = g1.reshape(c_in, 1)
    b1_2d = b1.reshape(c_in, 1)

    # pixel tile: largest lane-aligned divisor of HW, else the full map.
    tile_hw = hw
    for cand in (2048, 1024, 512, 256, 128):
        if hw % cand == 0:
            tile_hw = cand
            break
    nt = hw // tile_hw

    kernel = functools.partial(_ws_head_kernel, eps=eps,
                               inv_m=1.0 / float(n_img * hw),
                               inv_hw=1.0 / float(hw))

    out = pl.pallas_call(
        kernel,
        out_shape=jax.ShapeDtypeStruct((nc_pad, n_img), jnp.float32),
        grid_spec=pltpu.PrefetchScalarGridSpec(
            num_scalar_prefetch=0,
            grid=(3, n_img, nt),
            in_specs=[
                pl.BlockSpec((1, c_in, tile_hw), lambda p, n, t: (n, 0, t)),
                pl.BlockSpec((c_in, c_in), lambda p, n, t: (0, 0)),
                pl.BlockSpec((c_in, 1), lambda p, n, t: (0, 0)),
                pl.BlockSpec((c_in, 1), lambda p, n, t: (0, 0)),
                pl.BlockSpec((nc_pad, c_in), lambda p, n, t: (0, 0)),
                pl.BlockSpec((nc_pad, 1), lambda p, n, t: (0, 0)),
                pl.BlockSpec((nc_pad, 1), lambda p, n, t: (0, 0)),
            ],
            out_specs=pl.BlockSpec((nc_pad, n_img), lambda p, n, t: (0, 0)),
            scratch_shapes=[
                pltpu.VMEM((c_in, 1), jnp.float32),    # s1
                pltpu.VMEM((c_in, 1), jnp.float32),    # s1sq
                pltpu.VMEM((c_in, 1), jnp.float32),    # scale1
                pltpu.VMEM((c_in, 1), jnp.float32),    # shift1
                pltpu.VMEM((nc_pad, 1), jnp.float32),  # s2
                pltpu.VMEM((nc_pad, 1), jnp.float32),  # s2sq
                pltpu.VMEM((nc_pad, 1), jnp.float32),  # scale2
                pltpu.VMEM((nc_pad, 1), jnp.float32),  # shift2
                pltpu.VMEM((nc_pad, 1), jnp.float32),  # pool accumulator
            ],
        ),
        compiler_params=pltpu.CompilerParams(
            dimension_semantics=("arbitrary", "arbitrary", "arbitrary")),
    )(x3d, w1_bf, g1_2d, b1_2d, w2p_bf, g2p, b2p)

    # tiny (NCp, N) -> (N, NC) in plain-JAX glue
    return out.T[:, :num_class]


def ws_head_forward(gt_weak_instances, gt_class_weak, feat_p6, params,
                    branch="supervised"):
    """JAX/Pallas equivalent of ws_head.forward.

    feat_p6: (N, 256, H, W) float32 (NCHW, like the PyTorch input)
    gt_weak_instances: (N, num_class) float32 zeros, filled with 1.0 at gt classes
    gt_class_weak: (N, K) int32 class indices per image
    """
    n_img = feat_p6.shape[0]
    scores = _ws_head_scores(feat_p6, params)                 # (N, num_class)

    # glue: fetch_image_gt — scatter 1.0 at the gt class indices of each image
    batch_idx = jnp.arange(n_img)[:, None]
    multi_label_gt = gt_weak_instances.at[batch_idx, gt_class_weak].set(1.0)

    # glue: binary_cross_entropy(reduction='mean') * 0.05
    p = jnp.clip(scores, 1e-12, 1.0 - 1e-12)
    bce = -jnp.mean(multi_label_gt * jnp.log(p) +
                    (1.0 - multi_label_gt) * jnp.log(1.0 - p))
    loss = {"loss_weak_supervised": bce * 0.05}

    if branch == "supervised":
        return loss, None
    return loss, scores


def _reference_forward(feat_p6, params, *, use_bf16=False, eps=1e-5):
    """Plain-JAX reference of the kernel math (training-mode BatchNorm)."""
    n, c, hgt, wid = feat_p6.shape
    hw = hgt * wid
    x = feat_p6.reshape(n, c, hw)
    w1, g1, b1 = params["w1"], params["g1"], params["b1"]
    w2, g2, b2 = params["w2"], params["g2"], params["b2"]

    def mm(w, a):  # (Co,Ci) x (N,Ci,P) -> (N,Co,P)
        if use_bf16:
            return jnp.einsum("oc,ncp->nop", w.astype(jnp.bfloat16),
                              a.astype(jnp.bfloat16),
                              preferred_element_type=jnp.float32)
        return jnp.einsum("oc,ncp->nop", w, a)

    def bn(a, g, b):
        mu = a.mean(axis=(0, 2), keepdims=True)
        var = jnp.maximum((a * a).mean(axis=(0, 2), keepdims=True) - mu * mu,
                          0.0)
        return ((a - mu) * jax.lax.rsqrt(var + eps) * g.reshape(1, -1, 1)
                + b.reshape(1, -1, 1))

    hr = jnp.maximum(bn(mm(w1, x), g1, b1), 0.0)
    z = bn(mm(w2, hr), g2, b2)
    s = 1.0 / (1.0 + jnp.exp(-z))
    return s.mean(axis=2)                                     # (N, NC)


if __name__ == "__main__":
    key = jax.random.PRNGKey(0)
    k_feat, k_w1, k_w2, k_cls = jax.random.split(key, 4)

    N, C, H, W = 2, 256, 16, 16
    NUM_CLASS = 16
    K_GT = 3  # gt classes per image

    feat_p6 = jax.random.normal(k_feat, (N, C, H, W), dtype=jnp.float32)

    # synthetic parameters in PyTorch layout: conv weights are (C_out, C_in)
    params = {
        "w1": 0.02 * jax.random.normal(k_w1, (C, C), dtype=jnp.float32),
        "g1": jnp.ones((C,), jnp.float32),
        "b1": jnp.zeros((C,), jnp.float32),
        "w2": 0.02 * jax.random.normal(k_w2, (NUM_CLASS, C),
                                       dtype=jnp.float32),
        "g2": jnp.ones((NUM_CLASS,), jnp.float32),
        "b2": jnp.zeros((NUM_CLASS,), jnp.float32),
    }

    gt_weak_instances = jnp.zeros((N, NUM_CLASS), jnp.float32)
    gt_class_weak = jax.random.randint(k_cls, (N, K_GT), 0, NUM_CLASS,
                                       dtype=jnp.int32)

    loss, pred = ws_head_forward(gt_weak_instances, gt_class_weak, feat_p6,
                                 params, branch="unsupervised")
    jax.block_until_ready(loss["loss_weak_supervised"])
    jax.block_until_ready(pred)

    # tight check against a reference mirroring the kernel's bf16 matmuls,
    # loose check against the pure-f32 (PyTorch-semantics) reference.
    ref_bf16 = _reference_forward(feat_p6, params, use_bf16=True)
    ref_f32 = _reference_forward(feat_p6, params, use_bf16=False)
    assert jnp.allclose(pred, ref_bf16, atol=2e-3), "kernel mismatch (bf16 ref)"
    assert jnp.allclose(pred, ref_f32, atol=3e-2), "kernel drift vs f32 ref"

    print("KERNEL_OK")
</pallas_src>

<mosaic_0001>
module attributes {stable_mosaic.version = 11 : i64} {
  func.func @_ws_head_kernel(%arg0: i32, %arg1: i32, %arg2: i32, %arg3: memref<1x256x256xf32, #tpu.memory_space<vmem>>, %arg4: memref<256x256xbf16, #tpu.memory_space<vmem>>, %arg5: memref<256x1xf32, #tpu.memory_space<vmem>>, %arg6: memref<256x1xf32, #tpu.memory_space<vmem>>, %arg7: memref<16x256xbf16, #tpu.memory_space<vmem>>, %arg8: memref<16x1xf32, #tpu.memory_space<vmem>>, %arg9: memref<16x1xf32, #tpu.memory_space<vmem>>, %arg10: memref<16x2xf32, #tpu.memory_space<vmem>>, %arg11: memref<256x1xf32, #tpu.memory_space<vmem>>, %arg12: memref<256x1xf32, #tpu.memory_space<vmem>>, %arg13: memref<256x1xf32, #tpu.memory_space<vmem>>, %arg14: memref<256x1xf32, #tpu.memory_space<vmem>>, %arg15: memref<16x1xf32, #tpu.memory_space<vmem>>, %arg16: memref<16x1xf32, #tpu.memory_space<vmem>>, %arg17: memref<16x1xf32, #tpu.memory_space<vmem>>, %arg18: memref<16x1xf32, #tpu.memory_space<vmem>>, %arg19: memref<16x1xf32, #tpu.memory_space<vmem>>) attributes {dimension_semantics = [#tpu.dimension_semantics<arbitrary>, #tpu.dimension_semantics<arbitrary>, #tpu.dimension_semantics<arbitrary>], iteration_bounds = array<i64: 3, 2, 1>, scalar_prefetch = 0 : i64, scratch_operands = 9 : i64, tpu.core_type = #tpu.core_type<tc>, window_params = [{transform_indices = @transform_0, window_bounds = array<i64: 1, 256, 256>}, {pipeline_mode = #tpu.pipeline_mode<synchronous>, transform_indices = @transform_1, window_bounds = array<i64: 256, 256>}, {pipeline_mode = #tpu.pipeline_mode<synchronous>, transform_indices = @transform_2, window_bounds = array<i64: 256, 1>}, {pipeline_mode = #tpu.pipeline_mode<synchronous>, transform_indices = @transform_3, window_bounds = array<i64: 256, 1>}, {pipeline_mode = #tpu.pipeline_mode<synchronous>, transform_indices = @transform_4, window_bounds = array<i64: 16, 256>}, {pipeline_mode = #tpu.pipeline_mode<synchronous>, transform_indices = @transform_5, window_bounds = array<i64: 16, 1>}, {pipeline_mode = #tpu.pipeline_mode<synchronous>, transform_indices = @transform_6, window_bounds = array<i64: 16, 1>}, {pipeline_mode = #tpu.pipeline_mode<synchronous>, transform_indices = @transform_7, window_bounds = array<i64: 16, 2>}]} {
    %c0_i32 = arith.constant 0 : i32
    %0 = arith.cmpi eq, %arg0, %c0_i32 : i32
    %c0_i32_0 = arith.constant 0 : i32
    %1 = arith.cmpi eq, %arg1, %c0_i32_0 : i32
    %2 = arith.andi %0, %1 : i1
    %c0_i32_1 = arith.constant 0 : i32
    %3 = arith.cmpi eq, %arg2, %c0_i32_1 : i32
    %4 = arith.andi %2, %3 : i1
    %5 = arith.extui %4 : i1 to i32
    %c0_i32_2 = arith.constant 0 : i32
    %6 = arith.cmpi ne, %5, %c0_i32_2 : i32
    scf.if %6 {
      %cst_11 = arith.constant 0.000000e+00 : f32
      %18 = vector.broadcast %cst_11 : f32 to vector<16x2xf32>
      %c0_12 = arith.constant 0 : index
      %c0_13 = arith.constant 0 : index
      %19 = vector.load %arg10[%c0_12, %c0_13] : memref<16x2xf32, #tpu.memory_space<vmem>>, vector<16x2xf32>
      tpu.vector_store %arg10[%c0_12, %c0_13], %18 {strides = array<i32>} : memref<16x2xf32, #tpu.memory_space<vmem>>, vector<16x2xf32>,
      %cst_14 = arith.constant 0.000000e+00 : f32
      %20 = vector.broadcast %cst_14 : f32 to vector<256x1xf32>
      %c0_15 = arith.constant 0 : index
      %c0_16 = arith.constant 0 : index
      %21 = vector.load %arg11[%c0_15, %c0_16] : memref<256x1xf32, #tpu.memory_space<vmem>>, vector<256x1xf32>
      tpu.vector_store %arg11[%c0_15, %c0_16], %20 {strides = array<i32>} : memref<256x1xf32, #tpu.memory_space<vmem>>, vector<256x1xf32>,
      %cst_17 = arith.constant 0.000000e+00 : f32
      %22 = vector.broadcast %cst_17 : f32 to vector<256x1xf32>
      %c0_18 = arith.constant 0 : index
      %c0_19 = arith.constant 0 : index
      %23 = vector.load %arg12[%c0_18, %c0_19] : memref<256x1xf32, #tpu.memory_space<vmem>>, vector<256x1xf32>
      tpu.vector_store %arg12[%c0_18, %c0_19], %22 {strides = array<i32>} : memref<256x1xf32, #tpu.memory_space<vmem>>, vector<256x1xf32>,
      %cst_20 = arith.constant 0.000000e+00 : f32
      %24 = vector.broadcast %cst_20 : f32 to vector<16x1xf32>
      %c0_21 = arith.constant 0 : index
      %c0_22 = arith.constant 0 : index
      %25 = vector.load %arg15[%c0_21, %c0_22] : memref<16x1xf32, #tpu.memory_space<vmem>>, vector<16x1xf32>
      tpu.vector_store %arg15[%c0_21, %c0_22], %24 {strides = array<i32>} : memref<16x1xf32, #tpu.memory_space<vmem>>, vector<16x1xf32>,
      %cst_23 = arith.constant 0.000000e+00 : f32
      %26 = vector.broadcast %cst_23 : f32 to vector<16x1xf32>
      %c0_24 = arith.constant 0 : index
      %c0_25 = arith.constant 0 : index
      %27 = vector.load %arg16[%c0_24, %c0_25] : memref<16x1xf32, #tpu.memory_space<vmem>>, vector<16x1xf32>
      tpu.vector_store %arg16[%c0_24, %c0_25], %26 {strides = array<i32>} : memref<16x1xf32, #tpu.memory_space<vmem>>, vector<16x1xf32>,
    } else {
    }
    %c0 = arith.constant 0 : index
    %c0_3 = arith.constant 0 : index
    %c0_4 = arith.constant 0 : index
    %7 = vector.load %arg3[%c0, %c0_3, %c0_4] : memref<1x256x256xf32, #tpu.memory_space<vmem>>, vector<1x256x256xf32>
    %8 = vector.shape_cast %7 : vector<1x256x256xf32> to vector<256x256xf32>
    %9 = arith.truncf %8 : vector<256x256xf32> to vector<256x256xbf16>
    %c0_5 = arith.constant 0 : index
    %c0_6 = arith.constant 0 : index
    %10 = vector.load %arg4[%c0_5, %c0_6] : memref<256x256xbf16, #tpu.memory_space<vmem>>, vector<256x256xbf16>
    %cst = arith.constant dense<0.000000e+00> : vector<256x256xf32>
    %11 = tpu.matmul %10, %9, %cst {dimension_numbers = #tpu.dot_dimension_numbers<[1], [0], [0], [1], [0, 0, 1, 1], [], []>} : vector<256x256xbf16>, vector<256x256xbf16>, vector<256x256xf32> -> vector<256x256xf32>
    %c0_i32_7 = arith.constant 0 : i32
    %12 = arith.cmpi eq, %arg0, %c0_i32_7 : i32
    %13 = arith.extui %12 : i1 to i32
    %c0_i32_8 = arith.constant 0 : i32
    %14 = arith.cmpi ne, %13, %c0_i32_8 : i32
    scf.if %14 {
      %c0_11 = arith.constant 0 : index
      %c0_12 = arith.constant 0 : index
      %18 = vector.load %arg11[%c0_11, %c0_12] : memref<256x1xf32, #tpu.memory_space<vmem>>, vector<256x1xf32>
      %cst_13 = arith.constant dense<0.000000e+00> : vector<256xf32>
      %19 = vector.multi_reduction <add>, %11, %cst_13 [1] : vector<256x256xf32> to vector<256xf32>
      %20 = vector.shape_cast %19 : vector<256xf32> to vector<256x1xf32>
      %21 = arith.addf %18, %20 : vector<256x1xf32>
      %c0_14 = arith.constant 0 : index
      %c0_15 = arith.constant 0 : index
      %22 = vector.load %arg11[%c0_14, %c0_15] : memref<256x1xf32, #tpu.memory_space<vmem>>, vector<256x1xf32>
      tpu.vector_store %arg11[%c0_14, %c0_15], %21 {strides = array<i32>} : memref<256x1xf32, #tpu.memory_space<vmem>>, vector<256x1xf32>,
      %c0_16 = arith.constant 0 : index
      %c0_17 = arith.constant 0 : index
      %23 = vector.load %arg12[%c0_16, %c0_17] : memref<256x1xf32, #tpu.memory_space<vmem>>, vector<256x1xf32>
      %24 = arith.mulf %11, %11 : vector<256x256xf32>
      %cst_18 = arith.constant dense<0.000000e+00> : vector<256xf32>
      %25 = vector.multi_reduction <add>, %24, %cst_18 [1] : vector<256x256xf32> to vector<256xf32>
      %26 = vector.shape_cast %25 : vector<256xf32> to vector<256x1xf32>
      %27 = arith.addf %23, %26 : vector<256x1xf32>
      %c0_19 = arith.constant 0 : index
      %c0_20 = arith.constant 0 : index
      %28 = vector.load %arg12[%c0_19, %c0_20] : memref<256x1xf32, #tpu.memory_space<vmem>>, vector<256x1xf32>
      tpu.vector_store %arg12[%c0_19, %c0_20], %27 {strides = array<i32>} : memref<256x1xf32, #tpu.memory_space<vmem>>, vector<256x1xf32>,
      %c1_i32 = arith.constant 1 : i32
      %29 = arith.cmpi eq, %arg1, %c1_i32 : i32
      %c0_i32_21 = arith.constant 0 : i32
      %30 = arith.cmpi eq, %arg2, %c0_i32_21 : i32
      %31 = arith.andi %29, %30 : i1
      %32 = arith.extui %31 : i1 to i32
      %c0_i32_22 = arith.constant 0 : i32
      %33 = arith.cmpi ne, %32, %c0_i32_22 : i32
      scf.if %33 {
        %c0_23 = arith.constant 0 : index
        %c0_24 = arith.constant 0 : index
        %34 = vector.load %arg11[%c0_23, %c0_24] : memref<256x1xf32, #tpu.memory_space<vmem>>, vector<256x1xf32>
        %cst_25 = arith.constant 0.001953125 : f32
        %35 = vector.broadcast %cst_25 : f32 to vector<256x1xf32>
        %36 = arith.mulf %34, %35 : vector<256x1xf32>
        %c0_26 = arith.constant 0 : index
        %c0_27 = arith.constant 0 : index
        %37 = vector.load %arg12[%c0_26, %c0_27] : memref<256x1xf32, #tpu.memory_space<vmem>>, vector<256x1xf32>
        %cst_28 = arith.constant 0.001953125 : f32
        %38 = vector.broadcast %cst_28 : f32 to vector<256x1xf32>
        %39 = arith.mulf %37, %38 : vector<256x1xf32>
        %40 = arith.mulf %36, %36 : vector<256x1xf32>
        %41 = arith.subf %39, %40 : vector<256x1xf32>
        %cst_29 = arith.constant 0.000000e+00 : f32
        %42 = vector.broadcast %cst_29 : f32 to vector<256x1xf32>
        %43 = arith.maximumf %41, %42 : vector<256x1xf32>
        %c0_30 = arith.constant 0 : index
        %c0_31 = arith.constant 0 : index
        %44 = vector.load %arg5[%c0_30, %c0_31] : memref<256x1xf32, #tpu.memory_space<vmem>>, vector<256x1xf32>
        %cst_32 = arith.constant 9.99999974E-6 : f32
        %45 = vector.broadcast %cst_32 : f32 to vector<256x1xf32>
        %46 = arith.addf %43, %45 : vector<256x1xf32>
        %47 = math.rsqrt %46 : vector<256x1xf32>
        %48 = arith.mulf %44, %47 : vector<256x1xf32>
        %c0_33 = arith.constant 0 : index
        %c0_34 = arith.constant 0 : index
        %49 = vector.load %arg13[%c0_33, %c0_34] : memref<256x1xf32, #tpu.memory_space<vmem>>, vector<256x1xf32>
        tpu.vector_store %arg13[%c0_33, %c0_34], %48 {strides = array<i32>} : memref<256x1xf32, #tpu.memory_space<vmem>>, vector<256x1xf32>,
        %c0_35 = arith.constant 0 : index
        %c0_36 = arith.constant 0 : index
        %50 = vector.load %arg6[%c0_35, %c0_36] : memref<256x1xf32, #tpu.memory_space<vmem>>, vector<256x1xf32>
        %51 = arith.mulf %36, %48 : vector<256x1xf32>
        %52 = arith.subf %50, %51 : vector<256x1xf32>
        %c0_37 = arith.constant 0 : index
        %c0_38 = arith.constant 0 : index
        %53 = vector.load %arg14[%c0_37, %c0_38] : memref<256x1xf32, #tpu.memory_space<vmem>>, vector<256x1xf32>
        tpu.vector_store %arg14[%c0_37, %c0_38], %52 {strides = array<i32>} : memref<256x1xf32, #tpu.memory_space<vmem>>, vector<256x1xf32>,
      } else {
      }
    } else {
    }
    %c0_i32_9 = arith.constant 0 : i32
    %15 = arith.cmpi sgt, %arg0, %c0_i32_9 : i32
    %16 = arith.extui %15 : i1 to i32
    %c0_i32_10 = arith.constant 0 : i32
    %17 = arith.cmpi ne, %16, %c0_i32_10 : i32
    scf.if %17 {
      %c0_11 = arith.constant 0 : index
      %c0_12 = arith.constant 0 : index
      %18 = vector.load %arg13[%c0_11, %c0_12] : memref<256x1xf32, #tpu.memory_space<vmem>>, vector<256x1xf32>
      %19 = vector.broadcast %18 : vector<256x1xf32> to vector<256x256xf32>
      %20 = arith.mulf %11, %19 : vector<256x256xf32>
      %c0_13 = arith.constant 0 : index
      %c0_14 = arith.constant 0 : index
      %21 = vector.load %arg14[%c0_13, %c0_14] : memref<256x1xf32, #tpu.memory_space<vmem>>, vector<256x1xf32>
      %22 = vector.broadcast %21 : vector<256x1xf32> to vector<256x256xf32>
      %23 = arith.addf %20, %22 : vector<256x256xf32>
      %cst_15 = arith.constant 0.000000e+00 : f32
      %24 = vector.broadcast %cst_15 : f32 to vector<256x256xf32>
      %25 = arith.maximumf %23, %24 : vector<256x256xf32>
      %c0_16 = arith.constant 0 : index
      %c0_17 = arith.constant 0 : index
      %26 = vector.load %arg7[%c0_16, %c0_17] : memref<16x256xbf16, #tpu.memory_space<vmem>>, vector<16x256xbf16>
      %27 = arith.truncf %25 : vector<256x256xf32> to vector<256x256xbf16>
      %cst_18 = arith.constant dense<0.000000e+00> : vector<16x256xf32>
      %28 = tpu.matmul %26, %27, %cst_18 {dimension_numbers = #tpu.dot_dimension_numbers<[1], [0], [0], [1], [0, 0, 1, 1], [], []>} : vector<16x256xbf16>, vector<256x256xbf16>, vector<16x256xf32> -> vector<16x256xf32>
      %c1_i32 = arith.constant 1 : i32
      %29 = arith.cmpi eq, %arg0, %c1_i32 : i32
      %30 = arith.extui %29 : i1 to i32
      %c0_i32_19 = arith.constant 0 : i32
      %31 = arith.cmpi ne, %30, %c0_i32_19 : i32
      scf.if %31 {
        %c0_21 = arith.constant 0 : index
        %c0_22 = arith.constant 0 : index
        %35 = vector.load %arg15[%c0_21, %c0_22] : memref<16x1xf32, #tpu.memory_space<vmem>>, vector<16x1xf32>
        %cst_23 = arith.constant dense<0.000000e+00> : vector<16xf32>
        %36 = vector.multi_reduction <add>, %28, %cst_23 [1] : vector<16x256xf32> to vector<16xf32>
        %37 = vector.shape_cast %36 : vector<16xf32> to vector<16x1xf32>
        %38 = arith.addf %35, %37 : vector<16x1xf32>
        %c0_24 = arith.constant 0 : index
        %c0_25 = arith.constant 0 : index
        %39 = vector.load %arg15[%c0_24, %c0_25] : memref<16x1xf32, #tpu.memory_space<vmem>>, vector<16x1xf32>
        tpu.vector_store %arg15[%c0_24, %c0_25], %38 {strides = array<i32>} : memref<16x1xf32, #tpu.memory_space<vmem>>, vector<16x1xf32>,
        %c0_26 = arith.constant 0 : index
        %c0_27 = arith.constant 0 : index
        %40 = vector.load %arg16[%c0_26, %c0_27] : memref<16x1xf32, #tpu.memory_space<vmem>>, vector<16x1xf32>
        %41 = arith.mulf %28, %28 : vector<16x256xf32>
        %cst_28 = arith.constant dense<0.000000e+00> : vector<16xf32>
        %42 = vector.multi_reduction <add>, %41, %cst_28 [1] : vector<16x256xf32> to vector<16xf32>
        %43 = vector.shape_cast %42 : vector<16xf32> to vector<16x1xf32>
        %44 = arith.addf %40, %43 : vector<16x1xf32>
        %c0_29 = arith.constant 0 : index
        %c0_30 = arith.constant 0 : index
        %45 = vector.load %arg16[%c0_29, %c0_30] : memref<16x1xf32, #tpu.memory_space<vmem>>, vector<16x1xf32>
        tpu.vector_store %arg16[%c0_29, %c0_30], %44 {strides = array<i32>} : memref<16x1xf32, #tpu.memory_space<vmem>>, vector<16x1xf32>,
        %c1_i32_31 = arith.constant 1 : i32
        %46 = arith.cmpi eq, %arg1, %c1_i32_31 : i32
        %c0_i32_32 = arith.constant 0 : i32
        %47 = arith.cmpi eq, %arg2, %c0_i32_32 : i32
        %48 = arith.andi %46, %47 : i1
        %49 = arith.extui %48 : i1 to i32
        %c0_i32_33 = arith.constant 0 : i32
        %50 = arith.cmpi ne, %49, %c0_i32_33 : i32
        scf.if %50 {
          %c0_34 = arith.constant 0 : index
          %c0_35 = arith.constant 0 : index
          %51 = vector.load %arg15[%c0_34, %c0_35] : memref<16x1xf32, #tpu.memory_space<vmem>>, vector<16x1xf32>
          %cst_36 = arith.constant 0.001953125 : f32
          %52 = vector.broadcast %cst_36 : f32 to vector<16x1xf32>
          %53 = arith.mulf %51, %52 : vector<16x1xf32>
          %c0_37 = arith.constant 0 : index
          %c0_38 = arith.constant 0 : index
          %54 = vector.load %arg16[%c0_37, %c0_38] : memref<16x1xf32, #tpu.memory_space<vmem>>, vector<16x1xf32>
          %cst_39 = arith.constant 0.001953125 : f32
          %55 = vector.broadcast %cst_39 : f32 to vector<16x1xf32>
          %56 = arith.mulf %54, %55 : vector<16x1xf32>
          %57 = arith.mulf %53, %53 : vector<16x1xf32>
          %58 = arith.subf %56, %57 : vector<16x1xf32>
          %cst_40 = arith.constant 0.000000e+00 : f32
          %59 = vector.broadcast %cst_40 : f32 to vector<16x1xf32>
          %60 = arith.maximumf %58, %59 : vector<16x1xf32>
          %c0_41 = arith.constant 0 : index
          %c0_42 = arith.constant 0 : index
          %61 = vector.load %arg8[%c0_41, %c0_42] : memref<16x1xf32, #tpu.memory_space<vmem>>, vector<16x1xf32>
          %cst_43 = arith.constant 9.99999974E-6 : f32
          %62 = vector.broadcast %cst_43 : f32 to vector<16x1xf32>
          %63 = arith.addf %60, %62 : vector<16x1xf32>
          %64 = math.rsqrt %63 : vector<16x1xf32>
          %65 = arith.mulf %61, %64 : vector<16x1xf32>
          %c0_44 = arith.constant 0 : index
          %c0_45 = arith.constant 0 : index
          %66 = vector.load %arg17[%c0_44, %c0_45] : memref<16x1xf32, #tpu.memory_space<vmem>>, vector<16x1xf32>
          tpu.vector_store %arg17[%c0_44, %c0_45], %65 {strides = array<i32>} : memref<16x1xf32, #tpu.memory_space<vmem>>, vector<16x1xf32>,
          %c0_46 = arith.constant 0 : index
          %c0_47 = arith.constant 0 : index
          %67 = vector.load %arg9[%c0_46, %c0_47] : memref<16x1xf32, #tpu.memory_space<vmem>>, vector<16x1xf32>
          %68 = arith.mulf %53, %65 : vector<16x1xf32>
          %69 = arith.subf %67, %68 : vector<16x1xf32>
          %c0_48 = arith.constant 0 : index
          %c0_49 = arith.constant 0 : index
          %70 = vector.load %arg18[%c0_48, %c0_49] : memref<16x1xf32, #tpu.memory_space<vmem>>, vector<16x1xf32>
          tpu.vector_store %arg18[%c0_48, %c0_49], %69 {strides = array<i32>} : memref<16x1xf32, #tpu.memory_space<vmem>>, vector<16x1xf32>,
        } else {
        }
      } else {
      }
      %c2_i32 = arith.constant 2 : i32
      %32 = arith.cmpi eq, %arg0, %c2_i32 : i32
      %33 = arith.extui %32 : i1 to i32
      %c0_i32_20 = arith.constant 0 : i32
      %34 = arith.cmpi ne, %33, %c0_i32_20 : i32
      scf.if %34 {
        %c0_21 = arith.constant 0 : index
        %c0_22 = arith.constant 0 : index
        %35 = vector.load %arg17[%c0_21, %c0_22] : memref<16x1xf32, #tpu.memory_space<vmem>>, vector<16x1xf32>
        %36 = vector.broadcast %35 : vector<16x1xf32> to vector<16x256xf32>
        %37 = arith.mulf %28, %36 : vector<16x256xf32>
        %c0_23 = arith.constant 0 : index
        %c0_24 = arith.constant 0 : index
        %38 = vector.load %arg18[%c0_23, %c0_24] : memref<16x1xf32, #tpu.memory_space<vmem>>, vector<16x1xf32>
        %39 = vector.broadcast %38 : vector<16x1xf32> to vector<16x256xf32>
        %40 = arith.addf %37, %39 : vector<16x256xf32>
        %cst_25 = arith.constant 0.000000e+00 : f32
        %41 = vector.broadcast %cst_25 : f32 to vector<16x256xf32>
        %42 = arith.subf %41, %40 : vector<16x256xf32>
        %43 = math.exp %42 : vector<16x256xf32>
        %cst_26 = arith.constant 1.000000e+00 : f32
        %44 = vector.broadcast %cst_26 : f32 to vector<16x256xf32>
        %45 = arith.addf %44, %43 : vector<16x256xf32>
        %cst_27 = arith.constant 1.000000e+00 : f32
        %46 = vector.broadcast %cst_27 : f32 to vector<16x256xf32>
        %47 = arith.divf %46, %45 : vector<16x256xf32>
        %c0_i32_28 = arith.constant 0 : i32
        %48 = arith.cmpi eq, %arg2, %c0_i32_28 : i32
        %49 = arith.extui %48 : i1 to i32
        %c0_i32_29 = arith.constant 0 : i32
        %50 = arith.cmpi ne, %49, %c0_i32_29 : i32
        scf.if %50 {
          %cst_37 = arith.constant 0.000000e+00 : f32
          %59 = vector.broadcast %cst_37 : f32 to vector<16x1xf32>
          %c0_38 = arith.constant 0 : index
          %c0_39 = arith.constant 0 : index
          %60 = vector.load %arg19[%c0_38, %c0_39] : memref<16x1xf32, #tpu.memory_space<vmem>>, vector<16x1xf32>
          tpu.vector_store %arg19[%c0_38, %c0_39], %59 {strides = array<i32>} : memref<16x1xf32, #tpu.memory_space<vmem>>, vector<16x1xf32>,
        } else {
        }
        %c0_30 = arith.constant 0 : index
        %c0_31 = arith.constant 0 : index
        %51 = vector.load %arg19[%c0_30, %c0_31] : memref<16x1xf32, #tpu.memory_space<vmem>>, vector<16x1xf32>
        %cst_32 = arith.constant dense<0.000000e+00> : vector<16xf32>
        %52 = vector.multi_reduction <add>, %47, %cst_32 [1] : vector<16x256xf32> to vector<16xf32>
        %53 = vector.shape_cast %52 : vector<16xf32> to vector<16x1xf32>
        %54 = arith.addf %51, %53 : vector<16x1xf32>
        %c0_33 = arith.constant 0 : index
        %c0_34 = arith.constant 0 : index
        %55 = vector.load %arg19[%c0_33, %c0_34] : memref<16x1xf32, #tpu.memory_space<vmem>>, vector<16x1xf32>
        tpu.vector_store %arg19[%c0_33, %c0_34], %54 {strides = array<i32>} : memref<16x1xf32, #tpu.memory_space<vmem>>, vector<16x1xf32>,
        %c0_i32_35 = arith.constant 0 : i32
        %56 = arith.cmpi eq, %arg2, %c0_i32_35 : i32
        %57 = arith.extui %56 : i1 to i32
        %c0_i32_36 = arith.constant 0 : i32
        %58 = arith.cmpi ne, %57, %c0_i32_36 : i32
        scf.if %58 {
          %59 = tpu.iota {dimensions = array<i32: 1>} : vector<16x2xi32>
          %c0_37 = arith.constant 0 : index
          %c0_38 = arith.constant 0 : index
          %60 = vector.load %arg10[%c0_37, %c0_38] : memref<16x2xf32, #tpu.memory_space<vmem>>, vector<16x2xf32>
          %61 = vector.broadcast %arg1 : i32 to vector<16x2xi32>
          %62 = arith.cmpi eq, %59, %61 : vector<16x2xi32>
          %c0_39 = arith.constant 0 : index
          %c0_40 = arith.constant 0 : index
          %63 = vector.load %arg19[%c0_39, %c0_40] : memref<16x1xf32, #tpu.memory_space<vmem>>, vector<16x1xf32>
          %cst_41 = arith.constant 3.906250e-03 : f32
          %64 = vector.broadcast %cst_41 : f32 to vector<16x1xf32>
          %65 = arith.mulf %63, %64 : vector<16x1xf32>
          %cst_42 = arith.constant 0.000000e+00 : f32
          %66 = vector.shape_cast %65 : vector<16x1xf32> to vector<16x1xf32>
          %67 = vector.broadcast %66 : vector<16x1xf32> to vector<16x2xf32>
          %68 = vector.broadcast %cst_42 : f32 to vector<16x2xf32>
          %69 = arith.select %62, %67, %68 : vector<16x2xi1>, vector<16x2xf32>
          %70 = arith.addf %60, %69 : vector<16x2xf32>
          %c0_43 = arith.constant 0 : index
          %c0_44 = arith.constant 0 : index
          %71 = vector.load %arg10[%c0_43, %c0_44] : memref<16x2xf32, #tpu.memory_space<vmem>>, vector<16x2xf32>
          tpu.vector_store %arg10[%c0_43, %c0_44], %70 {strides = array<i32>} : memref<16x2xf32, #tpu.memory_space<vmem>>, vector<16x2xf32>,
        } else {
        }
      } else {
      }
    } else {
    }
    return
  }
  func.func @transform_0(%arg0: i32, %arg1: i32, %arg2: i32) -> (i32, i32, i32) {
    %c0_i32 = arith.constant 0 : i32
    %c0_i32_0 = arith.constant 0 : i32
    return %arg1, %c0_i32, %arg2 : i32, i32, i32
  }
  func.func @transform_1(%arg0: i32, %arg1: i32, %arg2: i32) -> (i32, i32) {
    %c0_i32 = arith.constant 0 : i32
    %c0_i32_0 = arith.constant 0 : i32
    %c0_i32_1 = arith.constant 0 : i32
    return %c0_i32, %c0_i32_0 : i32, i32
  }
  func.func @transform_2(%arg0: i32, %arg1: i32, %arg2: i32) -> (i32, i32) {
    %c0_i32 = arith.constant 0 : i32
    %c0_i32_0 = arith.constant 0 : i32
    %c0_i32_1 = arith.constant 0 : i32
    return %c0_i32, %c0_i32_0 : i32, i32
  }
  func.func @transform_3(%arg0: i32, %arg1: i32, %arg2: i32) -> (i32, i32) {
    %c0_i32 = arith.constant 0 : i32
    %c0_i32_0 = arith.constant 0 : i32
    %c0_i32_1 = arith.constant 0 : i32
    return %c0_i32, %c0_i32_0 : i32, i32
  }
  func.func @transform_4(%arg0: i32, %arg1: i32, %arg2: i32) -> (i32, i32) {
    %c0_i32 = arith.constant 0 : i32
    %c0_i32_0 = arith.constant 0 : i32
    %c0_i32_1 = arith.constant 0 : i32
    return %c0_i32, %c0_i32_0 : i32, i32
  }
  func.func @transform_5(%arg0: i32, %arg1: i32, %arg2: i32) -> (i32, i32) {
    %c0_i32 = arith.constant 0 : i32
    %c0_i32_0 = arith.constant 0 : i32
    %c0_i32_1 = arith.constant 0 : i32
    return %c0_i32, %c0_i32_0 : i32, i32
  }
  func.func @transform_6(%arg0: i32, %arg1: i32, %arg2: i32) -> (i32, i32) {
    %c0_i32 = arith.constant 0 : i32
    %c0_i32_0 = arith.constant 0 : i32
    %c0_i32_1 = arith.constant 0 : i32
    return %c0_i32, %c0_i32_0 : i32, i32
  }
  func.func @transform_7(%arg0: i32, %arg1: i32, %arg2: i32) -> (i32, i32) {
    %c0_i32 = arith.constant 0 : i32
    %c0_i32_0 = arith.constant 0 : i32
    %c0_i32_1 = arith.constant 0 : i32
    return %c0_i32, %c0_i32_0 : i32, i32
  }
}

</mosaic_0001>

<llo_original>
// kernel: tpu_custom_call.1
$region0: #{tpu_custom_call.1}
  #allocation0 [shape = 'u32[]', space=smem, size = 0x4, offset = 0x4, fixed_abs, tag = 'smem constant byte address 0x4 - core index']
  #allocation1 [shape = 'u32[144,128]{1,0:T(1,128)}', space=vmem, size = 0x12000, scoped, tag = 'internal scratch']
  #allocation2 [shape = 'f32[256,1]{1,0:T(8,128)}', space=vmem, size = 0x20000, scoped, tag = 'scratch operand']
  #allocation3 [shape = 'f32[256,1]{1,0:T(8,128)}', space=vmem, size = 0x20000, scoped, tag = 'scratch operand']
  #allocation4 [shape = 'f32[256,1]{1,0:T(8,128)}', space=vmem, size = 0x20000, scoped, tag = 'scratch operand']
  #allocation5 [shape = 'f32[256,1]{1,0:T(8,128)}', space=vmem, size = 0x20000, scoped, tag = 'scratch operand']
  #allocation6 [shape = 'f32[16,1]{1,0:T(8,128)}', space=vmem, size = 0x2000, scoped, tag = 'scratch operand']
  #allocation7 [shape = 'f32[16,1]{1,0:T(8,128)}', space=vmem, size = 0x2000, scoped, tag = 'scratch operand']
  #allocation8 [shape = 'f32[16,1]{1,0:T(8,128)}', space=vmem, size = 0x2000, scoped, tag = 'scratch operand']
  #allocation9 [shape = 'f32[16,1]{1,0:T(8,128)}', space=vmem, size = 0x2000, scoped, tag = 'scratch operand']
  #allocation10 [shape = 'f32[16,1]{1,0:T(8,128)}', space=vmem, size = 0x2000, scoped, tag = 'scratch operand']
  %s0 = inlined_call_operand.hbm [shape: f32[2,256,256], index: 0, kind: input, shape index: {}]
  %s1 = inlined_call_operand.vmem [shape: bf16[256,256], index: 1, kind: input, shape index: {}]
  %s2 = inlined_call_operand.vmem [shape: f32[256,1], index: 2, kind: input, shape index: {}]
  %s3 = inlined_call_operand.vmem [shape: f32[256,1], index: 3, kind: input, shape index: {}]
  %s4 = inlined_call_operand.vmem [shape: bf16[16,256], index: 4, kind: input, shape index: {}]
  %s5 = inlined_call_operand.vmem [shape: f32[16,1], index: 5, kind: input, shape index: {}]
  %s6 = inlined_call_operand.vmem [shape: f32[16,1], index: 6, kind: input, shape index: {}]
  %s7 = inlined_call_operand.vmem [shape: f32[16,2], index: 7, kind: output, shape index: {}]
  %s8 = sld [smem:[#allocation0]]
  $region101: #{tpu_custom_call.1} parent=0
    _
  %s10 = ssub.s32 1, %s8
  %s11 = scalar_select 0, %s10, %s8
  $region1: #{tpu_custom_call.1} parent=0
    #allocation11 [shape = 'u8[524288]{0}', space=vmem, size = 0x80000, scoped, tag = 'input window, operand 0']
    #allocation12 [shape = 's32[2]{0}', space=sflag, size = 0x8, scoped, tag = 'scoped memory for tpu_custom_call.1']
    %12 = vsyncpa [#allocation12], 0
    %s13 = scalar_lea.sflag [#allocation12], 1
    %14 = vsyncpa %s13, 0
    loop: start=0, step=1, limit=8
    $region2: #{tpu_custom_call.1} parent=1 // loop_pre_header
      _
    $region3: #{tpu_custom_call.1} parent=1 // loop_header
      %s16 = sphi 0, %s20
      %p17 = scmp.ge.s32.totalorder %s16, 8
      %s23 = sphi 0, %s42
      %s24 = sphi 0, %s38
      %s25 = sphi 0, %s34
      %s26 = sphi 0, %s23
      %s27 = sphi 0, %s24
      %s28 = sphi 0, %s25
      %s29 = sphi 0, %s26
      %s30 = sphi 0, %s27
      %s31 = sphi 0, %s28
      %s47 = sphi 0, %s49
      %s50 = sphi 0, %s47
      %s51 = sphi 0, %s50
      %s67 = sphi 0, %s51
      %s71 = sphi 0, %s71
      %s73 = sphi 0, %s71
      %s74 = sphi 0, %s73
      %s88 = sphi 0, %s74
      %s92 = sphi 0, %s92
      %s94 = sphi 0, %s92
      %s95 = sphi 0, %s94
      %s109 = sphi 0, %s95
      %s113 = sphi 0, %s113
      %s115 = sphi 0, %s113
      %s116 = sphi 0, %s115
      %s130 = sphi 0, %s116
      %s134 = sphi 0, %s134
      %s136 = sphi 0, %s134
      %s137 = sphi 0, %s136
      %s151 = sphi 0, %s137
      %s155 = sphi 0, %s155
      %s157 = sphi 0, %s155
      %s158 = sphi 0, %s157
      %s172 = sphi 0, %s158
      %s176 = sphi 0, %s176
      %s178 = sphi 0, %s176
      %s179 = sphi 0, %s178
      %s193 = sphi 0, %s179
      %s197 = sphi 0, %s197
      %s199 = sphi 0, %s197
      %s200 = sphi 0, %s199
      %s214 = sphi 0, %s200
    $region4: #{tpu_custom_call.1} parent=1 // loop_header_branch
      %19 = sbr.rel (%p17) target = $region8
    $region5: #{tpu_custom_call.1} parent=1 // loop_body
      %s21 = ssub.s32 %s16, 1
      %s22 = ssub.s32 %s16, 2
      %s32 = sadd.s32 1, %s25
      %p33 = scmp.ge.s32.totalorder %s32, 1
      %s34 = scalar_select %p33, 0, %s32
      %s35 = sadd.s32 1, %s24
      %s36 = scalar_select %p33, %s35, %s24
      %p37 = scmp.ge.s32.totalorder %s36, 2
      %s38 = scalar_select %p37, 0, %s36
      %s39 = sadd.s32 1, %s23
      %s40 = scalar_select %p37, %s39, %s23
      %p41 = scmp.ge.s32.totalorder %s40, 3
      %s42 = scalar_select %p41, 0, %s40
      %s43 = ssub.s32 %s24, %s38
      %s44 = ssub.s32 %s25, %s34
      %s45 = sor.u32 %s43, %s44
      %p46 = scmp.eq.s32.totalorder %s45, 0
      %s48 = sadd.s32 %s47, 1
      %s49 = scalar_select %p46, %s47, %s48
      %p52 = pneg %p46
      %p53 = scmp.eq.s32.totalorder %s16, 5
      %p54 = por %p52, %p53
      %p55 = scmp.ne.s32.totalorder %s47, %s50
      %p56 = scmp.eq.s32.totalorder %s16, 0
      %p57 = por %p55, %p56
      %p58 = scmp.ne.s32.totalorder %s47, %s50
      %p59 = scmp.eq.s32.totalorder %s21, 5
      %p60 = por %p58, %p59
      %p61 = scmp.ne.s32.totalorder %s50, %s51
      %p62 = scmp.eq.s32.totalorder %s21, 0
      %p63 = por %p61, %p62
      %p64 = scmp.ne.s32.totalorder %s50, %s51
      %p65 = scmp.eq.s32.totalorder %s22, 5
      %p66 = por %p64, %p65
      %p68 = scmp.ne.s32.totalorder %s51, %s67
      %p69 = scmp.eq.s32.totalorder %s22, 0
      %p70 = por %p68, %p69
      %s72 = sadd.s32 %s71, 1
      %p75 = scmp.eq.s32.totalorder %s16, 5
      %p76 = scmp.ne.s32.totalorder %s71, %s73
      %p77 = scmp.eq.s32.totalorder %s16, 0
      %p78 = por %p76, %p77
      %p79 = scmp.ne.s32.totalorder %s71, %s73
      %p80 = scmp.eq.s32.totalorder %s21, 5
      %p81 = por %p79, %p80
      %p82 = scmp.ne.s32.totalorder %s73, %s74
      %p83 = scmp.eq.s32.totalorder %s21, 0
      %p84 = por %p82, %p83
      %p85 = scmp.ne.s32.totalorder %s73, %s74
      %p86 = scmp.eq.s32.totalorder %s22, 5
      %p87 = por %p85, %p86
      %p89 = scmp.ne.s32.totalorder %s74, %s88
      %p90 = scmp.eq.s32.totalorder %s22, 0
      %p91 = por %p89, %p90
      %s93 = sadd.s32 %s92, 1
      %p96 = scmp.eq.s32.totalorder %s16, 5
      %p97 = scmp.ne.s32.totalorder %s92, %s94
      %p98 = scmp.eq.s32.totalorder %s16, 0
      %p99 = por %p97, %p98
      %p100 = scmp.ne.s32.totalorder %s92, %s94
      %p101 = scmp.eq.s32.totalorder %s21, 5
      %p102 = por %p100, %p101
      %p103 = scmp.ne.s32.totalorder %s94, %s95
      %p104 = scmp.eq.s32.totalorder %s21, 0
      %p105 = por %p103, %p104
      %p106 = scmp.ne.s32.totalorder %s94, %s95
      %p107 = scmp.eq.s32.totalorder %s22, 5
      %p108 = por %p106, %p107
      %p110 = scmp.ne.s32.totalorder %s95, %s109
      %p111 = scmp.eq.s32.totalorder %s22, 0
      %p112 = por %p110, %p111
      %s114 = sadd.s32 %s113, 1
      %p117 = scmp.eq.s32.totalorder %s16, 5
      %p118 = scmp.ne.s32.totalorder %s113, %s115
      %p119 = scmp.eq.s32.totalorder %s16, 0
      %p120 = por %p118, %p119
      %p121 = scmp.ne.s32.totalorder %s113, %s115
      %p122 = scmp.eq.s32.totalorder %s21, 5
      %p123 = por %p121, %p122
      %p124 = scmp.ne.s32.totalorder %s115, %s116
      %p125 = scmp.eq.s32.totalorder %s21, 0
      %p126 = por %p124, %p125
      %p127 = scmp.ne.s32.totalorder %s115, %s116
      %p128 = scmp.eq.s32.totalorder %s22, 5
      %p129 = por %p127, %p128
      %p131 = scmp.ne.s32.totalorder %s116, %s130
      %p132 = scmp.eq.s32.totalorder %s22, 0
      %p133 = por %p131, %p132
      %s135 = sadd.s32 %s134, 1
      %p138 = scmp.eq.s32.totalorder %s16, 5
      %p139 = scmp.ne.s32.totalorder %s134, %s136
      %p140 = scmp.eq.s32.totalorder %s16, 0
      %p141 = por %p139, %p140
      %p142 = scmp.ne.s32.totalorder %s134, %s136
      %p143 = scmp.eq.s32.totalorder %s21, 5
      %p144 = por %p142, %p143
      %p145 = scmp.ne.s32.totalorder %s136, %s137
      %p146 = scmp.eq.s32.totalorder %s21, 0
      %p147 = por %p145, %p146
      %p148 = scmp.ne.s32.totalorder %s136, %s137
      %p149 = scmp.eq.s32.totalorder %s22, 5
      %p150 = por %p148, %p149
      %p152 = scmp.ne.s32.totalorder %s137, %s151
      %p153 = scmp.eq.s32.totalorder %s22, 0
      %p154 = por %p152, %p153
      %s156 = sadd.s32 %s155, 1
      %p159 = scmp.eq.s32.totalorder %s16, 5
      %p160 = scmp.ne.s32.totalorder %s155, %s157
      %p161 = scmp.eq.s32.totalorder %s16, 0
      %p162 = por %p160, %p161
      %p163 = scmp.ne.s32.totalorder %s155, %s157
      %p164 = scmp.eq.s32.totalorder %s21, 5
      %p165 = por %p163, %p164
      %p166 = scmp.ne.s32.totalorder %s157, %s158
      %p167 = scmp.eq.s32.totalorder %s21, 0
      %p168 = por %p166, %p167
      %p169 = scmp.ne.s32.totalorder %s157, %s158
      %p170 = scmp.eq.s32.totalorder %s22, 5
      %p171 = por %p169, %p170
      %p173 = scmp.ne.s32.totalorder %s158, %s172
      %p174 = scmp.eq.s32.totalorder %s22, 0
      %p175 = por %p173, %p174
      %s177 = sadd.s32 %s176, 1
      %p180 = scmp.eq.s32.totalorder %s16, 5
      %p181 = scmp.ne.s32.totalorder %s176, %s178
      %p182 = scmp.eq.s32.totalorder %s16, 0
      %p183 = por %p181, %p182
      %p184 = scmp.ne.s32.totalorder %s176, %s178
      %p185 = scmp.eq.s32.totalorder %s21, 5
      %p186 = por %p184, %p185
      %p187 = scmp.ne.s32.totalorder %s178, %s179
      %p188 = scmp.eq.s32.totalorder %s21, 0
      %p189 = por %p187, %p188
      %p190 = scmp.ne.s32.totalorder %s178, %s179
      %p191 = scmp.eq.s32.totalorder %s22, 5
      %p192 = por %p190, %p191
      %p194 = scmp.ne.s32.totalorder %s179, %s193
      %p195 = scmp.eq.s32.totalorder %s22, 0
      %p196 = por %p194, %p195
      %s198 = sadd.s32 %s197, 1
      %p201 = scmp.eq.s32.totalorder %s16, 5
      %p202 = scmp.ne.s32.totalorder %s197, %s199
      %p203 = scmp.eq.s32.totalorder %s16, 0
      %p204 = por %p202, %p203
      %p205 = scmp.ne.s32.totalorder %s197, %s199
      %p206 = scmp.eq.s32.totalorder %s21, 5
      %p207 = por %p205, %p206
      %p208 = scmp.ne.s32.totalorder %s199, %s200
      %p209 = scmp.eq.s32.totalorder %s21, 0
      %p210 = por %p208, %p209
      %p211 = scmp.ne.s32.totalorder %s199, %s200
      %p212 = scmp.eq.s32.totalorder %s22, 5
      %p213 = por %p211, %p212
      %p215 = scmp.ne.s32.totalorder %s200, %s214
      %p216 = scmp.eq.s32.totalorder %s22, 0
      %p217 = por %p215, %p216
      %p218 = scmp.le.s32.totalorder 1, %s16
      %p219 = scmp.lt.s32.totalorder %s16, 7
      %p220 = pnand %p218, %p219
      %p221 = pneg %p220
      // Predicated region
      $region9: #{tpu_custom_call.1} parent=5 // pred_check
        _
      $region10: #{tpu_custom_call.1} parent=5 // pred_check_branch
        %223 = sbr.rel (%p220) target = $region12
      $region11: #{tpu_custom_call.1} parent=5 // pred_region
        %s224 = ssub.s32 %s16, 1
        // Predicated region
        $region13: #{tpu_custom_call.1} parent=11 // pred_check
          %p225 = pneg %p84
        $region14: #{tpu_custom_call.1} parent=11 // pred_check_branch
          %227 = sbr.rel (%p225) target = $region16
        $region15: #{tpu_custom_call.1} parent=11 // pred_region
          _
        $region16: #{tpu_custom_call.1} parent=11 // pred_fallthru
          _
        // Predicated region
        $region17: #{tpu_custom_call.1} parent=11 // pred_check
          %p228 = pneg %p105
        $region18: #{tpu_custom_call.1} parent=11 // pred_check_branch
          %230 = sbr.rel (%p228) target = $region20
        $region19: #{tpu_custom_call.1} parent=11 // pred_region
          _
        $region20: #{tpu_custom_call.1} parent=11 // pred_fallthru
          _
        // Predicated region
        $region21: #{tpu_custom_call.1} parent=11 // pred_check
          %p231 = pneg %p126
        $region22: #{tpu_custom_call.1} parent=11 // pred_check_branch
          %233 = sbr.rel (%p231) target = $region24
        $region23: #{tpu_custom_call.1} parent=11 // pred_region
          _
        $region24: #{tpu_custom_call.1} parent=11 // pred_fallthru
          _
        // Predicated region
        $region25: #{tpu_custom_call.1} parent=11 // pred_check
          %p234 = pneg %p147
        $region26: #{tpu_custom_call.1} parent=11 // pred_check_branch
          %236 = sbr.rel (%p234) target = $region28
        $region27: #{tpu_custom_call.1} parent=11 // pred_region
          _
        $region28: #{tpu_custom_call.1} parent=11 // pred_fallthru
          _
        // Predicated region
        $region29: #{tpu_custom_call.1} parent=11 // pred_check
          %p237 = pneg %p168
        $region30: #{tpu_custom_call.1} parent=11 // pred_check_branch
          %239 = sbr.rel (%p237) target = $region32
        $region31: #{tpu_custom_call.1} parent=11 // pred_region
          _
        $region32: #{tpu_custom_call.1} parent=11 // pred_fallthru
          _
        // Predicated region
        $region33: #{tpu_custom_call.1} parent=11 // pred_check
          %p240 = pneg %p189
        $region34: #{tpu_custom_call.1} parent=11 // pred_check_branch
          %242 = sbr.rel (%p240) target = $region36
        $region35: #{tpu_custom_call.1} parent=11 // pred_region
          _
        $region36: #{tpu_custom_call.1} parent=11 // pred_fallthru
          _
      $region12: #{tpu_custom_call.1} parent=5 // pred_fallthru
        _
      %p243 = scmp.lt.s32.totalorder %s16, 6
      // Predicated region
      $region37: #{tpu_custom_call.1} parent=5 // pred_check
        %p244 = pneg %p243
      $region38: #{tpu_custom_call.1} parent=5 // pred_check_branch
        %246 = sbr.rel (%p244) target = $region40
      $region39: #{tpu_custom_call.1} parent=5 // pred_region
        // Predicated region
        $region41: #{tpu_custom_call.1} parent=39 // pred_check
          %p247 = pneg %p57
        $region42: #{tpu_custom_call.1} parent=39 // pred_check_branch
          %249 = sbr.rel (%p247) target = $region44
        $region43: #{tpu_custom_call.1} parent=39 // pred_region
          %s250 = sand.u32 %s47, 1
          %s251 = scalar_lea.sflag [#allocation12], %s250
          %s252 = sand.u32 %s47, 1
          %s253 = smul.addr %s252, 512
          %s254 = scalar_lea.vmem [#allocation11], %s253
          %s255 = smul.u32 2, %s25
          %s257 = ssub.s32 8192, 8192
          %258 = vsyncadd %s251, %s257
          %s259 = smul.addr %s24, 64
          %s260 = sadd.s32 %s255, %s259
          %s261 = smul.addr %s260, 128
          %s262 = scalar_lea.hbm %s0, %s261
          %s263 = sshll.u32 %s254, 4
          %s264 = int_to_ptr.vmem [resolvable:$true] %s263
          %269 = dma.hbm_to_vmem [thread:$0]  %s262, 8192, %s264, %s251, 256, 256, 16
        $region44: #{tpu_custom_call.1} parent=39 // pred_fallthru
          _
      $region40: #{tpu_custom_call.1} parent=5 // pred_fallthru
        _
      %p270 = scmp.le.s32.totalorder 1, %s16
      %p271 = scmp.lt.s32.totalorder %s16, 7
      %p272 = pnand %p270, %p271
      %p273 = pneg %p272
      // Predicated region
      $region45: #{tpu_custom_call.1} parent=5 // pred_check
        _
      $region46: #{tpu_custom_call.1} parent=5 // pred_check_branch
        %275 = sbr.rel (%p272) target = $region48
      $region47: #{tpu_custom_call.1} parent=5 // pred_region
        %s276 = ssub.s32 %s16, 1
        %s277 = sand.u32 %s50, 1
        %s278 = scalar_lea.sflag [#allocation12], %s277
        %s279 = sand.u32 %s50, 1
        %s280 = smul.addr %s279, 512
        %s281 = scalar_lea.vmem [#allocation11], %s280
        // Predicated region
        $region49: #{tpu_custom_call.1} parent=47 // pred_check
          %p282 = pneg %p63
        $region50: #{tpu_custom_call.1} parent=47 // pred_check_branch
          %284 = sbr.rel (%p282) target = $region52
        $region51: #{tpu_custom_call.1} parent=47 // pred_region
          %285 = dma.done %s278, 8192
        $region52: #{tpu_custom_call.1} parent=47 // pred_fallthru
          _
        %s286 = sand.u32 %s50, 1
        %s287 = scalar_lea.sflag [#allocation12], %s286
        %s288 = sand.u32 %s50, 1
        %s289 = smul.addr %s288, 512
        %s290 = scalar_lea.vmem [#allocation11], %s289
        %p291 = pneg %p63
        %p292 = pneg %p60
        %p293 = pneg %p84
        %p294 = pneg %p81
        %p295 = pneg %p105
        %p296 = pneg %p102
        %p297 = pneg %p126
        %p298 = pneg %p123
        %p299 = pneg %p147
        %p300 = pneg %p144
        %p301 = pneg %p168
        %p302 = pneg %p165
        %p303 = pneg %p189
        %p304 = pneg %p186
        %p305 = pneg %p210
        %p306 = pneg %p207
        %s307 = smul.u32 2, %s28
        %p308 = scmp.eq.s32.totalorder %s26, 0
        %p309 = scmp.eq.s32.totalorder %s27, 0
        %p310 = pnand %p308, %p309
        %p311 = pneg %p310
        %p312 = scmp.eq.s32.totalorder %s28, 0
        %p313 = pnand %p311, %p312
        %p314 = pneg %p313
        // Predicated region
        $region53: #{tpu_custom_call.1} parent=47 // pred_check
          _
        $region54: #{tpu_custom_call.1} parent=47 // pred_check_branch
          %316 = sbr.rel (%p313) target = $region56
        $region55: #{tpu_custom_call.1} parent=47 // pred_region
          %vm317 = vcmask 15360
          %318 = vst.msk [vmem:[%s7] sm:$0xff] %vm317, 0.0
          %319 = vst.msk [vmem:[%s7 + $0x8] sm:$0xff] %vm317, 0.0
          %vm320 = vcmask 7168
          %321 = vst.msk [vmem:[#allocation2] sm:$0xff] %vm320, 0.0
          %322 = vst.msk [vmem:[#allocation2 + $0x8] sm:$0xff] %vm320, 0.0
          %323 = vst.msk [vmem:[#allocation2 + $0x10] sm:$0xff] %vm320, 0.0
          %324 = vst.msk [vmem:[#allocation2 + $0x18] sm:$0xff] %vm320, 0.0
          %325 = vst.msk [vmem:[#allocation2 + $0x20] sm:$0xff] %vm320, 0.0
          %326 = vst.msk [vmem:[#allocation2 + $0x28] sm:$0xff] %vm320, 0.0
          %327 = vst.msk [vmem:[#allocation2 + $0x30] sm:$0xff] %vm320, 0.0
          %328 = vst.msk [vmem:[#allocation2 + $0x38] sm:$0xff] %vm320, 0.0
          %329 = vst.msk [vmem:[#allocation2 + $0x40] sm:$0xff] %vm320, 0.0
          %330 = vst.msk [vmem:[#allocation2 + $0x48] sm:$0xff] %vm320, 0.0
          %331 = vst.msk [vmem:[#allocation2 + $0x50] sm:$0xff] %vm320, 0.0
          %332 = vst.msk [vmem:[#allocation2 + $0x58] sm:$0xff] %vm320, 0.0
          %333 = vst.msk [vmem:[#allocation2 + $0x60] sm:$0xff] %vm320, 0.0
          %334 = vst.msk [vmem:[#allocation2 + $0x68] sm:$0xff] %vm320, 0.0
          %335 = vst.msk [vmem:[#allocation2 + $0x70] sm:$0xff] %vm320, 0.0
          %336 = vst.msk [vmem:[#allocation2 + $0x78] sm:$0xff] %vm320, 0.0
          %337 = vst.msk [vmem:[#allocation2 + $0x80] sm:$0xff] %vm320, 0.0
          %338 = vst.msk [vmem:[#allocation2 + $0x88] sm:$0xff] %vm320, 0.0
          %339 = vst.msk [vmem:[#allocation2 + $0x90] sm:$0xff] %vm320, 0.0
          %340 = vst.msk [vmem:[#allocation2 + $0x98] sm:$0xff] %vm320, 0.0
          %341 = vst.msk [vmem:[#allocation2 + $0xa0] sm:$0xff] %vm320, 0.0
          %342 = vst.msk [vmem:[#allocation2 + $0xa8] sm:$0xff] %vm320, 0.0
          %343 = vst.msk [vmem:[#allocation2 + $0xb0] sm:$0xff] %vm320, 0.0
          %344 = vst.msk [vmem:[#allocation2 + $0xb8] sm:$0xff] %vm320, 0.0
          %345 = vst.msk [vmem:[#allocation2 + $0xc0] sm:$0xff] %vm320, 0.0
          %346 = vst.msk [vmem:[#allocation2 + $0xc8] sm:$0xff] %vm320, 0.0
          %347 = vst.msk [vmem:[#allocation2 + $0xd0] sm:$0xff] %vm320, 0.0
          %348 = vst.msk [vmem:[#allocation2 + $0xd8] sm:$0xff] %vm320, 0.0
          %349 = vst.msk [vmem:[#allocation2 + $0xe0] sm:$0xff] %vm320, 0.0
          %350 = vst.msk [vmem:[#allocation2 + $0xe8] sm:$0xff] %vm320, 0.0
          %351 = vst.msk [vmem:[#allocation2 + $0xf0] sm:$0xff] %vm320, 0.0
          %352 = vst.msk [vmem:[#allocation2 + $0xf8] sm:$0xff] %vm320, 0.0
          %353 = vst.msk [vmem:[#allocation3] sm:$0xff] %vm320, 0.0
          %354 = vst.msk [vmem:[#allocation3 + $0x8] sm:$0xff] %vm320, 0.0
          %355 = vst.msk [vmem:[#allocation3 + $0x10] sm:$0xff] %vm320, 0.0
          %356 = vst.msk [vmem:[#allocation3 + $0x18] sm:$0xff] %vm320, 0.0
          %357 = vst.msk [vmem:[#allocation3 + $0x20] sm:$0xff] %vm320, 0.0
          %358 = vst.msk [vmem:[#allocation3 + $0x28] sm:$0xff] %vm320, 0.0
          %359 = vst.msk [vmem:[#allocation3 + $0x30] sm:$0xff] %vm320, 0.0
          %360 = vst.msk [vmem:[#allocation3 + $0x38] sm:$0xff] %vm320, 0.0
          %361 = vst.msk [vmem:[#allocation3 + $0x40] sm:$0xff] %vm320, 0.0
          %362 = vst.msk [vmem:[#allocation3 + $0x48] sm:$0xff] %vm320, 0.0
          %363 = vst.msk [vmem:[#allocation3 + $0x50] sm:$0xff] %vm320, 0.0
          %364 = vst.msk [vmem:[#allocation3 + $0x58] sm:$0xff] %vm320, 0.0
          %365 = vst.msk [vmem:[#allocation3 + $0x60] sm:$0xff] %vm320, 0.0
          %366 = vst.msk [vmem:[#allocation3 + $0x68] sm:$0xff] %vm320, 0.0
          %367 = vst.msk [vmem:[#allocation3 + $0x70] sm:$0xff] %vm320, 0.0
          %368 = vst.msk [vmem:[#allocation3 + $0x78] sm:$0xff] %vm320, 0.0
          %369 = vst.msk [vmem:[#allocation3 + $0x80] sm:$0xff] %vm320, 0.0
          %370 = vst.msk [vmem:[#allocation3 + $0x88] sm:$0xff] %vm320, 0.0
          %371 = vst.msk [vmem:[#allocation3 + $0x90] sm:$0xff] %vm320, 0.0
          %372 = vst.msk [vmem:[#allocation3 + $0x98] sm:$0xff] %vm320, 0.0
          %373 = vst.msk [vmem:[#allocation3 + $0xa0] sm:$0xff] %vm320, 0.0
          %374 = vst.msk [vmem:[#allocation3 + $0xa8] sm:$0xff] %vm320, 0.0
          %375 = vst.msk [vmem:[#allocation3 + $0xb0] sm:$0xff] %vm320, 0.0
          %376 = vst.msk [vmem:[#allocation3 + $0xb8] sm:$0xff] %vm320, 0.0
          %377 = vst.msk [vmem:[#allocation3 + $0xc0] sm:$0xff] %vm320, 0.0
          %378 = vst.msk [vmem:[#allocation3 + $0xc8] sm:$0xff] %vm320, 0.0
          %379 = vst.msk [vmem:[#allocation3 + $0xd0] sm:$0xff] %vm320, 0.0
          %380 = vst.msk [vmem:[#allocation3 + $0xd8] sm:$0xff] %vm320, 0.0
          %381 = vst.msk [vmem:[#allocation3 + $0xe0] sm:$0xff] %vm320, 0.0
          %382 = vst.msk [vmem:[#allocation3 + $0xe8] sm:$0xff] %vm320, 0.0
          %383 = vst.msk [vmem:[#allocation3 + $0xf0] sm:$0xff] %vm320, 0.0
          %384 = vst.msk [vmem:[#allocation3 + $0xf8] sm:$0xff] %vm320, 0.0
          %385 = vst.msk [vmem:[#allocation6] sm:$0xff] %vm320, 0.0
          %386 = vst.msk [vmem:[#allocation6 + $0x8] sm:$0xff] %vm320, 0.0
          %387 = vst.msk [vmem:[#allocation7] sm:$0xff] %vm320, 0.0
          %388 = vst.msk [vmem:[#allocation7 + $0x8] sm:$0xff] %vm320, 0.0
        $region56: #{tpu_custom_call.1} parent=47 // pred_fallthru
          _
        %v389 = vld [vmem:[%s281] sm:$0xff]
        %v390 = vld [vmem:[%s281 + $0x8] sm:$0xff]
        %v391 = vld [vmem:[%s281 + $0x10] sm:$0xff]
        %v392 = vld [vmem:[%s281 + $0x18] sm:$0xff]
        %v393 = vld [vmem:[%s281 + $0x20] sm:$0xff]
        %v394 = vld [vmem:[%s281 + $0x28] sm:$0xff]
        %v395 = vld [vmem:[%s281 + $0x30] sm:$0xff]
        %v396 = vld [vmem:[%s281 + $0x38] sm:$0xff]
        %v397 = vld [vmem:[%s281 + $0x40] sm:$0xff]
        %v398 = vld [vmem:[%s281 + $0x48] sm:$0xff]
        %v399 = vld [vmem:[%s281 + $0x50] sm:$0xff]
        %v400 = vld [vmem:[%s281 + $0x58] sm:$0xff]
        %v401 = vld [vmem:[%s281 + $0x60] sm:$0xff]
        %v402 = vld [vmem:[%s281 + $0x68] sm:$0xff]
        %v403 = vld [vmem:[%s281 + $0x70] sm:$0xff]
        %v404 = vld [vmem:[%s281 + $0x78] sm:$0xff]
        %v405 = vld [vmem:[%s281 + $0x80] sm:$0xff]
        %v406 = vld [vmem:[%s281 + $0x88] sm:$0xff]
        %v407 = vld [vmem:[%s281 + $0x90] sm:$0xff]
        %v408 = vld [vmem:[%s281 + $0x98] sm:$0xff]
        %v409 = vld [vmem:[%s281 + $0xa0] sm:$0xff]
        %v410 = vld [vmem:[%s281 + $0xa8] sm:$0xff]
        %v411 = vld [vmem:[%s281 + $0xb0] sm:$0xff]
        %v412 = vld [vmem:[%s281 + $0xb8] sm:$0xff]
        %v413 = vld [vmem:[%s281 + $0xc0] sm:$0xff]
        %v414 = vld [vmem:[%s281 + $0xc8] sm:$0xff]
        %v415 = vld [vmem:[%s281 + $0xd0] sm:$0xff]
        %v416 = vld [vmem:[%s281 + $0xd8] sm:$0xff]
        %v417 = vld [vmem:[%s281 + $0xe0] sm:$0xff]
        %v418 = vld [vmem:[%s281 + $0xe8] sm:$0xff]
        %v419 = vld [vmem:[%s281 + $0xf0] sm:$0xff]
        %v420 = vld [vmem:[%s281 + $0xf8] sm:$0xff]
        %v421 = vld [vmem:[%s281 + $0x100] sm:$0xff]
        %v422 = vld [vmem:[%s281 + $0x108] sm:$0xff]
        %v423 = vld [vmem:[%s281 + $0x110] sm:$0xff]
        %v424 = vld [vmem:[%s281 + $0x118] sm:$0xff]
        %v425 = vld [vmem:[%s281 + $0x120] sm:$0xff]
        %v426 = vld [vmem:[%s281 + $0x128] sm:$0xff]
        %v427 = vld [vmem:[%s281 + $0x130] sm:$0xff]
        %v428 = vld [vmem:[%s281 + $0x138] sm:$0xff]
        %v429 = vld [vmem:[%s281 + $0x140] sm:$0xff]
        %v430 = vld [vmem:[%s281 + $0x148] sm:$0xff]
        %v431 = vld [vmem:[%s281 + $0x150] sm:$0xff]
        %v432 = vld [vmem:[%s281 + $0x158] sm:$0xff]
        %v433 = vld [vmem:[%s281 + $0x160] sm:$0xff]
        %v434 = vld [vmem:[%s281 + $0x168] sm:$0xff]
        %v435 = vld [vmem:[%s281 + $0x170] sm:$0xff]
        %v436 = vld [vmem:[%s281 + $0x178] sm:$0xff]
        %v437 = vld [vmem:[%s281 + $0x180] sm:$0xff]
        %v438 = vld [vmem:[%s281 + $0x188] sm:$0xff]
        %v439 = vld [vmem:[%s281 + $0x190] sm:$0xff]
        %v440 = vld [vmem:[%s281 + $0x198] sm:$0xff]
        %v441 = vld [vmem:[%s281 + $0x1a0] sm:$0xff]
        %v442 = vld [vmem:[%s281 + $0x1a8] sm:$0xff]
        %v443 = vld [vmem:[%s281 + $0x1b0] sm:$0xff]
        %v444 = vld [vmem:[%s281 + $0x1b8] sm:$0xff]
        %v445 = vld [vmem:[%s281 + $0x1c0] sm:$0xff]
        %v446 = vld [vmem:[%s281 + $0x1c8] sm:$0xff]
        %v447 = vld [vmem:[%s281 + $0x1d0] sm:$0xff]
        %v448 = vld [vmem:[%s281 + $0x1d8] sm:$0xff]
        %v449 = vld [vmem:[%s281 + $0x1e0] sm:$0xff]
        %v450 = vld [vmem:[%s281 + $0x1e8] sm:$0xff]
        %v451 = vld [vmem:[%s281 + $0x1f0] sm:$0xff]
        %v452 = vld [vmem:[%s281 + $0x1f8] sm:$0xff]
        %v453 = vpack.c.bf16 %v391, %v389
        %v454 = vpack.c.bf16 %v392, %v390
        %v455 = vpack.c.bf16 %v395, %v393
        %v456 = vpack.c.bf16 %v396, %v394
        %v457 = vpack.c.bf16 %v399, %v397
        %v458 = vpack.c.bf16 %v400, %v398
        %v459 = vpack.c.bf16 %v403, %v401
        %v460 = vpack.c.bf16 %v404, %v402
        %v461 = vpack.c.bf16 %v407, %v405
        %v462 = vpack.c.bf16 %v408, %v406
        %v463 = vpack.c.bf16 %v411, %v409
        %v464 = vpack.c.bf16 %v412, %v410
        %v465 = vpack.c.bf16 %v415, %v413
        %v466 = vpack.c.bf16 %v416, %v414
        %v467 = vpack.c.bf16 %v419, %v417
        %v468 = vpack.c.bf16 %v420, %v418
        %v469 = vpack.c.bf16 %v423, %v421
        %v470 = vpack.c.bf16 %v424, %v422
        %v471 = vpack.c.bf16 %v427, %v425
        %v472 = vpack.c.bf16 %v428, %v426
        %v473 = vpack.c.bf16 %v431, %v429
        %v474 = vpack.c.bf16 %v432, %v430
        %v475 = vpack.c.bf16 %v435, %v433
        %v476 = vpack.c.bf16 %v436, %v434
        %v477 = vpack.c.bf16 %v439, %v437
        %v478 = vpack.c.bf16 %v440, %v438
        %v479 = vpack.c.bf16 %v443, %v441
        %v480 = vpack.c.bf16 %v444, %v442
        %v481 = vpack.c.bf16 %v447, %v445
        %v482 = vpack.c.bf16 %v448, %v446
        %v483 = vpack.c.bf16 %v451, %v449
        %v484 = vpack.c.bf16 %v452, %v450
        %v485 = vld [vmem:[%s1] sm:$0xff]
        %v486 = vld [vmem:[%s1 + $0x8] sm:$0xff]
        %v487 = vld [vmem:[%s1 + $0x10] sm:$0xff]
        %v488 = vld [vmem:[%s1 + $0x18] sm:$0xff]
        %v489 = vld [vmem:[%s1 + $0x20] sm:$0xff]
        %v490 = vld [vmem:[%s1 + $0x28] sm:$0xff]
        %v491 = vld [vmem:[%s1 + $0x30] sm:$0xff]
        %v492 = vld [vmem:[%s1 + $0x38] sm:$0xff]
        %v493 = vld [vmem:[%s1 + $0x40] sm:$0xff]
        %v494 = vld [vmem:[%s1 + $0x48] sm:$0xff]
        %v495 = vld [vmem:[%s1 + $0x50] sm:$0xff]
        %v496 = vld [vmem:[%s1 + $0x58] sm:$0xff]
        %v497 = vld [vmem:[%s1 + $0x60] sm:$0xff]
        %v498 = vld [vmem:[%s1 + $0x68] sm:$0xff]
        %v499 = vld [vmem:[%s1 + $0x70] sm:$0xff]
        %v500 = vld [vmem:[%s1 + $0x78] sm:$0xff]
        %v501 = vld [vmem:[%s1 + $0x80] sm:$0xff]
        %v502 = vld [vmem:[%s1 + $0x88] sm:$0xff]
        %v503 = vld [vmem:[%s1 + $0x90] sm:$0xff]
        %v504 = vld [vmem:[%s1 + $0x98] sm:$0xff]
        %v505 = vld [vmem:[%s1 + $0xa0] sm:$0xff]
        %v506 = vld [vmem:[%s1 + $0xa8] sm:$0xff]
        %v507 = vld [vmem:[%s1 + $0xb0] sm:$0xff]
        %v508 = vld [vmem:[%s1 + $0xb8] sm:$0xff]
        %v509 = vld [vmem:[%s1 + $0xc0] sm:$0xff]
        %v510 = vld [vmem:[%s1 + $0xc8] sm:$0xff]
        %v511 = vld [vmem:[%s1 + $0xd0] sm:$0xff]
        %v512 = vld [vmem:[%s1 + $0xd8] sm:$0xff]
        %v513 = vld [vmem:[%s1 + $0xe0] sm:$0xff]
        %v514 = vld [vmem:[%s1 + $0xe8] sm:$0xff]
        %v515 = vld [vmem:[%s1 + $0xf0] sm:$0xff]
        %v516 = vld [vmem:[%s1 + $0xf8] sm:$0xff]
        %v549 = vunpack.c.l.b16 %v485
        %v550 = vunpack.c.h.b16 %v485
        %v551 = vunpack.c.l.b16 %v486
        %v552 = vunpack.c.h.b16 %v486
        %v553 = vunpack.c.l.b16 %v487
        %v554 = vunpack.c.h.b16 %v487
        %v555 = vunpack.c.l.b16 %v488
        %v556 = vunpack.c.h.b16 %v488
        %v557 = vunpack.c.l.b16 %v489
        %v558 = vunpack.c.h.b16 %v489
        %v559 = vunpack.c.l.b16 %v490
        %v560 = vunpack.c.h.b16 %v490
        %v561 = vunpack.c.l.b16 %v491
        %v562 = vunpack.c.h.b16 %v491
        %v563 = vunpack.c.l.b16 %v492
        %v564 = vunpack.c.h.b16 %v492
        %v565 = vunpack.c.l.b16 %v493
        %v566 = vunpack.c.h.b16 %v493
        %v567 = vunpack.c.l.b16 %v494
        %v568 = vunpack.c.h.b16 %v494
        %v569 = vunpack.c.l.b16 %v495
        %v570 = vunpack.c.h.b16 %v495
        %v571 = vunpack.c.l.b16 %v496
        %v572 = vunpack.c.h.b16 %v496
        %v573 = vunpack.c.l.b16 %v497
        %v574 = vunpack.c.h.b16 %v497
        %v575 = vunpack.c.l.b16 %v498
        %v576 = vunpack.c.h.b16 %v498
        %v577 = vunpack.c.l.b16 %v499
        %v578 = vunpack.c.h.b16 %v499
        %v579 = vunpack.c.l.b16 %v500
        %v580 = vunpack.c.h.b16 %v500
        %v581 = vunpack.c.l.b16 %v501
        %v582 = vunpack.c.h.b16 %v501
        %v583 = vunpack.c.l.b16 %v502
        %v584 = vunpack.c.h.b16 %v502
        %v585 = vunpack.c.l.b16 %v503
        %v586 = vunpack.c.h.b16 %v503
        %v587 = vunpack.c.l.b16 %v504
        %v588 = vunpack.c.h.b16 %v504
        %v589 = vunpack.c.l.b16 %v505
        %v590 = vunpack.c.h.b16 %v505
        %v591 = vunpack.c.l.b16 %v506
        %v592 = vunpack.c.h.b16 %v506
        %v593 = vunpack.c.l.b16 %v507
        %v594 = vunpack.c.h.b16 %v507
        %v595 = vunpack.c.l.b16 %v508
        %v596 = vunpack.c.h.b16 %v508
        %v597 = vunpack.c.l.b16 %v509
        %v598 = vunpack.c.h.b16 %v509
        %v599 = vunpack.c.l.b16 %v510
        %v600 = vunpack.c.h.b16 %v510
        %v601 = vunpack.c.l.b16 %v511
        %v602 = vunpack.c.h.b16 %v511
        %v603 = vunpack.c.l.b16 %v512
        %v604 = vunpack.c.h.b16 %v512
        %v605 = vunpack.c.l.b16 %v513
        %v606 = vunpack.c.h.b16 %v513
        %v607 = vunpack.c.l.b16 %v514
        %v608 = vunpack.c.h.b16 %v514
        %v609 = vunpack.c.l.b16 %v515
        %v610 = vunpack.c.h.b16 %v515
        %v611 = vunpack.c.l.b16 %v516
        %v612 = vunpack.c.h.b16 %v516
        %v613 = vpack.c.b16 %v551, %v549
        %v614 = vpack.c.b16 %v552, %v550
        %v615 = vpack.c.b16 %v555, %v553
        %v616 = vpack.c.b16 %v556, %v554
        %v617 = vpack.c.b16 %v559, %v557
        %v618 = vpack.c.b16 %v560, %v558
        %v619 = vpack.c.b16 %v563, %v561
        %v620 = vpack.c.b16 %v564, %v562
        %v621 = vpack.c.b16 %v567, %v565
        %v622 = vpack.c.b16 %v568, %v566
        %v623 = vpack.c.b16 %v571, %v569
        %v624 = vpack.c.b16 %v572, %v570
        %v625 = vpack.c.b16 %v575, %v573
        %v626 = vpack.c.b16 %v576, %v574
        %v627 = vpack.c.b16 %v579, %v577
        %v628 = vpack.c.b16 %v580, %v578
        %v629 = vpack.c.b16 %v583, %v581
        %v630 = vpack.c.b16 %v584, %v582
        %v631 = vpack.c.b16 %v587, %v585
        %v632 = vpack.c.b16 %v588, %v586
        %v633 = vpack.c.b16 %v591, %v589
        %v634 = vpack.c.b16 %v592, %v590
        %v635 = vpack.c.b16 %v595, %v593
        %v636 = vpack.c.b16 %v596, %v594
        %v637 = vpack.c.b16 %v599, %v597
        %v638 = vpack.c.b16 %v600, %v598
        %v639 = vpack.c.b16 %v603, %v601
        %v640 = vpack.c.b16 %v604, %v602
        %v641 = vpack.c.b16 %v607, %v605
        %v642 = vpack.c.b16 %v608, %v606
        %v643 = vpack.c.b16 %v611, %v609
        %v644 = vpack.c.b16 %v612, %v610
        %677 = vmatprep.subr.bf16.mxu0 %v468
        %678 = vmatpush1.bf16.msra.mxu0 %v467
        %679 = vmatprep.subr.bf16.mxu0 %v466
        %680 = vmatpush1.bf16.msra.mxu0 %v465
        %681 = vmatprep.subr.bf16.mxu0 %v464
        %682 = vmatpush1.bf16.msra.mxu0 %v463
        %683 = vmatprep.subr.bf16.mxu0 %v462
        %684 = vmatpush1.bf16.msra.mxu0 %v461
        %685 = vmatprep.subr.bf16.mxu0 %v460
        %686 = vmatpush1.bf16.msra.mxu0 %v459
        %687 = vmatprep.subr.bf16.mxu0 %v458
        %688 = vmatpush1.bf16.msra.mxu0 %v457
        %689 = vmatprep.subr.bf16.mxu0 %v456
        %690 = vmatpush1.bf16.msra.mxu0 %v455
        %691 = vmatprep.subr.bf16.mxu0 %v454
        %692 = vmatpush1.bf16.msra.mxu0 %v453
        %693 = vmatprep.subr.bf16.mxu0 %v484
        %694 = vmatpush2.bf16.msra.mxu0 %v483
        %695 = vmatprep.subr.bf16.mxu0 %v482
        %696 = vmatpush2.bf16.msra.mxu0 %v481
        %697 = vmatprep.subr.bf16.mxu0 %v480
        %698 = vmatpush2.bf16.msra.mxu0 %v479
        %699 = vmatprep.subr.bf16.mxu0 %v478
        %700 = vmatpush2.bf16.msra.mxu0 %v477
        %701 = vmatprep.subr.bf16.mxu0 %v476
        %702 = vmatpush2.bf16.msra.mxu0 %v475
        %703 = vmatprep.subr.bf16.mxu0 %v474
        %704 = vmatpush2.bf16.msra.mxu0 %v473
        %705 = vmatprep.subr.bf16.mxu0 %v472
        %706 = vmatpush2.bf16.msra.mxu0 %v471
        %707 = vmatprep.subr.bf16.mxu0 %v470
        %708 = vmatpush2.bf16.msra.mxu0 %v469
        %709 = vmatprep.mubr.bf16.mxu0 %v614
        %710 = vmatmul.mubr.bf16.gmra.mxu0 %v613
        %v711 = vpop.f32.mrf.mxu0
        %v712 = vadd.f32 0.0, %v711
        %v713 = vpop.f32.mrf.mxu0
        %v714 = vadd.f32 0.0, %v713
        %v715 = vpop.f32.mrf.mxu0
        %v716 = vadd.f32 0.0, %v715
        %v717 = vpop.f32.mrf.mxu0
        %v718 = vadd.f32 0.0, %v717
        %719 = vmatprep.mubr.bf16.mxu0 %v616
        %720 = vmatmul.mubr.bf16.gmra.mxu0 %v615
        %v721 = vpop.f32.mrf.mxu0
        %v722 = vadd.f32 0.0, %v721
        %v723 = vpop.f32.mrf.mxu0
        %v724 = vadd.f32 0.0, %v723
        %v725 = vpop.f32.mrf.mxu0
        %v726 = vadd.f32 0.0, %v725
        %v727 = vpop.f32.mrf.mxu0
        %v728 = vadd.f32 0.0, %v727
        %729 = vmatprep.mubr.bf16.mxu0 %v618
        %730 = vmatmul.mubr.bf16.gmra.mxu0 %v617
        %v731 = vpop.f32.mrf.mxu0
        %v732 = vadd.f32 0.0, %v731
        %v733 = vpop.f32.mrf.mxu0
        %v734 = vadd.f32 0.0, %v733
        %v735 = vpop.f32.mrf.mxu0
        %v736 = vadd.f32 0.0, %v735
        %v737 = vpop.f32.mrf.mxu0
        %v738 = vadd.f32 0.0, %v737
        %739 = vmatprep.mubr.bf16.mxu0 %v620
        %740 = vmatmul.mubr.bf16.gmra.mxu0 %v619
        %v741 = vpop.f32.mrf.mxu0
        %v742 = vadd.f32 0.0, %v741
        %v743 = vpop.f32.mrf.mxu0
        %v744 = vadd.f32 0.0, %v743
        %v745 = vpop.f32.mrf.mxu0
        %v746 = vadd.f32 0.0, %v745
        %v747 = vpop.f32.mrf.mxu0
        %v748 = vadd.f32 0.0, %v747
        %749 = vmatprep.mubr.bf16.mxu0 %v622
        %750 = vmatmul.mubr.bf16.gmra.mxu0 %v621
        %v751 = vpop.f32.mrf.mxu0
        %v752 = vadd.f32 0.0, %v751
        %v753 = vpop.f32.mrf.mxu0
        %v754 = vadd.f32 0.0, %v753
        %v755 = vpop.f32.mrf.mxu0
        %v756 = vadd.f32 0.0, %v755
        %v757 = vpop.f32.mrf.mxu0
        %v758 = vadd.f32 0.0, %v757
        %759 = vmatprep.mubr.bf16.mxu0 %v624
        %760 = vmatmul.mubr.bf16.gmra.mxu0 %v623
        %v761 = vpop.f32.mrf.mxu0
        %v762 = vadd.f32 0.0, %v761
        %v763 = vpop.f32.mrf.mxu0
        %v764 = vadd.f32 0.0, %v763
        %v765 = vpop.f32.mrf.mxu0
        %v766 = vadd.f32 0.0, %v765
        %v767 = vpop.f32.mrf.mxu0
        %v768 = vadd.f32 0.0, %v767
        %769 = vmatprep.mubr.bf16.mxu0 %v626
        %770 = vmatmul.mubr.bf16.gmra.mxu0 %v625
        %v771 = vpop.f32.mrf.mxu0
        %v772 = vadd.f32 0.0, %v771
        %v773 = vpop.f32.mrf.mxu0
        %v774 = vadd.f32 0.0, %v773
        %v775 = vpop.f32.mrf.mxu0
        %v776 = vadd.f32 0.0, %v775
        %v777 = vpop.f32.mrf.mxu0
        %v778 = vadd.f32 0.0, %v777
        %779 = vmatprep.mubr.bf16.mxu0 %v628
        %780 = vmatmul.mubr.bf16.gmra.mxu0 %v627
        %v781 = vpop.f32.mrf.mxu0
        %v782 = vadd.f32 0.0, %v781
        %v783 = vpop.f32.mrf.mxu0
        %v784 = vadd.f32 0.0, %v783
        %v785 = vpop.f32.mrf.mxu0
        %v786 = vadd.f32 0.0, %v785
        %v787 = vpop.f32.mrf.mxu0
        %v788 = vadd.f32 0.0, %v787
        %789 = vmatprep.mubr.bf16.mxu0 %v630
        %790 = vmatmul.mubr.bf16.gmra.mxu0 %v629
        %v791 = vpop.f32.mrf.mxu0
        %v792 = vadd.f32 0.0, %v791
        %v793 = vpop.f32.mrf.mxu0
        %v794 = vadd.f32 0.0, %v793
        %v795 = vpop.f32.mrf.mxu0
        %v796 = vadd.f32 0.0, %v795
        %v797 = vpop.f32.mrf.mxu0
        %v798 = vadd.f32 0.0, %v797
        %799 = vmatprep.mubr.bf16.mxu0 %v632
        %800 = vmatmul.mubr.bf16.gmra.mxu0 %v631
        %v801 = vpop.f32.mrf.mxu0
        %v802 = vadd.f32 0.0, %v801
        %v803 = vpop.f32.mrf.mxu0
        %v804 = vadd.f32 0.0, %v803
        %v805 = vpop.f32.mrf.mxu0
        %v806 = vadd.f32 0.0, %v805
        %v807 = vpop.f32.mrf.mxu0
        %v808 = vadd.f32 0.0, %v807
        %809 = vmatprep.mubr.bf16.mxu0 %v634
        %810 = vmatmul.mubr.bf16.gmra.mxu0 %v633
        %v811 = vpop.f32.mrf.mxu0
        %v812 = vadd.f32 0.0, %v811
        %v813 = vpop.f32.mrf.mxu0
        %v814 = vadd.f32 0.0, %v813
        %v815 = vpop.f32.mrf.mxu0
        %v816 = vadd.f32 0.0, %v815
        %v817 = vpop.f32.mrf.mxu0
        %v818 = vadd.f32 0.0, %v817
        %819 = vmatprep.mubr.bf16.mxu0 %v636
        %820 = vmatmul.mubr.bf16.gmra.mxu0 %v635
        %v821 = vpop.f32.mrf.mxu0
        %v822 = vadd.f32 0.0, %v821
        %v823 = vpop.f32.mrf.mxu0
        %v824 = vadd.f32 0.0, %v823
        %v825 = vpop.f32.mrf.mxu0
        %v826 = vadd.f32 0.0, %v825
        %v827 = vpop.f32.mrf.mxu0
        %v828 = vadd.f32 0.0, %v827
        %829 = vmatprep.mubr.bf16.mxu0 %v638
        %830 = vmatmul.mubr.bf16.gmra.mxu0 %v637
        %v831 = vpop.f32.mrf.mxu0
        %v832 = vadd.f32 0.0, %v831
        %v833 = vpop.f32.mrf.mxu0
        %v834 = vadd.f32 0.0, %v833
        %v835 = vpop.f32.mrf.mxu0
        %v836 = vadd.f32 0.0, %v835
        %v837 = vpop.f32.mrf.mxu0
        %v838 = vadd.f32 0.0, %v837
        %839 = vmatprep.mubr.bf16.mxu0 %v640
        %840 = vmatmul.mubr.bf16.gmra.mxu0 %v639
        %v841 = vpop.f32.mrf.mxu0
        %v842 = vadd.f32 0.0, %v841
        %v843 = vpop.f32.mrf.mxu0
        %v844 = vadd.f32 0.0, %v843
        %v845 = vpop.f32.mrf.mxu0
        %v846 = vadd.f32 0.0, %v845
        %v847 = vpop.f32.mrf.mxu0
        %v848 = vadd.f32 0.0, %v847
        %849 = vmatprep.mubr.bf16.mxu0 %v642
        %850 = vmatmul.mubr.bf16.gmra.mxu0 %v641
        %v851 = vpop.f32.mrf.mxu0
        %v852 = vadd.f32 0.0, %v851
        %v853 = vpop.f32.mrf.mxu0
        %v854 = vadd.f32 0.0, %v853
        %v855 = vpop.f32.mrf.mxu0
        %v856 = vadd.f32 0.0, %v855
        %v857 = vpop.f32.mrf.mxu0
        %v858 = vadd.f32 0.0, %v857
        %859 = vmatprep.mubr.bf16.mxu0 %v644
        %860 = vmatmul.mubr.bf16.gmra.mxu0 %v643
        %v861 = vpop.f32.mrf.mxu0
        %v862 = vadd.f32 0.0, %v861
        %v863 = vpop.f32.mrf.mxu0
        %v864 = vadd.f32 0.0, %v863
        %v865 = vpop.f32.mrf.mxu0
        %v866 = vadd.f32 0.0, %v865
        %v867 = vpop.f32.mrf.mxu0
        %v868 = vadd.f32 0.0, %v867
        %869 = vdwg.mxu0
        // Predicated region
        $region57: #{tpu_custom_call.1} parent=47 // pred_check
          %p870 = pneg %p308
        $region58: #{tpu_custom_call.1} parent=47 // pred_check_branch
          %872 = sbr.rel (%p870) target = $region60
        $region59: #{tpu_custom_call.1} parent=47 // pred_region
          %v873 = vld [vmem:[#allocation2] sm:$0xff]
          %v874 = vld [vmem:[#allocation2 + $0x8] sm:$0xff]
          %v875 = vld [vmem:[#allocation2 + $0x10] sm:$0xff]
          %v876 = vld [vmem:[#allocation2 + $0x18] sm:$0xff]
          %v877 = vld [vmem:[#allocation2 + $0x20] sm:$0xff]
          %v878 = vld [vmem:[#allocation2 + $0x28] sm:$0xff]
          %v879 = vld [vmem:[#allocation2 + $0x30] sm:$0xff]
          %v880 = vld [vmem:[#allocation2 + $0x38] sm:$0xff]
          %v881 = vld [vmem:[#allocation2 + $0x40] sm:$0xff]
          %v882 = vld [vmem:[#allocation2 + $0x48] sm:$0xff]
          %v883 = vld [vmem:[#allocation2 + $0x50] sm:$0xff]
          %v884 = vld [vmem:[#allocation2 + $0x58] sm:$0xff]
          %v885 = vld [vmem:[#allocation2 + $0x60] sm:$0xff]
          %v886 = vld [vmem:[#allocation2 + $0x68] sm:$0xff]
          %v887 = vld [vmem:[#allocation2 + $0x70] sm:$0xff]
          %v888 = vld [vmem:[#allocation2 + $0x78] sm:$0xff]
          %v889 = vld [vmem:[#allocation2 + $0x80] sm:$0xff]
          %v890 = vld [vmem:[#allocation2 + $0x88] sm:$0xff]
          %v891 = vld [vmem:[#allocation2 + $0x90] sm:$0xff]
          %v892 = vld [vmem:[#allocation2 + $0x98] sm:$0xff]
          %v893 = vld [vmem:[#allocation2 + $0xa0] sm:$0xff]
          %v894 = vld [vmem:[#allocation2 + $0xa8] sm:$0xff]
          %v895 = vld [vmem:[#allocation2 + $0xb0] sm:$0xff]
          %v896 = vld [vmem:[#allocation2 + $0xb8] sm:$0xff]
          %v897 = vld [vmem:[#allocation2 + $0xc0] sm:$0xff]
          %v898 = vld [vmem:[#allocation2 + $0xc8] sm:$0xff]
          %v899 = vld [vmem:[#allocation2 + $0xd0] sm:$0xff]
          %v900 = vld [vmem:[#allocation2 + $0xd8] sm:$0xff]
          %v901 = vld [vmem:[#allocation2 + $0xe0] sm:$0xff]
          %v902 = vld [vmem:[#allocation2 + $0xe8] sm:$0xff]
          %v903 = vld [vmem:[#allocation2 + $0xf0] sm:$0xff]
          %v904 = vld [vmem:[#allocation2 + $0xf8] sm:$0xff]
          %v905 = vadd.f32 %v712, %v714
          %906 = vadd.xlane.f32.xlu0 %v905
          %v907 = vpop.xlane.xlu0 %906
          %v908 = vadd.f32 %v716, %v718
          %909 = vadd.xlane.f32.xlu0 %v908
          %v910 = vpop.xlane.xlu0 %909
          %v911 = vadd.f32 %v722, %v724
          %912 = vadd.xlane.f32.xlu0 %v911
          %v913 = vpop.xlane.xlu0 %912
          %v914 = vadd.f32 %v726, %v728
          %915 = vadd.xlane.f32.xlu0 %v914
          %v916 = vpop.xlane.xlu0 %915
          %v917 = vadd.f32 %v732, %v734
          %918 = vadd.xlane.f32.xlu0 %v917
          %v919 = vpop.xlane.xlu0 %918
          %v920 = vadd.f32 %v736, %v738
          %921 = vadd.xlane.f32.xlu0 %v920
          %v922 = vpop.xlane.xlu0 %921
          %v923 = vadd.f32 %v742, %v744
          %924 = vadd.xlane.f32.xlu0 %v923
          %v925 = vpop.xlane.xlu0 %924
          %v926 = vadd.f32 %v746, %v748
          %927 = vadd.xlane.f32.xlu0 %v926
          %v928 = vpop.xlane.xlu0 %927
          %v929 = vadd.f32 %v752, %v754
          %930 = vadd.xlane.f32.xlu0 %v929
          %v931 = vpop.xlane.xlu0 %930
          %v932 = vadd.f32 %v756, %v758
          %933 = vadd.xlane.f32.xlu0 %v932
          %v934 = vpop.xlane.xlu0 %933
          %v935 = vadd.f32 %v762, %v764
          %936 = vadd.xlane.f32.xlu0 %v935
          %v937 = vpop.xlane.xlu0 %936
          %v938 = vadd.f32 %v766, %v768
          %939 = vadd.xlane.f32.xlu0 %v938
          %v940 = vpop.xlane.xlu0 %939
          %v941 = vadd.f32 %v772, %v774
          %942 = vadd.xlane.f32.xlu0 %v941
          %v943 = vpop.xlane.xlu0 %942
          %v944 = vadd.f32 %v776, %v778
          %945 = vadd.xlane.f32.xlu0 %v944
          %v946 = vpop.xlane.xlu0 %945
          %v947 = vadd.f32 %v782, %v784
          %948 = vadd.xlane.f32.xlu0 %v947
          %v949 = vpop.xlane.xlu0 %948
          %v950 = vadd.f32 %v786, %v788
          %951 = vadd.xlane.f32.xlu0 %v950
          %v952 = vpop.xlane.xlu0 %951
          %v953 = vadd.f32 %v792, %v794
          %954 = vadd.xlane.f32.xlu0 %v953
          %v955 = vpop.xlane.xlu0 %954
          %v956 = vadd.f32 %v796, %v798
          %957 = vadd.xlane.f32.xlu0 %v956
          %v958 = vpop.xlane.xlu0 %957
          %v959 = vadd.f32 %v802, %v804
          %960 = vadd.xlane.f32.xlu0 %v959
          %v961 = vpop.xlane.xlu0 %960
          %v962 = vadd.f32 %v806, %v808
          %963 = vadd.xlane.f32.xlu0 %v962
          %v964 = vpop.xlane.xlu0 %963
          %v965 = vadd.f32 %v812, %v814
          %966 = vadd.xlane.f32.xlu0 %v965
          %v967 = vpop.xlane.xlu0 %966
          %v968 = vadd.f32 %v816, %v818
          %969 = vadd.xlane.f32.xlu0 %v968
          %v970 = vpop.xlane.xlu0 %969
          %v971 = vadd.f32 %v822, %v824
          %972 = vadd.xlane.f32.xlu0 %v971
          %v973 = vpop.xlane.xlu0 %972
          %v974 = vadd.f32 %v826, %v828
          %975 = vadd.xlane.f32.xlu0 %v974
          %v976 = vpop.xlane.xlu0 %975
          %v977 = vadd.f32 %v832, %v834
          %978 = vadd.xlane.f32.xlu0 %v977
          %v979 = vpop.xlane.xlu0 %978
          %v980 = vadd.f32 %v836, %v838
          %981 = vadd.xlane.f32.xlu0 %v980
          %v982 = vpop.xlane.xlu0 %981
          %v983 = vadd.f32 %v842, %v844
          %984 = vadd.xlane.f32.xlu0 %v983
          %v985 = vpop.xlane.xlu0 %984
          %v986 = vadd.f32 %v846, %v848
          %987 = vadd.xlane.f32.xlu0 %v986
          %v988 = vpop.xlane.xlu0 %987
          %v989 = vadd.f32 %v852, %v854
          %990 = vadd.xlane.f32.xlu0 %v989
          %v991 = vpop.xlane.xlu0 %990
          %v992 = vadd.f32 %v856, %v858
          %993 = vadd.xlane.f32.xlu0 %v992
          %v994 = vpop.xlane.xlu0 %993
          %v995 = vadd.f32 %v862, %v864
          %996 = vadd.xlane.f32.xlu0 %v995
          %v997 = vpop.xlane.xlu0 %996
          %v998 = vadd.f32 %v866, %v868
          %999 = vadd.xlane.f32.xlu0 %v998
          %v1000 = vpop.xlane.xlu0 %999
          %v1001 = vadd.f32 %v873, %v907
          %v1002 = vadd.f32 %v874, %v910
          %v1003 = vadd.f32 %v875, %v913
          %v1004 = vadd.f32 %v876, %v916
          %v1005 = vadd.f32 %v877, %v919
          %v1006 = vadd.f32 %v878, %v922
          %v1007 = vadd.f32 %v879, %v925
          %v1008 = vadd.f32 %v880, %v928
          %v1009 = vadd.f32 %v881, %v931
          %v1010 = vadd.f32 %v882, %v934
          %v1011 = vadd.f32 %v883, %v937
          %v1012 = vadd.f32 %v884, %v940
          %v1013 = vadd.f32 %v885, %v943
          %v1014 = vadd.f32 %v886, %v946
          %v1015 = vadd.f32 %v887, %v949
          %v1016 = vadd.f32 %v888, %v952
          %v1017 = vadd.f32 %v889, %v955
          %v1018 = vadd.f32 %v890, %v958
          %v1019 = vadd.f32 %v891, %v961
          %v1020 = vadd.f32 %v892, %v964
          %v1021 = vadd.f32 %v893, %v967
          %v1022 = vadd.f32 %v894, %v970
          %v1023 = vadd.f32 %v895, %v973
          %v1024 = vadd.f32 %v896, %v976
          %v1025 = vadd.f32 %v897, %v979
          %v1026 = vadd.f32 %v898, %v982
          %v1027 = vadd.f32 %v899, %v985
          %v1028 = vadd.f32 %v900, %v988
          %v1029 = vadd.f32 %v901, %v991
          %v1030 = vadd.f32 %v902, %v994
          %v1031 = vadd.f32 %v903, %v997
          %v1032 = vadd.f32 %v904, %v1000
          %vm1033 = vcmask 7168
          %1034 = vst.msk [vmem:[#allocation2] sm:$0xff] %vm1033, %v1001
          %1035 = vst.msk [vmem:[#allocation2 + $0x8] sm:$0xff] %vm1033, %v1002
          %1036 = vst.msk [vmem:[#allocation2 + $0x10] sm:$0xff] %vm1033, %v1003
          %1037 = vst.msk [vmem:[#allocation2 + $0x18] sm:$0xff] %vm1033, %v1004
          %1038 = vst.msk [vmem:[#allocation2 + $0x20] sm:$0xff] %vm1033, %v1005
          %1039 = vst.msk [vmem:[#allocation2 + $0x28] sm:$0xff] %vm1033, %v1006
          %1040 = vst.msk [vmem:[#allocation2 + $0x30] sm:$0xff] %vm1033, %v1007
          %1041 = vst.msk [vmem:[#allocation2 + $0x38] sm:$0xff] %vm1033, %v1008
          %1042 = vst.msk [vmem:[#allocation2 + $0x40] sm:$0xff] %vm1033, %v1009
          %1043 = vst.msk [vmem:[#allocation2 + $0x48] sm:$0xff] %vm1033, %v1010
          %1044 = vst.msk [vmem:[#allocation2 + $0x50] sm:$0xff] %vm1033, %v1011
          %1045 = vst.msk [vmem:[#allocation2 + $0x58] sm:$0xff] %vm1033, %v1012
          %1046 = vst.msk [vmem:[#allocation2 + $0x60] sm:$0xff] %vm1033, %v1013
          %1047 = vst.msk [vmem:[#allocation2 + $0x68] sm:$0xff] %vm1033, %v1014
          %1048 = vst.msk [vmem:[#allocation2 + $0x70] sm:$0xff] %vm1033, %v1015
          %1049 = vst.msk [vmem:[#allocation2 + $0x78] sm:$0xff] %vm1033, %v1016
          %1050 = vst.msk [vmem:[#allocation2 + $0x80] sm:$0xff] %vm1033, %v1017
          %1051 = vst.msk [vmem:[#allocation2 + $0x88] sm:$0xff] %vm1033, %v1018
          %1052 = vst.msk [vmem:[#allocation2 + $0x90] sm:$0xff] %vm1033, %v1019
          %1053 = vst.msk [vmem:[#allocation2 + $0x98] sm:$0xff] %vm1033, %v1020
          %1054 = vst.msk [vmem:[#allocation2 + $0xa0] sm:$0xff] %vm1033, %v1021
          %1055 = vst.msk [vmem:[#allocation2 + $0xa8] sm:$0xff] %vm1033, %v1022
          %1056 = vst.msk [vmem:[#allocation2 + $0xb0] sm:$0xff] %vm1033, %v1023
          %1057 = vst.msk [vmem:[#allocation2 + $0xb8] sm:$0xff] %vm1033, %v1024
          %1058 = vst.msk [vmem:[#allocation2 + $0xc0] sm:$0xff] %vm1033, %v1025
          %1059 = vst.msk [vmem:[#allocation2 + $0xc8] sm:$0xff] %vm1033, %v1026
          %1060 = vst.msk [vmem:[#allocation2 + $0xd0] sm:$0xff] %vm1033, %v1027
          %1061 = vst.msk [vmem:[#allocation2 + $0xd8] sm:$0xff] %vm1033, %v1028
          %1062 = vst.msk [vmem:[#allocation2 + $0xe0] sm:$0xff] %vm1033, %v1029
          %1063 = vst.msk [vmem:[#allocation2 + $0xe8] sm:$0xff] %vm1033, %v1030
          %1064 = vst.msk [vmem:[#allocation2 + $0xf0] sm:$0xff] %vm1033, %v1031
          %1065 = vst.msk [vmem:[#allocation2 + $0xf8] sm:$0xff] %vm1033, %v1032
          %v1066 = vld [vmem:[#allocation3] sm:$0xff]
          %v1067 = vld [vmem:[#allocation3 + $0x8] sm:$0xff]
          %v1068 = vld [vmem:[#allocation3 + $0x10] sm:$0xff]
          %v1069 = vld [vmem:[#allocation3 + $0x18] sm:$0xff]
          %v1070 = vld [vmem:[#allocation3 + $0x20] sm:$0xff]
          %v1071 = vld [vmem:[#allocation3 + $0x28] sm:$0xff]
          %v1072 = vld [vmem:[#allocation3 + $0x30] sm:$0xff]
          %v1073 = vld [vmem:[#allocation3 + $0x38] sm:$0xff]
          %v1074 = vld [vmem:[#allocation3 + $0x40] sm:$0xff]
          %v1075 = vld [vmem:[#allocation3 + $0x48] sm:$0xff]
          %v1076 = vld [vmem:[#allocation3 + $0x50] sm:$0xff]
          %v1077 = vld [vmem:[#allocation3 + $0x58] sm:$0xff]
          %v1078 = vld [vmem:[#allocation3 + $0x60] sm:$0xff]
          %v1079 = vld [vmem:[#allocation3 + $0x68] sm:$0xff]
          %v1080 = vld [vmem:[#allocation3 + $0x70] sm:$0xff]
          %v1081 = vld [vmem:[#allocation3 + $0x78] sm:$0xff]
          %v1082 = vld [vmem:[#allocation3 + $0x80] sm:$0xff]
          %v1083 = vld [vmem:[#allocation3 + $0x88] sm:$0xff]
          %v1084 = vld [vmem:[#allocation3 + $0x90] sm:$0xff]
          %v1085 = vld [vmem:[#allocation3 + $0x98] sm:$0xff]
          %v1086 = vld [vmem:[#allocation3 + $0xa0] sm:$0xff]
          %v1087 = vld [vmem:[#allocation3 + $0xa8] sm:$0xff]
          %v1088 = vld [vmem:[#allocation3 + $0xb0] sm:$0xff]
          %v1089 = vld [vmem:[#allocation3 + $0xb8] sm:$0xff]
          %v1090 = vld [vmem:[#allocation3 + $0xc0] sm:$0xff]
          %v1091 = vld [vmem:[#allocation3 + $0xc8] sm:$0xff]
          %v1092 = vld [vmem:[#allocation3 + $0xd0] sm:$0xff]
          %v1093 = vld [vmem:[#allocation3 + $0xd8] sm:$0xff]
          %v1094 = vld [vmem:[#allocation3 + $0xe0] sm:$0xff]
          %v1095 = vld [vmem:[#allocation3 + $0xe8] sm:$0xff]
          %v1096 = vld [vmem:[#allocation3 + $0xf0] sm:$0xff]
          %v1097 = vld [vmem:[#allocation3 + $0xf8] sm:$0xff]
          %v1098 = vmul.f32 %v712, %v712
          %v1099 = vmul.f32 %v714, %v714
          %v1100 = vmul.f32 %v716, %v716
          %v1101 = vmul.f32 %v718, %v718
          %v1102 = vmul.f32 %v722, %v722
          %v1103 = vmul.f32 %v724, %v724
          %v1104 = vmul.f32 %v726, %v726
          %v1105 = vmul.f32 %v728, %v728
          %v1106 = vmul.f32 %v732, %v732
          %v1107 = vmul.f32 %v734, %v734
          %v1108 = vmul.f32 %v736, %v736
          %v1109 = vmul.f32 %v738, %v738
          %v1110 = vmul.f32 %v742, %v742
          %v1111 = vmul.f32 %v744, %v744
          %v1112 = vmul.f32 %v746, %v746
          %v1113 = vmul.f32 %v748, %v748
          %v1114 = vmul.f32 %v752, %v752
          %v1115 = vmul.f32 %v754, %v754
          %v1116 = vmul.f32 %v756, %v756
          %v1117 = vmul.f32 %v758, %v758
          %v1118 = vmul.f32 %v762, %v762
          %v1119 = vmul.f32 %v764, %v764
          %v1120 = vmul.f32 %v766, %v766
          %v1121 = vmul.f32 %v768, %v768
          %v1122 = vmul.f32 %v772, %v772
          %v1123 = vmul.f32 %v774, %v774
          %v1124 = vmul.f32 %v776, %v776
          %v1125 = vmul.f32 %v778, %v778
          %v1126 = vmul.f32 %v782, %v782
          %v1127 = vmul.f32 %v784, %v784
          %v1128 = vmul.f32 %v786, %v786
          %v1129 = vmul.f32 %v788, %v788
          %v1130 = vmul.f32 %v792, %v792
          %v1131 = vmul.f32 %v794, %v794
          %v1132 = vmul.f32 %v796, %v796
          %v1133 = vmul.f32 %v798, %v798
          %v1134 = vmul.f32 %v802, %v802
          %v1135 = vmul.f32 %v804, %v804
          %v1136 = vmul.f32 %v806, %v806
          %v1137 = vmul.f32 %v808, %v808
          %v1138 = vmul.f32 %v812, %v812
          %v1139 = vmul.f32 %v814, %v814
          %v1140 = vmul.f32 %v816, %v816
          %v1141 = vmul.f32 %v818, %v818
          %v1142 = vmul.f32 %v822, %v822
          %v1143 = vmul.f32 %v824, %v824
          %v1144 = vmul.f32 %v826, %v826
          %v1145 = vmul.f32 %v828, %v828
          %v1146 = vmul.f32 %v832, %v832
          %v1147 = vmul.f32 %v834, %v834
          %v1148 = vmul.f32 %v836, %v836
          %v1149 = vmul.f32 %v838, %v838
          %v1150 = vmul.f32 %v842, %v842
          %v1151 = vmul.f32 %v844, %v844
          %v1152 = vmul.f32 %v846, %v846
          %v1153 = vmul.f32 %v848, %v848
          %v1154 = vmul.f32 %v852, %v852
          %v1155 = vmul.f32 %v854, %v854
          %v1156 = vmul.f32 %v856, %v856
          %v1157 = vmul.f32 %v858, %v858
          %v1158 = vmul.f32 %v862, %v862
          %v1159 = vmul.f32 %v864, %v864
          %v1160 = vmul.f32 %v866, %v866
          %v1161 = vmul.f32 %v868, %v868
          %v1162 = vadd.f32 %v1098, %v1099
          %1163 = vadd.xlane.f32.xlu0 %v1162
          %v1164 = vpop.xlane.xlu0 %1163
          %v1165 = vadd.f32 %v1100, %v1101
          %1166 = vadd.xlane.f32.xlu0 %v1165
          %v1167 = vpop.xlane.xlu0 %1166
          %v1168 = vadd.f32 %v1102, %v1103
          %1169 = vadd.xlane.f32.xlu0 %v1168
          %v1170 = vpop.xlane.xlu0 %1169
          %v1171 = vadd.f32 %v1104, %v1105
          %1172 = vadd.xlane.f32.xlu0 %v1171
          %v1173 = vpop.xlane.xlu0 %1172
          %v1174 = vadd.f32 %v1106, %v1107
          %1175 = vadd.xlane.f32.xlu0 %v1174
          %v1176 = vpop.xlane.xlu0 %1175
          %v1177 = vadd.f32 %v1108, %v1109
          %1178 = vadd.xlane.f32.xlu0 %v1177
          %v1179 = vpop.xlane.xlu0 %1178
          %v1180 = vadd.f32 %v1110, %v1111
          %1181 = vadd.xlane.f32.xlu0 %v1180
          %v1182 = vpop.xlane.xlu0 %1181
          %v1183 = vadd.f32 %v1112, %v1113
          %1184 = vadd.xlane.f32.xlu0 %v1183
          %v1185 = vpop.xlane.xlu0 %1184
          %v1186 = vadd.f32 %v1114, %v1115
          %1187 = vadd.xlane.f32.xlu0 %v1186
          %v1188 = vpop.xlane.xlu0 %1187
          %v1189 = vadd.f32 %v1116, %v1117
          %1190 = vadd.xlane.f32.xlu0 %v1189
          %v1191 = vpop.xlane.xlu0 %1190
          %v1192 = vadd.f32 %v1118, %v1119
          %1193 = vadd.xlane.f32.xlu0 %v1192
          %v1194 = vpop.xlane.xlu0 %1193
          %v1195 = vadd.f32 %v1120, %v1121
          %1196 = vadd.xlane.f32.xlu0 %v1195
          %v1197 = vpop.xlane.xlu0 %1196
          %v1198 = vadd.f32 %v1122, %v1123
          %1199 = vadd.xlane.f32.xlu0 %v1198
          %v1200 = vpop.xlane.xlu0 %1199
          %v1201 = vadd.f32 %v1124, %v1125
          %1202 = vadd.xlane.f32.xlu0 %v1201
          %v1203 = vpop.xlane.xlu0 %1202
          %v1204 = vadd.f32 %v1126, %v1127
          %1205 = vadd.xlane.f32.xlu0 %v1204
          %v1206 = vpop.xlane.xlu0 %1205
          %v1207 = vadd.f32 %v1128, %v1129
          %1208 = vadd.xlane.f32.xlu0 %v1207
          %v1209 = vpop.xlane.xlu0 %1208
          %v1210 = vadd.f32 %v1130, %v1131
          %1211 = vadd.xlane.f32.xlu0 %v1210
          %v1212 = vpop.xlane.xlu0 %1211
          %v1213 = vadd.f32 %v1132, %v1133
          %1214 = vadd.xlane.f32.xlu0 %v1213
          %v1215 = vpop.xlane.xlu0 %1214
          %v1216 = vadd.f32 %v1134, %v1135
          %1217 = vadd.xlane.f32.xlu0 %v1216
          %v1218 = vpop.xlane.xlu0 %1217
          %v1219 = vadd.f32 %v1136, %v1137
          %1220 = vadd.xlane.f32.xlu0 %v1219
          %v1221 = vpop.xlane.xlu0 %1220
          %v1222 = vadd.f32 %v1138, %v1139
          %1223 = vadd.xlane.f32.xlu0 %v1222
          %v1224 = vpop.xlane.xlu0 %1223
          %v1225 = vadd.f32 %v1140, %v1141
          %1226 = vadd.xlane.f32.xlu0 %v1225
          %v1227 = vpop.xlane.xlu0 %1226
          %v1228 = vadd.f32 %v1142, %v1143
          %1229 = vadd.xlane.f32.xlu0 %v1228
          %v1230 = vpop.xlane.xlu0 %1229
          %v1231 = vadd.f32 %v1144, %v1145
          %1232 = vadd.xlane.f32.xlu0 %v1231
          %v1233 = vpop.xlane.xlu0 %1232
          %v1234 = vadd.f32 %v1146, %v1147
          %1235 = vadd.xlane.f32.xlu0 %v1234
          %v1236 = vpop.xlane.xlu0 %1235
          %v1237 = vadd.f32 %v1148, %v1149
          %1238 = vadd.xlane.f32.xlu0 %v1237
          %v1239 = vpop.xlane.xlu0 %1238
          %v1240 = vadd.f32 %v1150, %v1151
          %1241 = vadd.xlane.f32.xlu0 %v1240
          %v1242 = vpop.xlane.xlu0 %1241
          %v1243 = vadd.f32 %v1152, %v1153
          %1244 = vadd.xlane.f32.xlu0 %v1243
          %v1245 = vpop.xlane.xlu0 %1244
          %v1246 = vadd.f32 %v1154, %v1155
          %1247 = vadd.xlane.f32.xlu0 %v1246
          %v1248 = vpop.xlane.xlu0 %1247
          %v1249 = vadd.f32 %v1156, %v1157
          %1250 = vadd.xlane.f32.xlu0 %v1249
          %v1251 = vpop.xlane.xlu0 %1250
          %v1252 = vadd.f32 %v1158, %v1159
          %1253 = vadd.xlane.f32.xlu0 %v1252
          %v1254 = vpop.xlane.xlu0 %1253
          %v1255 = vadd.f32 %v1160, %v1161
          %1256 = vadd.xlane.f32.xlu0 %v1255
          %v1257 = vpop.xlane.xlu0 %1256
          %v1258 = vadd.f32 %v1066, %v1164
          %v1259 = vadd.f32 %v1067, %v1167
          %v1260 = vadd.f32 %v1068, %v1170
          %v1261 = vadd.f32 %v1069, %v1173
          %v1262 = vadd.f32 %v1070, %v1176
          %v1263 = vadd.f32 %v1071, %v1179
          %v1264 = vadd.f32 %v1072, %v1182
          %v1265 = vadd.f32 %v1073, %v1185
          %v1266 = vadd.f32 %v1074, %v1188
          %v1267 = vadd.f32 %v1075, %v1191
          %v1268 = vadd.f32 %v1076, %v1194
          %v1269 = vadd.f32 %v1077, %v1197
          %v1270 = vadd.f32 %v1078, %v1200
          %v1271 = vadd.f32 %v1079, %v1203
          %v1272 = vadd.f32 %v1080, %v1206
          %v1273 = vadd.f32 %v1081, %v1209
          %v1274 = vadd.f32 %v1082, %v1212
          %v1275 = vadd.f32 %v1083, %v1215
          %v1276 = vadd.f32 %v1084, %v1218
          %v1277 = vadd.f32 %v1085, %v1221
          %v1278 = vadd.f32 %v1086, %v1224
          %v1279 = vadd.f32 %v1087, %v1227
          %v1280 = vadd.f32 %v1088, %v1230
          %v1281 = vadd.f32 %v1089, %v1233
          %v1282 = vadd.f32 %v1090, %v1236
          %v1283 = vadd.f32 %v1091, %v1239
          %v1284 = vadd.f32 %v1092, %v1242
          %v1285 = vadd.f32 %v1093, %v1245
          %v1286 = vadd.f32 %v1094, %v1248
          %v1287 = vadd.f32 %v1095, %v1251
          %v1288 = vadd.f32 %v1096, %v1254
          %v1289 = vadd.f32 %v1097, %v1257
          %1290 = vst.msk [vmem:[#allocation3] sm:$0xff] %vm1033, %v1258
          %1291 = vst.msk [vmem:[#allocation3 + $0x8] sm:$0xff] %vm1033, %v1259
          %1292 = vst.msk [vmem:[#allocation3 + $0x10] sm:$0xff] %vm1033, %v1260
          %1293 = vst.msk [vmem:[#allocation3 + $0x18] sm:$0xff] %vm1033, %v1261
          %1294 = vst.msk [vmem:[#allocation3 + $0x20] sm:$0xff] %vm1033, %v1262
          %1295 = vst.msk [vmem:[#allocation3 + $0x28] sm:$0xff] %vm1033, %v1263
          %1296 = vst.msk [vmem:[#allocation3 + $0x30] sm:$0xff] %vm1033, %v1264
          %1297 = vst.msk [vmem:[#allocation3 + $0x38] sm:$0xff] %vm1033, %v1265
          %1298 = vst.msk [vmem:[#allocation3 + $0x40] sm:$0xff] %vm1033, %v1266
          %1299 = vst.msk [vmem:[#allocation3 + $0x48] sm:$0xff] %vm1033, %v1267
          %1300 = vst.msk [vmem:[#allocation3 + $0x50] sm:$0xff] %vm1033, %v1268
          %1301 = vst.msk [vmem:[#allocation3 + $0x58] sm:$0xff] %vm1033, %v1269
          %1302 = vst.msk [vmem:[#allocation3 + $0x60] sm:$0xff] %vm1033, %v1270
          %1303 = vst.msk [vmem:[#allocation3 + $0x68] sm:$0xff] %vm1033, %v1271
          %1304 = vst.msk [vmem:[#allocation3 + $0x70] sm:$0xff] %vm1033, %v1272
          %1305 = vst.msk [vmem:[#allocation3 + $0x78] sm:$0xff] %vm1033, %v1273
          %1306 = vst.msk [vmem:[#allocation3 + $0x80] sm:$0xff] %vm1033, %v1274
          %1307 = vst.msk [vmem:[#allocation3 + $0x88] sm:$0xff] %vm1033, %v1275
          %1308 = vst.msk [vmem:[#allocation3 + $0x90] sm:$0xff] %vm1033, %v1276
          %1309 = vst.msk [vmem:[#allocation3 + $0x98] sm:$0xff] %vm1033, %v1277
          %1310 = vst.msk [vmem:[#allocation3 + $0xa0] sm:$0xff] %vm1033, %v1278
          %1311 = vst.msk [vmem:[#allocation3 + $0xa8] sm:$0xff] %vm1033, %v1279
          %1312 = vst.msk [vmem:[#allocation3 + $0xb0] sm:$0xff] %vm1033, %v1280
          %1313 = vst.msk [vmem:[#allocation3 + $0xb8] sm:$0xff] %vm1033, %v1281
          %1314 = vst.msk [vmem:[#allocation3 + $0xc0] sm:$0xff] %vm1033, %v1282
          %1315 = vst.msk [vmem:[#allocation3 + $0xc8] sm:$0xff] %vm1033, %v1283
          %1316 = vst.msk [vmem:[#allocation3 + $0xd0] sm:$0xff] %vm1033, %v1284
          %1317 = vst.msk [vmem:[#allocation3 + $0xd8] sm:$0xff] %vm1033, %v1285
          %1318 = vst.msk [vmem:[#allocation3 + $0xe0] sm:$0xff] %vm1033, %v1286
          %1319 = vst.msk [vmem:[#allocation3 + $0xe8] sm:$0xff] %vm1033, %v1287
          %1320 = vst.msk [vmem:[#allocation3 + $0xf0] sm:$0xff] %vm1033, %v1288
          %1321 = vst.msk [vmem:[#allocation3 + $0xf8] sm:$0xff] %vm1033, %v1289
          %p1322 = scmp.eq.s32.totalorder %s27, 1
          %p1323 = pnand %p1322, %p312
          %p1324 = pneg %p1323
          // Predicated region
          $region61: #{tpu_custom_call.1} parent=59 // pred_check
            _
          $region62: #{tpu_custom_call.1} parent=59 // pred_check_branch
            %1326 = sbr.rel (%p1323) target = $region64
          $region63: #{tpu_custom_call.1} parent=59 // pred_region
            %v1327 = vld [vmem:[#allocation2] sm:$0xff]
            %v1328 = vld [vmem:[#allocation2 + $0x8] sm:$0xff]
            %v1329 = vld [vmem:[#allocation2 + $0x10] sm:$0xff]
            %v1330 = vld [vmem:[#allocation2 + $0x18] sm:$0xff]
            %v1331 = vld [vmem:[#allocation2 + $0x20] sm:$0xff]
            %v1332 = vld [vmem:[#allocation2 + $0x28] sm:$0xff]
            %v1333 = vld [vmem:[#allocation2 + $0x30] sm:$0xff]
            %v1334 = vld [vmem:[#allocation2 + $0x38] sm:$0xff]
            %v1335 = vld [vmem:[#allocation2 + $0x40] sm:$0xff]
            %v1336 = vld [vmem:[#allocation2 + $0x48] sm:$0xff]
            %v1337 = vld [vmem:[#allocation2 + $0x50] sm:$0xff]
            %v1338 = vld [vmem:[#allocation2 + $0x58] sm:$0xff]
            %v1339 = vld [vmem:[#allocation2 + $0x60] sm:$0xff]
            %v1340 = vld [vmem:[#allocation2 + $0x68] sm:$0xff]
            %v1341 = vld [vmem:[#allocation2 + $0x70] sm:$0xff]
            %v1342 = vld [vmem:[#allocation2 + $0x78] sm:$0xff]
            %v1343 = vld [vmem:[#allocation2 + $0x80] sm:$0xff]
            %v1344 = vld [vmem:[#allocation2 + $0x88] sm:$0xff]
            %v1345 = vld [vmem:[#allocation2 + $0x90] sm:$0xff]
            %v1346 = vld [vmem:[#allocation2 + $0x98] sm:$0xff]
            %v1347 = vld [vmem:[#allocation2 + $0xa0] sm:$0xff]
            %v1348 = vld [vmem:[#allocation2 + $0xa8] sm:$0xff]
            %v1349 = vld [vmem:[#allocation2 + $0xb0] sm:$0xff]
            %v1350 = vld [vmem:[#allocation2 + $0xb8] sm:$0xff]
            %v1351 = vld [vmem:[#allocation2 + $0xc0] sm:$0xff]
            %v1352 = vld [vmem:[#allocation2 + $0xc8] sm:$0xff]
            %v1353 = vld [vmem:[#allocation2 + $0xd0] sm:$0xff]
            %v1354 = vld [vmem:[#allocation2 + $0xd8] sm:$0xff]
            %v1355 = vld [vmem:[#allocation2 + $0xe0] sm:$0xff]
            %v1356 = vld [vmem:[#allocation2 + $0xe8] sm:$0xff]
            %v1357 = vld [vmem:[#allocation2 + $0xf0] sm:$0xff]
            %v1358 = vld [vmem:[#allocation2 + $0xf8] sm:$0xff]
            %v1359 = vmul.f32 %v1327, 0.001953125
            %v1360 = vmul.f32 %v1328, 0.001953125
            %v1361 = vmul.f32 %v1329, 0.001953125
            %v1362 = vmul.f32 %v1330, 0.001953125
            %v1363 = vmul.f32 %v1331, 0.001953125
            %v1364 = vmul.f32 %v1332, 0.001953125
            %v1365 = vmul.f32 %v1333, 0.001953125
            %v1366 = vmul.f32 %v1334, 0.001953125
            %v1367 = vmul.f32 %v1335, 0.001953125
            %v1368 = vmul.f32 %v1336, 0.001953125
            %v1369 = vmul.f32 %v1337, 0.001953125
            %v1370 = vmul.f32 %v1338, 0.001953125
            %v1371 = vmul.f32 %v1339, 0.001953125
            %v1372 = vmul.f32 %v1340, 0.001953125
            %v1373 = vmul.f32 %v1341, 0.001953125
            %v1374 = vmul.f32 %v1342, 0.001953125
            %v1375 = vmul.f32 %v1343, 0.001953125
            %v1376 = vmul.f32 %v1344, 0.001953125
            %v1377 = vmul.f32 %v1345, 0.001953125
            %v1378 = vmul.f32 %v1346, 0.001953125
            %v1379 = vmul.f32 %v1347, 0.001953125
            %v1380 = vmul.f32 %v1348, 0.001953125
            %v1381 = vmul.f32 %v1349, 0.001953125
            %v1382 = vmul.f32 %v1350, 0.001953125
            %v1383 = vmul.f32 %v1351, 0.001953125
            %v1384 = vmul.f32 %v1352, 0.001953125
            %v1385 = vmul.f32 %v1353, 0.001953125
            %v1386 = vmul.f32 %v1354, 0.001953125
            %v1387 = vmul.f32 %v1355, 0.001953125
            %v1388 = vmul.f32 %v1356, 0.001953125
            %v1389 = vmul.f32 %v1357, 0.001953125
            %v1390 = vmul.f32 %v1358, 0.001953125
            %v1391 = vld [vmem:[#allocation3] sm:$0xff]
            %v1392 = vld [vmem:[#allocation3 + $0x8] sm:$0xff]
            %v1393 = vld [vmem:[#allocation3 + $0x10] sm:$0xff]
            %v1394 = vld [vmem:[#allocation3 + $0x18] sm:$0xff]
            %v1395 = vld [vmem:[#allocation3 + $0x20] sm:$0xff]
            %v1396 = vld [vmem:[#allocation3 + $0x28] sm:$0xff]
            %v1397 = vld [vmem:[#allocation3 + $0x30] sm:$0xff]
            %v1398 = vld [vmem:[#allocation3 + $0x38] sm:$0xff]
            %v1399 = vld [vmem:[#allocation3 + $0x40] sm:$0xff]
            %v1400 = vld [vmem:[#allocation3 + $0x48] sm:$0xff]
            %v1401 = vld [vmem:[#allocation3 + $0x50] sm:$0xff]
            %v1402 = vld [vmem:[#allocation3 + $0x58] sm:$0xff]
            %v1403 = vld [vmem:[#allocation3 + $0x60] sm:$0xff]
            %v1404 = vld [vmem:[#allocation3 + $0x68] sm:$0xff]
            %v1405 = vld [vmem:[#allocation3 + $0x70] sm:$0xff]
            %v1406 = vld [vmem:[#allocation3 + $0x78] sm:$0xff]
            %v1407 = vld [vmem:[#allocation3 + $0x80] sm:$0xff]
            %v1408 = vld [vmem:[#allocation3 + $0x88] sm:$0xff]
            %v1409 = vld [vmem:[#allocation3 + $0x90] sm:$0xff]
            %v1410 = vld [vmem:[#allocation3 + $0x98] sm:$0xff]
            %v1411 = vld [vmem:[#allocation3 + $0xa0] sm:$0xff]
            %v1412 = vld [vmem:[#allocation3 + $0xa8] sm:$0xff]
            %v1413 = vld [vmem:[#allocation3 + $0xb0] sm:$0xff]
            %v1414 = vld [vmem:[#allocation3 + $0xb8] sm:$0xff]
            %v1415 = vld [vmem:[#allocation3 + $0xc0] sm:$0xff]
            %v1416 = vld [vmem:[#allocation3 + $0xc8] sm:$0xff]
            %v1417 = vld [vmem:[#allocation3 + $0xd0] sm:$0xff]
            %v1418 = vld [vmem:[#allocation3 + $0xd8] sm:$0xff]
            %v1419 = vld [vmem:[#allocation3 + $0xe0] sm:$0xff]
            %v1420 = vld [vmem:[#allocation3 + $0xe8] sm:$0xff]
            %v1421 = vld [vmem:[#allocation3 + $0xf0] sm:$0xff]
            %v1422 = vld [vmem:[#allocation3 + $0xf8] sm:$0xff]
            %v1423 = vmul.f32 %v1391, 0.001953125
            %v1424 = vmul.f32 %v1392, 0.001953125
            %v1425 = vmul.f32 %v1393, 0.001953125
            %v1426 = vmul.f32 %v1394, 0.001953125
            %v1427 = vmul.f32 %v1395, 0.001953125
            %v1428 = vmul.f32 %v1396, 0.001953125
            %v1429 = vmul.f32 %v1397, 0.001953125
            %v1430 = vmul.f32 %v1398, 0.001953125
            %v1431 = vmul.f32 %v1399, 0.001953125
            %v1432 = vmul.f32 %v1400, 0.001953125
            %v1433 = vmul.f32 %v1401, 0.001953125
            %v1434 = vmul.f32 %v1402, 0.001953125
            %v1435 = vmul.f32 %v1403, 0.001953125
            %v1436 = vmul.f32 %v1404, 0.001953125
            %v1437 = vmul.f32 %v1405, 0.001953125
            %v1438 = vmul.f32 %v1406, 0.001953125
            %v1439 = vmul.f32 %v1407, 0.001953125
            %v1440 = vmul.f32 %v1408, 0.001953125
            %v1441 = vmul.f32 %v1409, 0.001953125
            %v1442 = vmul.f32 %v1410, 0.001953125
            %v1443 = vmul.f32 %v1411, 0.001953125
            %v1444 = vmul.f32 %v1412, 0.001953125
            %v1445 = vmul.f32 %v1413, 0.001953125
            %v1446 = vmul.f32 %v1414, 0.001953125
            %v1447 = vmul.f32 %v1415, 0.001953125
            %v1448 = vmul.f32 %v1416, 0.001953125
            %v1449 = vmul.f32 %v1417, 0.001953125
            %v1450 = vmul.f32 %v1418, 0.001953125
            %v1451 = vmul.f32 %v1419, 0.001953125
            %v1452 = vmul.f32 %v1420, 0.001953125
            %v1453 = vmul.f32 %v1421, 0.001953125
            %v1454 = vmul.f32 %v1422, 0.001953125
            %v1455 = vmul.f32 %v1359, %v1359
            %v1456 = vmul.f32 %v1360, %v1360
            %v1457 = vmul.f32 %v1361, %v1361
            %v1458 = vmul.f32 %v1362, %v1362
            %v1459 = vmul.f32 %v1363, %v1363
            %v1460 = vmul.f32 %v1364, %v1364
            %v1461 = vmul.f32 %v1365, %v1365
            %v1462 = vmul.f32 %v1366, %v1366
            %v1463 = vmul.f32 %v1367, %v1367
            %v1464 = vmul.f32 %v1368, %v1368
            %v1465 = vmul.f32 %v1369, %v1369
            %v1466 = vmul.f32 %v1370, %v1370
            %v1467 = vmul.f32 %v1371, %v1371
            %v1468 = vmul.f32 %v1372, %v1372
            %v1469 = vmul.f32 %v1373, %v1373
            %v1470 = vmul.f32 %v1374, %v1374
            %v1471 = vmul.f32 %v1375, %v1375
            %v1472 = vmul.f32 %v1376, %v1376
            %v1473 = vmul.f32 %v1377, %v1377
            %v1474 = vmul.f32 %v1378, %v1378
            %v1475 = vmul.f32 %v1379, %v1379
            %v1476 = vmul.f32 %v1380, %v1380
            %v1477 = vmul.f32 %v1381, %v1381
            %v1478 = vmul.f32 %v1382, %v1382
            %v1479 = vmul.f32 %v1383, %v1383
            %v1480 = vmul.f32 %v1384, %v1384
            %v1481 = vmul.f32 %v1385, %v1385
            %v1482 = vmul.f32 %v1386, %v1386
            %v1483 = vmul.f32 %v1387, %v1387
            %v1484 = vmul.f32 %v1388, %v1388
            %v1485 = vmul.f32 %v1389, %v1389
            %v1486 = vmul.f32 %v1390, %v1390
            %v1487 = vsub.f32 %v1423, %v1455
            %v1488 = vsub.f32 %v1424, %v1456
            %v1489 = vsub.f32 %v1425, %v1457
            %v1490 = vsub.f32 %v1426, %v1458
            %v1491 = vsub.f32 %v1427, %v1459
            %v1492 = vsub.f32 %v1428, %v1460
            %v1493 = vsub.f32 %v1429, %v1461
            %v1494 = vsub.f32 %v1430, %v1462
            %v1495 = vsub.f32 %v1431, %v1463
            %v1496 = vsub.f32 %v1432, %v1464
            %v1497 = vsub.f32 %v1433, %v1465
            %v1498 = vsub.f32 %v1434, %v1466
            %v1499 = vsub.f32 %v1435, %v1467
            %v1500 = vsub.f32 %v1436, %v1468
            %v1501 = vsub.f32 %v1437, %v1469
            %v1502 = vsub.f32 %v1438, %v1470
            %v1503 = vsub.f32 %v1439, %v1471
            %v1504 = vsub.f32 %v1440, %v1472
            %v1505 = vsub.f32 %v1441, %v1473
            %v1506 = vsub.f32 %v1442, %v1474
            %v1507 = vsub.f32 %v1443, %v1475
            %v1508 = vsub.f32 %v1444, %v1476
            %v1509 = vsub.f32 %v1445, %v1477
            %v1510 = vsub.f32 %v1446, %v1478
            %v1511 = vsub.f32 %v1447, %v1479
            %v1512 = vsub.f32 %v1448, %v1480
            %v1513 = vsub.f32 %v1449, %v1481
            %v1514 = vsub.f32 %v1450, %v1482
            %v1515 = vsub.f32 %v1451, %v1483
            %v1516 = vsub.f32 %v1452, %v1484
            %v1517 = vsub.f32 %v1453, %v1485
            %v1518 = vsub.f32 %v1454, %v1486
            %v1519 = vmax.f32 %v1487, 0.0
            %v1520 = vmax.f32 %v1488, 0.0
            %v1521 = vmax.f32 %v1489, 0.0
            %v1522 = vmax.f32 %v1490, 0.0
            %v1523 = vmax.f32 %v1491, 0.0
            %v1524 = vmax.f32 %v1492, 0.0
            %v1525 = vmax.f32 %v1493, 0.0
            %v1526 = vmax.f32 %v1494, 0.0
            %v1527 = vmax.f32 %v1495, 0.0
            %v1528 = vmax.f32 %v1496, 0.0
            %v1529 = vmax.f32 %v1497, 0.0
            %v1530 = vmax.f32 %v1498, 0.0
            %v1531 = vmax.f32 %v1499, 0.0
            %v1532 = vmax.f32 %v1500, 0.0
            %v1533 = vmax.f32 %v1501, 0.0
            %v1534 = vmax.f32 %v1502, 0.0
            %v1535 = vmax.f32 %v1503, 0.0
            %v1536 = vmax.f32 %v1504, 0.0
            %v1537 = vmax.f32 %v1505, 0.0
            %v1538 = vmax.f32 %v1506, 0.0
            %v1539 = vmax.f32 %v1507, 0.0
            %v1540 = vmax.f32 %v1508, 0.0
            %v1541 = vmax.f32 %v1509, 0.0
            %v1542 = vmax.f32 %v1510, 0.0
            %v1543 = vmax.f32 %v1511, 0.0
            %v1544 = vmax.f32 %v1512, 0.0
            %v1545 = vmax.f32 %v1513, 0.0
            %v1546 = vmax.f32 %v1514, 0.0
            %v1547 = vmax.f32 %v1515, 0.0
            %v1548 = vmax.f32 %v1516, 0.0
            %v1549 = vmax.f32 %v1517, 0.0
            %v1550 = vmax.f32 %v1518, 0.0
            %v1551 = vld [vmem:[%s2] sm:$0xff]
            %v1552 = vld [vmem:[%s2 + $0x8] sm:$0xff]
            %v1553 = vld [vmem:[%s2 + $0x10] sm:$0xff]
            %v1554 = vld [vmem:[%s2 + $0x18] sm:$0xff]
            %v1555 = vld [vmem:[%s2 + $0x20] sm:$0xff]
            %v1556 = vld [vmem:[%s2 + $0x28] sm:$0xff]
            %v1557 = vld [vmem:[%s2 + $0x30] sm:$0xff]
            %v1558 = vld [vmem:[%s2 + $0x38] sm:$0xff]
            %v1559 = vld [vmem:[%s2 + $0x40] sm:$0xff]
            %v1560 = vld [vmem:[%s2 + $0x48] sm:$0xff]
            %v1561 = vld [vmem:[%s2 + $0x50] sm:$0xff]
            %v1562 = vld [vmem:[%s2 + $0x58] sm:$0xff]
            %v1563 = vld [vmem:[%s2 + $0x60] sm:$0xff]
            %v1564 = vld [vmem:[%s2 + $0x68] sm:$0xff]
            %v1565 = vld [vmem:[%s2 + $0x70] sm:$0xff]
            %v1566 = vld [vmem:[%s2 + $0x78] sm:$0xff]
            %v1567 = vld [vmem:[%s2 + $0x80] sm:$0xff]
            %v1568 = vld [vmem:[%s2 + $0x88] sm:$0xff]
            %v1569 = vld [vmem:[%s2 + $0x90] sm:$0xff]
            %v1570 = vld [vmem:[%s2 + $0x98] sm:$0xff]
            %v1571 = vld [vmem:[%s2 + $0xa0] sm:$0xff]
            %v1572 = vld [vmem:[%s2 + $0xa8] sm:$0xff]
            %v1573 = vld [vmem:[%s2 + $0xb0] sm:$0xff]
            %v1574 = vld [vmem:[%s2 + $0xb8] sm:$0xff]
            %v1575 = vld [vmem:[%s2 + $0xc0] sm:$0xff]
            %v1576 = vld [vmem:[%s2 + $0xc8] sm:$0xff]
            %v1577 = vld [vmem:[%s2 + $0xd0] sm:$0xff]
            %v1578 = vld [vmem:[%s2 + $0xd8] sm:$0xff]
            %v1579 = vld [vmem:[%s2 + $0xe0] sm:$0xff]
            %v1580 = vld [vmem:[%s2 + $0xe8] sm:$0xff]
            %v1581 = vld [vmem:[%s2 + $0xf0] sm:$0xff]
            %v1582 = vld [vmem:[%s2 + $0xf8] sm:$0xff]
            %v1583 = vadd.f32 %v1519, 1e-05
            %v1584 = vadd.f32 %v1520, 1e-05
            %v1585 = vadd.f32 %v1521, 1e-05
            %v1586 = vadd.f32 %v1522, 1e-05
            %v1587 = vadd.f32 %v1523, 1e-05
            %v1588 = vadd.f32 %v1524, 1e-05
            %v1589 = vadd.f32 %v1525, 1e-05
            %v1590 = vadd.f32 %v1526, 1e-05
            %v1591 = vadd.f32 %v1527, 1e-05
            %v1592 = vadd.f32 %v1528, 1e-05
            %v1593 = vadd.f32 %v1529, 1e-05
            %v1594 = vadd.f32 %v1530, 1e-05
            %v1595 = vadd.f32 %v1531, 1e-05
            %v1596 = vadd.f32 %v1532, 1e-05
            %v1597 = vadd.f32 %v1533, 1e-05
            %v1598 = vadd.f32 %v1534, 1e-05
            %v1599 = vadd.f32 %v1535, 1e-05
            %v1600 = vadd.f32 %v1536, 1e-05
            %v1601 = vadd.f32 %v1537, 1e-05
            %v1602 = vadd.f32 %v1538, 1e-05
            %v1603 = vadd.f32 %v1539, 1e-05
            %v1604 = vadd.f32 %v1540, 1e-05
            %v1605 = vadd.f32 %v1541, 1e-05
            %v1606 = vadd.f32 %v1542, 1e-05
            %v1607 = vadd.f32 %v1543, 1e-05
            %v1608 = vadd.f32 %v1544, 1e-05
            %v1609 = vadd.f32 %v1545, 1e-05
            %v1610 = vadd.f32 %v1546, 1e-05
            %v1611 = vadd.f32 %v1547, 1e-05
            %v1612 = vadd.f32 %v1548, 1e-05
            %v1613 = vadd.f32 %v1549, 1e-05
            %v1614 = vadd.f32 %v1550, 1e-05
            %v1615 = vrsqrt.pop %v1583
            %v1616 = vrsqrt.pop %v1584
            %v1617 = vrsqrt.pop %v1585
            %v1618 = vrsqrt.pop %v1586
            %v1619 = vrsqrt.pop %v1587
            %v1620 = vrsqrt.pop %v1588
            %v1621 = vrsqrt.pop %v1589
            %v1622 = vrsqrt.pop %v1590
            %v1623 = vrsqrt.pop %v1591
            %v1624 = vrsqrt.pop %v1592
            %v1625 = vrsqrt.pop %v1593
            %v1626 = vrsqrt.pop %v1594
            %v1627 = vrsqrt.pop %v1595
            %v1628 = vrsqrt.pop %v1596
            %v1629 = vrsqrt.pop %v1597
            %v1630 = vrsqrt.pop %v1598
            %v1631 = vrsqrt.pop %v1599
            %v1632 = vrsqrt.pop %v1600
            %v1633 = vrsqrt.pop %v1601
            %v1634 = vrsqrt.pop %v1602
            %v1635 = vrsqrt.pop %v1603
            %v1636 = vrsqrt.pop %v1604
            %v1637 = vrsqrt.pop %v1605
            %v1638 = vrsqrt.pop %v1606
            %v1639 = vrsqrt.pop %v1607
            %v1640 = vrsqrt.pop %v1608
            %v1641 = vrsqrt.pop %v1609
            %v1642 = vrsqrt.pop %v1610
            %v1643 = vrsqrt.pop %v1611
            %v1644 = vrsqrt.pop %v1612
            %v1645 = vrsqrt.pop %v1613
            %v1646 = vrsqrt.pop %v1614
            %v1647 = vmul.f32 %v1551, %v1615
            %v1648 = vmul.f32 %v1552, %v1616
            %v1649 = vmul.f32 %v1553, %v1617
            %v1650 = vmul.f32 %v1554, %v1618
            %v1651 = vmul.f32 %v1555, %v1619
            %v1652 = vmul.f32 %v1556, %v1620
            %v1653 = vmul.f32 %v1557, %v1621
            %v1654 = vmul.f32 %v1558, %v1622
            %v1655 = vmul.f32 %v1559, %v1623
            %v1656 = vmul.f32 %v1560, %v1624
            %v1657 = vmul.f32 %v1561, %v1625
            %v1658 = vmul.f32 %v1562, %v1626
            %v1659 = vmul.f32 %v1563, %v1627
            %v1660 = vmul.f32 %v1564, %v1628
            %v1661 = vmul.f32 %v1565, %v1629
            %v1662 = vmul.f32 %v1566, %v1630
            %v1663 = vmul.f32 %v1567, %v1631
            %v1664 = vmul.f32 %v1568, %v1632
            %v1665 = vmul.f32 %v1569, %v1633
            %v1666 = vmul.f32 %v1570, %v1634
            %v1667 = vmul.f32 %v1571, %v1635
            %v1668 = vmul.f32 %v1572, %v1636
            %v1669 = vmul.f32 %v1573, %v1637
            %v1670 = vmul.f32 %v1574, %v1638
            %v1671 = vmul.f32 %v1575, %v1639
            %v1672 = vmul.f32 %v1576, %v1640
            %v1673 = vmul.f32 %v1577, %v1641
            %v1674 = vmul.f32 %v1578, %v1642
            %v1675 = vmul.f32 %v1579, %v1643
            %v1676 = vmul.f32 %v1580, %v1644
            %v1677 = vmul.f32 %v1581, %v1645
            %v1678 = vmul.f32 %v1582, %v1646
            %1679 = vst.msk [vmem:[#allocation4] sm:$0xff] %vm1033, %v1647
            %1680 = vst.msk [vmem:[#allocation4 + $0x8] sm:$0xff] %vm1033, %v1648
            %1681 = vst.msk [vmem:[#allocation4 + $0x10] sm:$0xff] %vm1033, %v1649
            %1682 = vst.msk [vmem:[#allocation4 + $0x18] sm:$0xff] %vm1033, %v1650
            %1683 = vst.msk [vmem:[#allocation4 + $0x20] sm:$0xff] %vm1033, %v1651
            %1684 = vst.msk [vmem:[#allocation4 + $0x28] sm:$0xff] %vm1033, %v1652
            %1685 = vst.msk [vmem:[#allocation4 + $0x30] sm:$0xff] %vm1033, %v1653
            %1686 = vst.msk [vmem:[#allocation4 + $0x38] sm:$0xff] %vm1033, %v1654
            %1687 = vst.msk [vmem:[#allocation4 + $0x40] sm:$0xff] %vm1033, %v1655
            %1688 = vst.msk [vmem:[#allocation4 + $0x48] sm:$0xff] %vm1033, %v1656
            %1689 = vst.msk [vmem:[#allocation4 + $0x50] sm:$0xff] %vm1033, %v1657
            %1690 = vst.msk [vmem:[#allocation4 + $0x58] sm:$0xff] %vm1033, %v1658
            %1691 = vst.msk [vmem:[#allocation4 + $0x60] sm:$0xff] %vm1033, %v1659
            %1692 = vst.msk [vmem:[#allocation4 + $0x68] sm:$0xff] %vm1033, %v1660
            %1693 = vst.msk [vmem:[#allocation4 + $0x70] sm:$0xff] %vm1033, %v1661
            %1694 = vst.msk [vmem:[#allocation4 + $0x78] sm:$0xff] %vm1033, %v1662
            %1695 = vst.msk [vmem:[#allocation4 + $0x80] sm:$0xff] %vm1033, %v1663
            %1696 = vst.msk [vmem:[#allocation4 + $0x88] sm:$0xff] %vm1033, %v1664
            %1697 = vst.msk [vmem:[#allocation4 + $0x90] sm:$0xff] %vm1033, %v1665
            %1698 = vst.msk [vmem:[#allocation4 + $0x98] sm:$0xff] %vm1033, %v1666
            %1699 = vst.msk [vmem:[#allocation4 + $0xa0] sm:$0xff] %vm1033, %v1667
            %1700 = vst.msk [vmem:[#allocation4 + $0xa8] sm:$0xff] %vm1033, %v1668
            %1701 = vst.msk [vmem:[#allocation4 + $0xb0] sm:$0xff] %vm1033, %v1669
            %1702 = vst.msk [vmem:[#allocation4 + $0xb8] sm:$0xff] %vm1033, %v1670
            %1703 = vst.msk [vmem:[#allocation4 + $0xc0] sm:$0xff] %vm1033, %v1671
            %1704 = vst.msk [vmem:[#allocation4 + $0xc8] sm:$0xff] %vm1033, %v1672
            %1705 = vst.msk [vmem:[#allocation4 + $0xd0] sm:$0xff] %vm1033, %v1673
            %1706 = vst.msk [vmem:[#allocation4 + $0xd8] sm:$0xff] %vm1033, %v1674
            %1707 = vst.msk [vmem:[#allocation4 + $0xe0] sm:$0xff] %vm1033, %v1675
            %1708 = vst.msk [vmem:[#allocation4 + $0xe8] sm:$0xff] %vm1033, %v1676
            %1709 = vst.msk [vmem:[#allocation4 + $0xf0] sm:$0xff] %vm1033, %v1677
            %1710 = vst.msk [vmem:[#allocation4 + $0xf8] sm:$0xff] %vm1033, %v1678
            %v1711 = vld [vmem:[%s3] sm:$0xff]
            %v1712 = vld [vmem:[%s3 + $0x8] sm:$0xff]
            %v1713 = vld [vmem:[%s3 + $0x10] sm:$0xff]
            %v1714 = vld [vmem:[%s3 + $0x18] sm:$0xff]
            %v1715 = vld [vmem:[%s3 + $0x20] sm:$0xff]
            %v1716 = vld [vmem:[%s3 + $0x28] sm:$0xff]
            %v1717 = vld [vmem:[%s3 + $0x30] sm:$0xff]
            %v1718 = vld [vmem:[%s3 + $0x38] sm:$0xff]
            %v1719 = vld [vmem:[%s3 + $0x40] sm:$0xff]
            %v1720 = vld [vmem:[%s3 + $0x48] sm:$0xff]
            %v1721 = vld [vmem:[%s3 + $0x50] sm:$0xff]
            %v1722 = vld [vmem:[%s3 + $0x58] sm:$0xff]
            %v1723 = vld [vmem:[%s3 + $0x60] sm:$0xff]
            %v1724 = vld [vmem:[%s3 + $0x68] sm:$0xff]
            %v1725 = vld [vmem:[%s3 + $0x70] sm:$0xff]
            %v1726 = vld [vmem:[%s3 + $0x78] sm:$0xff]
            %v1727 = vld [vmem:[%s3 + $0x80] sm:$0xff]
            %v1728 = vld [vmem:[%s3 + $0x88] sm:$0xff]
            %v1729 = vld [vmem:[%s3 + $0x90] sm:$0xff]
            %v1730 = vld [vmem:[%s3 + $0x98] sm:$0xff]
            %v1731 = vld [vmem:[%s3 + $0xa0] sm:$0xff]
            %v1732 = vld [vmem:[%s3 + $0xa8] sm:$0xff]
            %v1733 = vld [vmem:[%s3 + $0xb0] sm:$0xff]
            %v1734 = vld [vmem:[%s3 + $0xb8] sm:$0xff]
            %v1735 = vld [vmem:[%s3 + $0xc0] sm:$0xff]
            %v1736 = vld [vmem:[%s3 + $0xc8] sm:$0xff]
            %v1737 = vld [vmem:[%s3 + $0xd0] sm:$0xff]
            %v1738 = vld [vmem:[%s3 + $0xd8] sm:$0xff]
            %v1739 = vld [vmem:[%s3 + $0xe0] sm:$0xff]
            %v1740 = vld [vmem:[%s3 + $0xe8] sm:$0xff]
            %v1741 = vld [vmem:[%s3 + $0xf0] sm:$0xff]
            %v1742 = vld [vmem:[%s3 + $0xf8] sm:$0xff]
            %v1743 = vmul.f32 %v1359, %v1647
            %v1744 = vmul.f32 %v1360, %v1648
            %v1745 = vmul.f32 %v1361, %v1649
            %v1746 = vmul.f32 %v1362, %v1650
            %v1747 = vmul.f32 %v1363, %v1651
            %v1748 = vmul.f32 %v1364, %v1652
            %v1749 = vmul.f32 %v1365, %v1653
            %v1750 = vmul.f32 %v1366, %v1654
            %v1751 = vmul.f32 %v1367, %v1655
            %v1752 = vmul.f32 %v1368, %v1656
            %v1753 = vmul.f32 %v1369, %v1657
            %v1754 = vmul.f32 %v1370, %v1658
            %v1755 = vmul.f32 %v1371, %v1659
            %v1756 = vmul.f32 %v1372, %v1660
            %v1757 = vmul.f32 %v1373, %v1661
            %v1758 = vmul.f32 %v1374, %v1662
            %v1759 = vmul.f32 %v1375, %v1663
            %v1760 = vmul.f32 %v1376, %v1664
            %v1761 = vmul.f32 %v1377, %v1665
            %v1762 = vmul.f32 %v1378, %v1666
            %v1763 = vmul.f32 %v1379, %v1667
            %v1764 = vmul.f32 %v1380, %v1668
            %v1765 = vmul.f32 %v1381, %v1669
            %v1766 = vmul.f32 %v1382, %v1670
            %v1767 = vmul.f32 %v1383, %v1671
            %v1768 = vmul.f32 %v1384, %v1672
            %v1769 = vmul.f32 %v1385, %v1673
            %v1770 = vmul.f32 %v1386, %v1674
            %v1771 = vmul.f32 %v1387, %v1675
            %v1772 = vmul.f32 %v1388, %v1676
            %v1773 = vmul.f32 %v1389, %v1677
            %v1774 = vmul.f32 %v1390, %v1678
            %v1775 = vsub.f32 %v1711, %v1743
            %v1776 = vsub.f32 %v1712, %v1744
            %v1777 = vsub.f32 %v1713, %v1745
            %v1778 = vsub.f32 %v1714, %v1746
            %v1779 = vsub.f32 %v1715, %v1747
            %v1780 = vsub.f32 %v1716, %v1748
            %v1781 = vsub.f32 %v1717, %v1749
            %v1782 = vsub.f32 %v1718, %v1750
            %v1783 = vsub.f32 %v1719, %v1751
            %v1784 = vsub.f32 %v1720, %v1752
            %v1785 = vsub.f32 %v1721, %v1753
            %v1786 = vsub.f32 %v1722, %v1754
            %v1787 = vsub.f32 %v1723, %v1755
            %v1788 = vsub.f32 %v1724, %v1756
            %v1789 = vsub.f32 %v1725, %v1757
            %v1790 = vsub.f32 %v1726, %v1758
            %v1791 = vsub.f32 %v1727, %v1759
            %v1792 = vsub.f32 %v1728, %v1760
            %v1793 = vsub.f32 %v1729, %v1761
            %v1794 = vsub.f32 %v1730, %v1762
            %v1795 = vsub.f32 %v1731, %v1763
            %v1796 = vsub.f32 %v1732, %v1764
            %v1797 = vsub.f32 %v1733, %v1765
            %v1798 = vsub.f32 %v1734, %v1766
            %v1799 = vsub.f32 %v1735, %v1767
            %v1800 = vsub.f32 %v1736, %v1768
            %v1801 = vsub.f32 %v1737, %v1769
            %v1802 = vsub.f32 %v1738, %v1770
            %v1803 = vsub.f32 %v1739, %v1771
            %v1804 = vsub.f32 %v1740, %v1772
            %v1805 = vsub.f32 %v1741, %v1773
            %v1806 = vsub.f32 %v1742, %v1774
            %1807 = vst.msk [vmem:[#allocation5] sm:$0xff] %vm1033, %v1775
            %1808 = vst.msk [vmem:[#allocation5 + $0x8] sm:$0xff] %vm1033, %v1776
            %1809 = vst.msk [vmem:[#allocation5 + $0x10] sm:$0xff] %vm1033, %v1777
            %1810 = vst.msk [vmem:[#allocation5 + $0x18] sm:$0xff] %vm1033, %v1778
            %1811 = vst.msk [vmem:[#allocation5 + $0x20] sm:$0xff] %vm1033, %v1779
            %1812 = vst.msk [vmem:[#allocation5 + $0x28] sm:$0xff] %vm1033, %v1780
            %1813 = vst.msk [vmem:[#allocation5 + $0x30] sm:$0xff] %vm1033, %v1781
            %1814 = vst.msk [vmem:[#allocation5 + $0x38] sm:$0xff] %vm1033, %v1782
            %1815 = vst.msk [vmem:[#allocation5 + $0x40] sm:$0xff] %vm1033, %v1783
            %1816 = vst.msk [vmem:[#allocation5 + $0x48] sm:$0xff] %vm1033, %v1784
            %1817 = vst.msk [vmem:[#allocation5 + $0x50] sm:$0xff] %vm1033, %v1785
            %1818 = vst.msk [vmem:[#allocation5 + $0x58] sm:$0xff] %vm1033, %v1786
            %1819 = vst.msk [vmem:[#allocation5 + $0x60] sm:$0xff] %vm1033, %v1787
            %1820 = vst.msk [vmem:[#allocation5 + $0x68] sm:$0xff] %vm1033, %v1788
            %1821 = vst.msk [vmem:[#allocation5 + $0x70] sm:$0xff] %vm1033, %v1789
            %1822 = vst.msk [vmem:[#allocation5 + $0x78] sm:$0xff] %vm1033, %v1790
            %1823 = vst.msk [vmem:[#allocation5 + $0x80] sm:$0xff] %vm1033, %v1791
            %1824 = vst.msk [vmem:[#allocation5 + $0x88] sm:$0xff] %vm1033, %v1792
            %1825 = vst.msk [vmem:[#allocation5 + $0x90] sm:$0xff] %vm1033, %v1793
            %1826 = vst.msk [vmem:[#allocation5 + $0x98] sm:$0xff] %vm1033, %v1794
            %1827 = vst.msk [vmem:[#allocation5 + $0xa0] sm:$0xff] %vm1033, %v1795
            %1828 = vst.msk [vmem:[#allocation5 + $0xa8] sm:$0xff] %vm1033, %v1796
            %1829 = vst.msk [vmem:[#allocation5 + $0xb0] sm:$0xff] %vm1033, %v1797
            %1830 = vst.msk [vmem:[#allocation5 + $0xb8] sm:$0xff] %vm1033, %v1798
            %1831 = vst.msk [vmem:[#allocation5 + $0xc0] sm:$0xff] %vm1033, %v1799
            %1832 = vst.msk [vmem:[#allocation5 + $0xc8] sm:$0xff] %vm1033, %v1800
            %1833 = vst.msk [vmem:[#allocation5 + $0xd0] sm:$0xff] %vm1033, %v1801
            %1834 = vst.msk [vmem:[#allocation5 + $0xd8] sm:$0xff] %vm1033, %v1802
            %1835 = vst.msk [vmem:[#allocation5 + $0xe0] sm:$0xff] %vm1033, %v1803
            %1836 = vst.msk [vmem:[#allocation5 + $0xe8] sm:$0xff] %vm1033, %v1804
            %1837 = vst.msk [vmem:[#allocation5 + $0xf0] sm:$0xff] %vm1033, %v1805
            %1838 = vst.msk [vmem:[#allocation5 + $0xf8] sm:$0xff] %vm1033, %v1806
          $region64: #{tpu_custom_call.1} parent=59 // pred_fallthru
            _
        $region60: #{tpu_custom_call.1} parent=47 // pred_fallthru
          _
        %p1839 = scmp.gt.s32.totalorder %s26, 0
        // Predicated region
        $region65: #{tpu_custom_call.1} parent=47 // pred_check
          %p1840 = pneg %p1839
        $region66: #{tpu_custom_call.1} parent=47 // pred_check_branch
          %1842 = sbr.rel (%p1840) target = $region68
        $region67: #{tpu_custom_call.1} parent=47 // pred_region
          %v1843 = vld [vmem:[#allocation4] sm:$0xff]
          %v1844 = vld [vmem:[#allocation4 + $0x8] sm:$0xff]
          %v1845 = vld [vmem:[#allocation4 + $0x10] sm:$0xff]
          %v1846 = vld [vmem:[#allocation4 + $0x18] sm:$0xff]
          %v1847 = vld [vmem:[#allocation4 + $0x20] sm:$0xff]
          %v1848 = vld [vmem:[#allocation4 + $0x28] sm:$0xff]
          %v1849 = vld [vmem:[#allocation4 + $0x30] sm:$0xff]
          %v1850 = vld [vmem:[#allocation4 + $0x38] sm:$0xff]
          %v1851 = vld [vmem:[#allocation4 + $0x40] sm:$0xff]
          %v1852 = vld [vmem:[#allocation4 + $0x48] sm:$0xff]
          %v1853 = vld [vmem:[#allocation4 + $0x50] sm:$0xff]
          %v1854 = vld [vmem:[#allocation4 + $0x58] sm:$0xff]
          %v1855 = vld [vmem:[#allocation4 + $0x60] sm:$0xff]
          %v1856 = vld [vmem:[#allocation4 + $0x68] sm:$0xff]
          %v1857 = vld [vmem:[#allocation4 + $0x70] sm:$0xff]
          %v1858 = vld [vmem:[#allocation4 + $0x78] sm:$0xff]
          %v1859 = vld [vmem:[#allocation4 + $0x80] sm:$0xff]
          %v1860 = vld [vmem:[#allocation4 + $0x88] sm:$0xff]
          %v1861 = vld [vmem:[#allocation4 + $0x90] sm:$0xff]
          %v1862 = vld [vmem:[#allocation4 + $0x98] sm:$0xff]
          %v1863 = vld [vmem:[#allocation4 + $0xa0] sm:$0xff]
          %v1864 = vld [vmem:[#allocation4 + $0xa8] sm:$0xff]
          %v1865 = vld [vmem:[#allocation4 + $0xb0] sm:$0xff]
          %v1866 = vld [vmem:[#allocation4 + $0xb8] sm:$0xff]
          %v1867 = vld [vmem:[#allocation4 + $0xc0] sm:$0xff]
          %v1868 = vld [vmem:[#allocation4 + $0xc8] sm:$0xff]
          %v1869 = vld [vmem:[#allocation4 + $0xd0] sm:$0xff]
          %v1870 = vld [vmem:[#allocation4 + $0xd8] sm:$0xff]
          %v1871 = vld [vmem:[#allocation4 + $0xe0] sm:$0xff]
          %v1872 = vld [vmem:[#allocation4 + $0xe8] sm:$0xff]
          %v1873 = vld [vmem:[#allocation4 + $0xf0] sm:$0xff]
          %v1874 = vld [vmem:[#allocation4 + $0xf8] sm:$0xff]
          %1876 = vset.pattern.permute.xlu0 0
          %1877 = vperm.xlu0 %1876, %v1843
          %v1878 = vpop.permute.xlu0 %1877
          %1881 = vset.pattern.permute.xlu0 0
          %1882 = vperm.xlu0 %1881, %v1844
          %v1883 = vpop.permute.xlu0 %1882
          %1886 = vset.pattern.permute.xlu0 0
          %1887 = vperm.xlu0 %1886, %v1845
          %v1888 = vpop.permute.xlu0 %1887
          %1891 = vset.pattern.permute.xlu0 0
          %1892 = vperm.xlu0 %1891, %v1846
          %v1893 = vpop.permute.xlu0 %1892
          %1896 = vset.pattern.permute.xlu0 0
          %1897 = vperm.xlu0 %1896, %v1847
          %v1898 = vpop.permute.xlu0 %1897
          %1901 = vset.pattern.permute.xlu0 0
          %1902 = vperm.xlu0 %1901, %v1848
          %v1903 = vpop.permute.xlu0 %1902
          %1906 = vset.pattern.permute.xlu0 0
          %1907 = vperm.xlu0 %1906, %v1849
          %v1908 = vpop.permute.xlu0 %1907
          %1911 = vset.pattern.permute.xlu0 0
          %1912 = vperm.xlu0 %1911, %v1850
          %v1913 = vpop.permute.xlu0 %1912
          %1916 = vset.pattern.permute.xlu0 0
          %1917 = vperm.xlu0 %1916, %v1851
          %v1918 = vpop.permute.xlu0 %1917
          %1921 = vset.pattern.permute.xlu0 0
          %1922 = vperm.xlu0 %1921, %v1852
          %v1923 = vpop.permute.xlu0 %1922
          %1926 = vset.pattern.permute.xlu0 0
          %1927 = vperm.xlu0 %1926, %v1853
          %v1928 = vpop.permute.xlu0 %1927
          %1931 = vset.pattern.permute.xlu0 0
          %1932 = vperm.xlu0 %1931, %v1854
          %v1933 = vpop.permute.xlu0 %1932
          %1936 = vset.pattern.permute.xlu0 0
          %1937 = vperm.xlu0 %1936, %v1855
          %v1938 = vpop.permute.xlu0 %1937
          %1941 = vset.pattern.permute.xlu0 0
          %1942 = vperm.xlu0 %1941, %v1856
          %v1943 = vpop.permute.xlu0 %1942
          %1946 = vset.pattern.permute.xlu0 0
          %1947 = vperm.xlu0 %1946, %v1857
          %v1948 = vpop.permute.xlu0 %1947
          %1951 = vset.pattern.permute.xlu0 0
          %1952 = vperm.xlu0 %1951, %v1858
          %v1953 = vpop.permute.xlu0 %1952
          %1956 = vset.pattern.permute.xlu0 0
          %1957 = vperm.xlu0 %1956, %v1859
          %v1958 = vpop.permute.xlu0 %1957
          %1961 = vset.pattern.permute.xlu0 0
          %1962 = vperm.xlu0 %1961, %v1860
          %v1963 = vpop.permute.xlu0 %1962
          %1966 = vset.pattern.permute.xlu0 0
          %1967 = vperm.xlu0 %1966, %v1861
          %v1968 = vpop.permute.xlu0 %1967
          %1971 = vset.pattern.permute.xlu0 0
          %1972 = vperm.xlu0 %1971, %v1862
          %v1973 = vpop.permute.xlu0 %1972
          %1976 = vset.pattern.permute.xlu0 0
          %1977 = vperm.xlu0 %1976, %v1863
          %v1978 = vpop.permute.xlu0 %1977
          %1981 = vset.pattern.permute.xlu0 0
          %1982 = vperm.xlu0 %1981, %v1864
          %v1983 = vpop.permute.xlu0 %1982
          %1986 = vset.pattern.permute.xlu0 0
          %1987 = vperm.xlu0 %1986, %v1865
          %v1988 = vpop.permute.xlu0 %1987
          %1991 = vset.pattern.permute.xlu0 0
          %1992 = vperm.xlu0 %1991, %v1866
          %v1993 = vpop.permute.xlu0 %1992
          %1996 = vset.pattern.permute.xlu0 0
          %1997 = vperm.xlu0 %1996, %v1867
          %v1998 = vpop.permute.xlu0 %1997
          %2001 = vset.pattern.permute.xlu0 0
          %2002 = vperm.xlu0 %2001, %v1868
          %v2003 = vpop.permute.xlu0 %2002
          %2006 = vset.pattern.permute.xlu0 0
          %2007 = vperm.xlu0 %2006, %v1869
          %v2008 = vpop.permute.xlu0 %2007
          %2011 = vset.pattern.permute.xlu0 0
          %2012 = vperm.xlu0 %2011, %v1870
          %v2013 = vpop.permute.xlu0 %2012
          %2016 = vset.pattern.permute.xlu0 0
          %2017 = vperm.xlu0 %2016, %v1871
          %v2018 = vpop.permute.xlu0 %2017
          %2021 = vset.pattern.permute.xlu0 0
          %2022 = vperm.xlu0 %2021, %v1872
          %v2023 = vpop.permute.xlu0 %2022
          %2026 = vset.pattern.permute.xlu0 0
          %2027 = vperm.xlu0 %2026, %v1873
          %v2028 = vpop.permute.xlu0 %2027
          %2031 = vset.pattern.permute.xlu0 0
          %2032 = vperm.xlu0 %2031, %v1874
          %v2033 = vpop.permute.xlu0 %2032
          %v2035 = vmul.f32 %v712, %v1878
          %v2036 = vmul.f32 %v714, %v1878
          %v2037 = vmul.f32 %v716, %v1883
          %v2038 = vmul.f32 %v718, %v1883
          %v2039 = vmul.f32 %v722, %v1888
          %v2040 = vmul.f32 %v724, %v1888
          %v2041 = vmul.f32 %v726, %v1893
          %v2042 = vmul.f32 %v728, %v1893
          %v2043 = vmul.f32 %v732, %v1898
          %v2044 = vmul.f32 %v734, %v1898
          %v2045 = vmul.f32 %v736, %v1903
          %v2046 = vmul.f32 %v738, %v1903
          %v2047 = vmul.f32 %v742, %v1908
          %v2048 = vmul.f32 %v744, %v1908
          %v2049 = vmul.f32 %v746, %v1913
          %v2050 = vmul.f32 %v748, %v1913
          %v2051 = vmul.f32 %v752, %v1918
          %v2052 = vmul.f32 %v754, %v1918
          %v2053 = vmul.f32 %v756, %v1923
          %v2054 = vmul.f32 %v758, %v1923
          %v2055 = vmul.f32 %v762, %v1928
          %v2056 = vmul.f32 %v764, %v1928
          %v2057 = vmul.f32 %v766, %v1933
          %v2058 = vmul.f32 %v768, %v1933
          %v2059 = vmul.f32 %v772, %v1938
          %v2060 = vmul.f32 %v774, %v1938
          %v2061 = vmul.f32 %v776, %v1943
          %v2062 = vmul.f32 %v778, %v1943
          %v2063 = vmul.f32 %v782, %v1948
          %v2064 = vmul.f32 %v784, %v1948
          %v2065 = vmul.f32 %v786, %v1953
          %v2066 = vmul.f32 %v788, %v1953
          %v2067 = vmul.f32 %v792, %v1958
          %v2068 = vmul.f32 %v794, %v1958
          %v2069 = vmul.f32 %v796, %v1963
          %v2070 = vmul.f32 %v798, %v1963
          %v2071 = vmul.f32 %v802, %v1968
          %v2072 = vmul.f32 %v804, %v1968
          %v2073 = vmul.f32 %v806, %v1973
          %v2074 = vmul.f32 %v808, %v1973
          %v2075 = vmul.f32 %v812, %v1978
          %v2076 = vmul.f32 %v814, %v1978
          %v2077 = vmul.f32 %v816, %v1983
          %v2078 = vmul.f32 %v818, %v1983
          %v2079 = vmul.f32 %v822, %v1988
          %v2080 = vmul.f32 %v824, %v1988
          %v2081 = vmul.f32 %v826, %v1993
          %v2082 = vmul.f32 %v828, %v1993
          %v2083 = vmul.f32 %v832, %v1998
          %v2084 = vmul.f32 %v834, %v1998
          %v2085 = vmul.f32 %v836, %v2003
          %v2086 = vmul.f32 %v838, %v2003
          %v2087 = vmul.f32 %v842, %v2008
          %v2088 = vmul.f32 %v844, %v2008
          %v2089 = vmul.f32 %v846, %v2013
          %v2090 = vmul.f32 %v848, %v2013
          %v2091 = vmul.f32 %v852, %v2018
          %v2092 = vmul.f32 %v854, %v2018
          %v2093 = vmul.f32 %v856, %v2023
          %v2094 = vmul.f32 %v858, %v2023
          %v2095 = vmul.f32 %v862, %v2028
          %v2096 = vmul.f32 %v864, %v2028
          %v2097 = vmul.f32 %v866, %v2033
          %v2098 = vmul.f32 %v868, %v2033
          %v2099 = vld [vmem:[#allocation5] sm:$0xff]
          %v2100 = vld [vmem:[#allocation5 + $0x8] sm:$0xff]
          %v2101 = vld [vmem:[#allocation5 + $0x10] sm:$0xff]
          %v2102 = vld [vmem:[#allocation5 + $0x18] sm:$0xff]
          %v2103 = vld [vmem:[#allocation5 + $0x20] sm:$0xff]
          %v2104 = vld [vmem:[#allocation5 + $0x28] sm:$0xff]
          %v2105 = vld [vmem:[#allocation5 + $0x30] sm:$0xff]
          %v2106 = vld [vmem:[#allocation5 + $0x38] sm:$0xff]
          %v2107 = vld [vmem:[#allocation5 + $0x40] sm:$0xff]
          %v2108 = vld [vmem:[#allocation5 + $0x48] sm:$0xff]
          %v2109 = vld [vmem:[#allocation5 + $0x50] sm:$0xff]
          %v2110 = vld [vmem:[#allocation5 + $0x58] sm:$0xff]
          %v2111 = vld [vmem:[#allocation5 + $0x60] sm:$0xff]
          %v2112 = vld [vmem:[#allocation5 + $0x68] sm:$0xff]
          %v2113 = vld [vmem:[#allocation5 + $0x70] sm:$0xff]
          %v2114 = vld [vmem:[#allocation5 + $0x78] sm:$0xff]
          %v2115 = vld [vmem:[#allocation5 + $0x80] sm:$0xff]
          %v2116 = vld [vmem:[#allocation5 + $0x88] sm:$0xff]
          %v2117 = vld [vmem:[#allocation5 + $0x90] sm:$0xff]
          %v2118 = vld [vmem:[#allocation5 + $0x98] sm:$0xff]
          %v2119 = vld [vmem:[#allocation5 + $0xa0] sm:$0xff]
          %v2120 = vld [vmem:[#allocation5 + $0xa8] sm:$0xff]
          %v2121 = vld [vmem:[#allocation5 + $0xb0] sm:$0xff]
          %v2122 = vld [vmem:[#allocation5 + $0xb8] sm:$0xff]
          %v2123 = vld [vmem:[#allocation5 + $0xc0] sm:$0xff]
          %v2124 = vld [vmem:[#allocation5 + $0xc8] sm:$0xff]
          %v2125 = vld [vmem:[#allocation5 + $0xd0] sm:$0xff]
          %v2126 = vld [vmem:[#allocation5 + $0xd8] sm:$0xff]
          %v2127 = vld [vmem:[#allocation5 + $0xe0] sm:$0xff]
          %v2128 = vld [vmem:[#allocation5 + $0xe8] sm:$0xff]
          %v2129 = vld [vmem:[#allocation5 + $0xf0] sm:$0xff]
          %v2130 = vld [vmem:[#allocation5 + $0xf8] sm:$0xff]
          %2132 = vset.pattern.permute.xlu0 0
          %2133 = vperm.xlu0 %2132, %v2099
          %v2134 = vpop.permute.xlu0 %2133
          %2137 = vset.pattern.permute.xlu0 0
          %2138 = vperm.xlu0 %2137, %v2100
          %v2139 = vpop.permute.xlu0 %2138
          %2142 = vset.pattern.permute.xlu0 0
          %2143 = vperm.xlu0 %2142, %v2101
          %v2144 = vpop.permute.xlu0 %2143
          %2147 = vset.pattern.permute.xlu0 0
          %2148 = vperm.xlu0 %2147, %v2102
          %v2149 = vpop.permute.xlu0 %2148
          %2152 = vset.pattern.permute.xlu0 0
          %2153 = vperm.xlu0 %2152, %v2103
          %v2154 = vpop.permute.xlu0 %2153
          %2157 = vset.pattern.permute.xlu0 0
          %2158 = vperm.xlu0 %2157, %v2104
          %v2159 = vpop.permute.xlu0 %2158
          %2162 = vset.pattern.permute.xlu0 0
          %2163 = vperm.xlu0 %2162, %v2105
          %v2164 = vpop.permute.xlu0 %2163
          %2167 = vset.pattern.permute.xlu0 0
          %2168 = vperm.xlu0 %2167, %v2106
          %v2169 = vpop.permute.xlu0 %2168
          %2172 = vset.pattern.permute.xlu0 0
          %2173 = vperm.xlu0 %2172, %v2107
          %v2174 = vpop.permute.xlu0 %2173
          %2177 = vset.pattern.permute.xlu0 0
          %2178 = vperm.xlu0 %2177, %v2108
          %v2179 = vpop.permute.xlu0 %2178
          %2182 = vset.pattern.permute.xlu0 0
          %2183 = vperm.xlu0 %2182, %v2109
          %v2184 = vpop.permute.xlu0 %2183
          %2187 = vset.pattern.permute.xlu0 0
          %2188 = vperm.xlu0 %2187, %v2110
          %v2189 = vpop.permute.xlu0 %2188
          %2192 = vset.pattern.permute.xlu0 0
          %2193 = vperm.xlu0 %2192, %v2111
          %v2194 = vpop.permute.xlu0 %2193
          %2197 = vset.pattern.permute.xlu0 0
          %2198 = vperm.xlu0 %2197, %v2112
          %v2199 = vpop.permute.xlu0 %2198
          %2202 = vset.pattern.permute.xlu0 0
          %2203 = vperm.xlu0 %2202, %v2113
          %v2204 = vpop.permute.xlu0 %2203
          %2207 = vset.pattern.permute.xlu0 0
          %2208 = vperm.xlu0 %2207, %v2114
          %v2209 = vpop.permute.xlu0 %2208
          %2212 = vset.pattern.permute.xlu0 0
          %2213 = vperm.xlu0 %2212, %v2115
          %v2214 = vpop.permute.xlu0 %2213
          %2217 = vset.pattern.permute.xlu0 0
          %2218 = vperm.xlu0 %2217, %v2116
          %v2219 = vpop.permute.xlu0 %2218
          %2222 = vset.pattern.permute.xlu0 0
          %2223 = vperm.xlu0 %2222, %v2117
          %v2224 = vpop.permute.xlu0 %2223
          %2227 = vset.pattern.permute.xlu0 0
          %2228 = vperm.xlu0 %2227, %v2118
          %v2229 = vpop.permute.xlu0 %2228
          %2232 = vset.pattern.permute.xlu0 0
          %2233 = vperm.xlu0 %2232, %v2119
          %v2234 = vpop.permute.xlu0 %2233
          %2237 = vset.pattern.permute.xlu0 0
          %2238 = vperm.xlu0 %2237, %v2120
          %v2239 = vpop.permute.xlu0 %2238
          %2242 = vset.pattern.permute.xlu0 0
          %2243 = vperm.xlu0 %2242, %v2121
          %v2244 = vpop.permute.xlu0 %2243
          %2247 = vset.pattern.permute.xlu0 0
          %2248 = vperm.xlu0 %2247, %v2122
          %v2249 = vpop.permute.xlu0 %2248
          %2252 = vset.pattern.permute.xlu0 0
          %2253 = vperm.xlu0 %2252, %v2123
          %v2254 = vpop.permute.xlu0 %2253
          %2257 = vset.pattern.permute.xlu0 0
          %2258 = vperm.xlu0 %2257, %v2124
          %v2259 = vpop.permute.xlu0 %2258
          %2262 = vset.pattern.permute.xlu0 0
          %2263 = vperm.xlu0 %2262, %v2125
          %v2264 = vpop.permute.xlu0 %2263
          %2267 = vset.pattern.permute.xlu0 0
          %2268 = vperm.xlu0 %2267, %v2126
          %v2269 = vpop.permute.xlu0 %2268
          %2272 = vset.pattern.permute.xlu0 0
          %2273 = vperm.xlu0 %2272, %v2127
          %v2274 = vpop.permute.xlu0 %2273
          %2277 = vset.pattern.permute.xlu0 0
          %2278 = vperm.xlu0 %2277, %v2128
          %v2279 = vpop.permute.xlu0 %2278
          %2282 = vset.pattern.permute.xlu0 0
          %2283 = vperm.xlu0 %2282, %v2129
          %v2284 = vpop.permute.xlu0 %2283
          %2287 = vset.pattern.permute.xlu0 0
          %2288 = vperm.xlu0 %2287, %v2130
          %v2289 = vpop.permute.xlu0 %2288
          %v2291 = vadd.f32 %v2035, %v2134
          %v2292 = vadd.f32 %v2036, %v2134
          %v2293 = vadd.f32 %v2037, %v2139
          %v2294 = vadd.f32 %v2038, %v2139
          %v2295 = vadd.f32 %v2039, %v2144
          %v2296 = vadd.f32 %v2040, %v2144
          %v2297 = vadd.f32 %v2041, %v2149
          %v2298 = vadd.f32 %v2042, %v2149
          %v2299 = vadd.f32 %v2043, %v2154
          %v2300 = vadd.f32 %v2044, %v2154
          %v2301 = vadd.f32 %v2045, %v2159
          %v2302 = vadd.f32 %v2046, %v2159
          %v2303 = vadd.f32 %v2047, %v2164
          %v2304 = vadd.f32 %v2048, %v2164
          %v2305 = vadd.f32 %v2049, %v2169
          %v2306 = vadd.f32 %v2050, %v2169
          %v2307 = vadd.f32 %v2051, %v2174
          %v2308 = vadd.f32 %v2052, %v2174
          %v2309 = vadd.f32 %v2053, %v2179
          %v2310 = vadd.f32 %v2054, %v2179
          %v2311 = vadd.f32 %v2055, %v2184
          %v2312 = vadd.f32 %v2056, %v2184
          %v2313 = vadd.f32 %v2057, %v2189
          %v2314 = vadd.f32 %v2058, %v2189
          %v2315 = vadd.f32 %v2059, %v2194
          %v2316 = vadd.f32 %v2060, %v2194
          %v2317 = vadd.f32 %v2061, %v2199
          %v2318 = vadd.f32 %v2062, %v2199
          %v2319 = vadd.f32 %v2063, %v2204
          %v2320 = vadd.f32 %v2064, %v2204
          %v2321 = vadd.f32 %v2065, %v2209
          %v2322 = vadd.f32 %v2066, %v2209
          %v2323 = vadd.f32 %v2067, %v2214
          %v2324 = vadd.f32 %v2068, %v2214
          %v2325 = vadd.f32 %v2069, %v2219
          %v2326 = vadd.f32 %v2070, %v2219
          %v2327 = vadd.f32 %v2071, %v2224
          %v2328 = vadd.f32 %v2072, %v2224
          %v2329 = vadd.f32 %v2073, %v2229
          %v2330 = vadd.f32 %v2074, %v2229
          %v2331 = vadd.f32 %v2075, %v2234
          %v2332 = vadd.f32 %v2076, %v2234
          %v2333 = vadd.f32 %v2077, %v2239
          %v2334 = vadd.f32 %v2078, %v2239
          %v2335 = vadd.f32 %v2079, %v2244
          %v2336 = vadd.f32 %v2080, %v2244
          %v2337 = vadd.f32 %v2081, %v2249
          %v2338 = vadd.f32 %v2082, %v2249
          %v2339 = vadd.f32 %v2083, %v2254
          %v2340 = vadd.f32 %v2084, %v2254
          %v2341 = vadd.f32 %v2085, %v2259
          %v2342 = vadd.f32 %v2086, %v2259
          %v2343 = vadd.f32 %v2087, %v2264
          %v2344 = vadd.f32 %v2088, %v2264
          %v2345 = vadd.f32 %v2089, %v2269
          %v2346 = vadd.f32 %v2090, %v2269
          %v2347 = vadd.f32 %v2091, %v2274
          %v2348 = vadd.f32 %v2092, %v2274
          %v2349 = vadd.f32 %v2093, %v2279
          %v2350 = vadd.f32 %v2094, %v2279
          %v2351 = vadd.f32 %v2095, %v2284
          %v2352 = vadd.f32 %v2096, %v2284
          %v2353 = vadd.f32 %v2097, %v2289
          %v2354 = vadd.f32 %v2098, %v2289
          %v2355 = vmax.f32 %v2291, 0.0
          %v2356 = vmax.f32 %v2292, 0.0
          %v2357 = vmax.f32 %v2293, 0.0
          %v2358 = vmax.f32 %v2294, 0.0
          %v2359 = vmax.f32 %v2295, 0.0
          %v2360 = vmax.f32 %v2296, 0.0
          %v2361 = vmax.f32 %v2297, 0.0
          %v2362 = vmax.f32 %v2298, 0.0
          %v2363 = vmax.f32 %v2299, 0.0
          %v2364 = vmax.f32 %v2300, 0.0
          %v2365 = vmax.f32 %v2301, 0.0
          %v2366 = vmax.f32 %v2302, 0.0
          %v2367 = vmax.f32 %v2303, 0.0
          %v2368 = vmax.f32 %v2304, 0.0
          %v2369 = vmax.f32 %v2305, 0.0
          %v2370 = vmax.f32 %v2306, 0.0
          %v2371 = vmax.f32 %v2307, 0.0
          %v2372 = vmax.f32 %v2308, 0.0
          %v2373 = vmax.f32 %v2309, 0.0
          %v2374 = vmax.f32 %v2310, 0.0
          %v2375 = vmax.f32 %v2311, 0.0
          %v2376 = vmax.f32 %v2312, 0.0
          %v2377 = vmax.f32 %v2313, 0.0
          %v2378 = vmax.f32 %v2314, 0.0
          %v2379 = vmax.f32 %v2315, 0.0
          %v2380 = vmax.f32 %v2316, 0.0
          %v2381 = vmax.f32 %v2317, 0.0
          %v2382 = vmax.f32 %v2318, 0.0
          %v2383 = vmax.f32 %v2319, 0.0
          %v2384 = vmax.f32 %v2320, 0.0
          %v2385 = vmax.f32 %v2321, 0.0
          %v2386 = vmax.f32 %v2322, 0.0
          %v2387 = vmax.f32 %v2323, 0.0
          %v2388 = vmax.f32 %v2324, 0.0
          %v2389 = vmax.f32 %v2325, 0.0
          %v2390 = vmax.f32 %v2326, 0.0
          %v2391 = vmax.f32 %v2327, 0.0
          %v2392 = vmax.f32 %v2328, 0.0
          %v2393 = vmax.f32 %v2329, 0.0
          %v2394 = vmax.f32 %v2330, 0.0
          %v2395 = vmax.f32 %v2331, 0.0
          %v2396 = vmax.f32 %v2332, 0.0
          %v2397 = vmax.f32 %v2333, 0.0
          %v2398 = vmax.f32 %v2334, 0.0
          %v2399 = vmax.f32 %v2335, 0.0
          %v2400 = vmax.f32 %v2336, 0.0
          %v2401 = vmax.f32 %v2337, 0.0
          %v2402 = vmax.f32 %v2338, 0.0
          %v2403 = vmax.f32 %v2339, 0.0
          %v2404 = vmax.f32 %v2340, 0.0
          %v2405 = vmax.f32 %v2341, 0.0
          %v2406 = vmax.f32 %v2342, 0.0
          %v2407 = vmax.f32 %v2343, 0.0
          %v2408 = vmax.f32 %v2344, 0.0
          %v2409 = vmax.f32 %v2345, 0.0
          %v2410 = vmax.f32 %v2346, 0.0
          %v2411 = vmax.f32 %v2347, 0.0
          %v2412 = vmax.f32 %v2348, 0.0
          %v2413 = vmax.f32 %v2349, 0.0
          %v2414 = vmax.f32 %v2350, 0.0
          %v2415 = vmax.f32 %v2351, 0.0
          %v2416 = vmax.f32 %v2352, 0.0
          %v2417 = vmax.f32 %v2353, 0.0
          %v2418 = vmax.f32 %v2354, 0.0
          %v2419 = vld [vmem:[%s4] sm:$0xff]
          %v2420 = vld [vmem:[%s4 + $0x8] sm:$0xff]
          %v2421 = vpack.c.bf16 %v2357, %v2355
          %v2422 = vpack.c.bf16 %v2358, %v2356
          %v2423 = vpack.c.bf16 %v2361, %v2359
          %v2424 = vpack.c.bf16 %v2362, %v2360
          %v2425 = vpack.c.bf16 %v2365, %v2363
          %v2426 = vpack.c.bf16 %v2366, %v2364
          %v2427 = vpack.c.bf16 %v2369, %v2367
          %v2428 = vpack.c.bf16 %v2370, %v2368
          %v2429 = vpack.c.bf16 %v2373, %v2371
          %v2430 = vpack.c.bf16 %v2374, %v2372
          %v2431 = vpack.c.bf16 %v2377, %v2375
          %v2432 = vpack.c.bf16 %v2378, %v2376
          %v2433 = vpack.c.bf16 %v2381, %v2379
          %v2434 = vpack.c.bf16 %v2382, %v2380
          %v2435 = vpack.c.bf16 %v2385, %v2383
          %v2436 = vpack.c.bf16 %v2386, %v2384
          %v2437 = vpack.c.bf16 %v2389, %v2387
          %v2438 = vpack.c.bf16 %v2390, %v2388
          %v2439 = vpack.c.bf16 %v2393, %v2391
          %v2440 = vpack.c.bf16 %v2394, %v2392
          %v2441 = vpack.c.bf16 %v2397, %v2395
          %v2442 = vpack.c.bf16 %v2398, %v2396
          %v2443 = vpack.c.bf16 %v2401, %v2399
          %v2444 = vpack.c.bf16 %v2402, %v2400
          %v2445 = vpack.c.bf16 %v2405, %v2403
          %v2446 = vpack.c.bf16 %v2406, %v2404
          %v2447 = vpack.c.bf16 %v2409, %v2407
          %v2448 = vpack.c.bf16 %v2410, %v2408
          %v2449 = vpack.c.bf16 %v2413, %v2411
          %v2450 = vpack.c.bf16 %v2414, %v2412
          %v2451 = vpack.c.bf16 %v2417, %v2415
          %v2452 = vpack.c.bf16 %v2418, %v2416
          %v2455 = vunpack.c.l.b16 %v2419
          %v2456 = vunpack.c.h.b16 %v2419
          %v2457 = vunpack.c.l.b16 %v2420
          %v2458 = vunpack.c.h.b16 %v2420
          %v2459 = vpack.c.b16 %v2457, %v2455
          %v2460 = vpack.c.b16 %v2458, %v2456
          %2463 = vmatprep.subr.bf16.mxu0 %v2436
          %2464 = vmatpush1.bf16.msra.mxu0 %v2435
          %2465 = vmatprep.subr.bf16.mxu0 %v2434
          %2466 = vmatpush1.bf16.msra.mxu0 %v2433
          %2467 = vmatprep.subr.bf16.mxu0 %v2432
          %2468 = vmatpush1.bf16.msra.mxu0 %v2431
          %2469 = vmatprep.subr.bf16.mxu0 %v2430
          %2470 = vmatpush1.bf16.msra.mxu0 %v2429
          %2471 = vmatprep.subr.bf16.mxu0 %v2428
          %2472 = vmatpush1.bf16.msra.mxu0 %v2427
          %2473 = vmatprep.subr.bf16.mxu0 %v2426
          %2474 = vmatpush1.bf16.msra.mxu0 %v2425
          %2475 = vmatprep.subr.bf16.mxu0 %v2424
          %2476 = vmatpush1.bf16.msra.mxu0 %v2423
          %2477 = vmatprep.subr.bf16.mxu0 %v2422
          %2478 = vmatpush1.bf16.msra.mxu0 %v2421
          %2479 = vmatprep.subr.bf16.mxu0 %v2452
          %2480 = vmatpush2.bf16.msra.mxu0 %v2451
          %2481 = vmatprep.subr.bf16.mxu0 %v2450
          %2482 = vmatpush2.bf16.msra.mxu0 %v2449
          %2483 = vmatprep.subr.bf16.mxu0 %v2448
          %2484 = vmatpush2.bf16.msra.mxu0 %v2447
          %2485 = vmatprep.subr.bf16.mxu0 %v2446
          %2486 = vmatpush2.bf16.msra.mxu0 %v2445
          %2487 = vmatprep.subr.bf16.mxu0 %v2444
          %2488 = vmatpush2.bf16.msra.mxu0 %v2443
          %2489 = vmatprep.subr.bf16.mxu0 %v2442
          %2490 = vmatpush2.bf16.msra.mxu0 %v2441
          %2491 = vmatprep.subr.bf16.mxu0 %v2440
          %2492 = vmatpush2.bf16.msra.mxu0 %v2439
          %2493 = vmatprep.subr.bf16.mxu0 %v2438
          %2494 = vmatpush2.bf16.msra.mxu0 %v2437
          %2495 = vmatprep.mubr.bf16.mxu0 %v2460
          %2496 = vmatmul.mubr.bf16.gmra.mxu0 %v2459
          %v2497 = vpop.f32.mrf.mxu0
          %v2498 = vadd.f32 0.0, %v2497
          %v2499 = vpop.f32.mrf.mxu0
          %v2500 = vadd.f32 0.0, %v2499
          %v2501 = vpop.f32.mrf.mxu0
          %v2502 = vadd.f32 0.0, %v2501
          %v2503 = vpop.f32.mrf.mxu0
          %v2504 = vadd.f32 0.0, %v2503
          %2505 = vdwg.mxu0
          %p2506 = scmp.eq.s32.totalorder %s26, 1
          // Predicated region
          $region69: #{tpu_custom_call.1} parent=67 // pred_check
            %p2507 = pneg %p2506
          $region70: #{tpu_custom_call.1} parent=67 // pred_check_branch
            %2509 = sbr.rel (%p2507) target = $region72
          $region71: #{tpu_custom_call.1} parent=67 // pred_region
            %v2510 = vld [vmem:[#allocation6] sm:$0xff]
            %v2511 = vld [vmem:[#allocation6 + $0x8] sm:$0xff]
            %v2512 = vadd.f32 %v2498, %v2500
            %2513 = vadd.xlane.f32.xlu0 %v2512
            %v2514 = vpop.xlane.xlu0 %2513
            %v2515 = vadd.f32 %v2502, %v2504
            %2516 = vadd.xlane.f32.xlu0 %v2515
            %v2517 = vpop.xlane.xlu0 %2516
            %v2518 = vadd.f32 %v2510, %v2514
            %v2519 = vadd.f32 %v2511, %v2517
            %vm2520 = vcmask 7168
            %2521 = vst.msk [vmem:[#allocation6] sm:$0xff] %vm2520, %v2518
            %2522 = vst.msk [vmem:[#allocation6 + $0x8] sm:$0xff] %vm2520, %v2519
            %v2523 = vld [vmem:[#allocation7] sm:$0xff]
            %v2524 = vld [vmem:[#allocation7 + $0x8] sm:$0xff]
            %v2525 = vmul.f32 %v2498, %v2498
            %v2526 = vmul.f32 %v2500, %v2500
            %v2527 = vmul.f32 %v2502, %v2502
            %v2528 = vmul.f32 %v2504, %v2504
            %v2529 = vadd.f32 %v2525, %v2526
            %2530 = vadd.xlane.f32.xlu0 %v2529
            %v2531 = vpop.xlane.xlu0 %2530
            %v2532 = vadd.f32 %v2527, %v2528
            %2533 = vadd.xlane.f32.xlu0 %v2532
            %v2534 = vpop.xlane.xlu0 %2533
            %v2535 = vadd.f32 %v2523, %v2531
            %v2536 = vadd.f32 %v2524, %v2534
            %2537 = vst.msk [vmem:[#allocation7] sm:$0xff] %vm2520, %v2535
            %2538 = vst.msk [vmem:[#allocation7 + $0x8] sm:$0xff] %vm2520, %v2536
            %p2539 = scmp.eq.s32.totalorder %s27, 1
            %p2540 = pnand %p2539, %p312
            %p2541 = pneg %p2540
            // Predicated region
            $region73: #{tpu_custom_call.1} parent=71 // pred_check
              _
            $region74: #{tpu_custom_call.1} parent=71 // pred_check_branch
              %2543 = sbr.rel (%p2540) target = $region76
            $region75: #{tpu_custom_call.1} parent=71 // pred_region
              %v2544 = vld [vmem:[#allocation6] sm:$0xff]
              %v2545 = vld [vmem:[#allocation6 + $0x8] sm:$0xff]
              %v2546 = vmul.f32 %v2544, 0.001953125
              %v2547 = vmul.f32 %v2545, 0.001953125
              %v2548 = vld [vmem:[#allocation7] sm:$0xff]
              %v2549 = vld [vmem:[#allocation7 + $0x8] sm:$0xff]
              %v2550 = vmul.f32 %v2548, 0.001953125
              %v2551 = vmul.f32 %v2549, 0.001953125
              %v2552 = vmul.f32 %v2546, %v2546
              %v2553 = vmul.f32 %v2547, %v2547
              %v2554 = vsub.f32 %v2550, %v2552
              %v2555 = vsub.f32 %v2551, %v2553
              %v2556 = vmax.f32 %v2554, 0.0
              %v2557 = vmax.f32 %v2555, 0.0
              %v2558 = vld [vmem:[%s5] sm:$0xff]
              %v2559 = vld [vmem:[%s5 + $0x8] sm:$0xff]
              %v2560 = vadd.f32 %v2556, 1e-05
              %v2561 = vadd.f32 %v2557, 1e-05
              %v2562 = vrsqrt.pop %v2560
              %v2563 = vrsqrt.pop %v2561
              %v2564 = vmul.f32 %v2558, %v2562
              %v2565 = vmul.f32 %v2559, %v2563
              %2566 = vst.msk [vmem:[#allocation8] sm:$0xff] %vm2520, %v2564
              %2567 = vst.msk [vmem:[#allocation8 + $0x8] sm:$0xff] %vm2520, %v2565
              %v2568 = vld [vmem:[%s6] sm:$0xff]
              %v2569 = vld [vmem:[%s6 + $0x8] sm:$0xff]
              %v2570 = vmul.f32 %v2546, %v2564
              %v2571 = vmul.f32 %v2547, %v2565
              %v2572 = vsub.f32 %v2568, %v2570
              %v2573 = vsub.f32 %v2569, %v2571
              %2574 = vst.msk [vmem:[#allocation9] sm:$0xff] %vm2520, %v2572
              %2575 = vst.msk [vmem:[#allocation9 + $0x8] sm:$0xff] %vm2520, %v2573
            $region76: #{tpu_custom_call.1} parent=71 // pred_fallthru
              _
          $region72: #{tpu_custom_call.1} parent=67 // pred_fallthru
            _
          %p2576 = scmp.eq.s32.totalorder %s26, 2
          // Predicated region
          $region77: #{tpu_custom_call.1} parent=67 // pred_check
            %p2577 = pneg %p2576
          $region78: #{tpu_custom_call.1} parent=67 // pred_check_branch
            %2579 = sbr.rel (%p2577) target = $region80
          $region79: #{tpu_custom_call.1} parent=67 // pred_region
            %v2580 = vld [vmem:[#allocation8] sm:$0xff]
            %v2581 = vld [vmem:[#allocation8 + $0x8] sm:$0xff]
            %2583 = vset.pattern.permute.xlu0 0
            %2584 = vperm.xlu0 %2583, %v2580
            %v2585 = vpop.permute.xlu0 %2584
            %2588 = vset.pattern.permute.xlu0 0
            %2589 = vperm.xlu0 %2588, %v2581
            %v2590 = vpop.permute.xlu0 %2589
            %v2592 = vmul.f32 %v2498, %v2585
            %v2593 = vmul.f32 %v2500, %v2585
            %v2594 = vmul.f32 %v2502, %v2590
            %v2595 = vmul.f32 %v2504, %v2590
            %v2596 = vld [vmem:[#allocation9] sm:$0xff]
            %v2597 = vld [vmem:[#allocation9 + $0x8] sm:$0xff]
            %2599 = vset.pattern.permute.xlu0 0
            %2600 = vperm.xlu0 %2599, %v2596
            %v2601 = vpop.permute.xlu0 %2600
            %2604 = vset.pattern.permute.xlu0 0
            %2605 = vperm.xlu0 %2604, %v2597
            %v2606 = vpop.permute.xlu0 %2605
            %v2608 = vadd.f32 %v2592, %v2601
            %v2609 = vadd.f32 %v2593, %v2601
            %v2610 = vadd.f32 %v2594, %v2606
            %v2611 = vadd.f32 %v2595, %v2606
            %v2612 = vsub.f32 0.0, %v2608
            %v2613 = vsub.f32 0.0, %v2609
            %v2614 = vsub.f32 0.0, %v2610
            %v2615 = vsub.f32 0.0, %v2611
            %v2616 = vmul.f32 %v2612, 1.442695
            %v2617 = vpow.pop %v2616
            %v2618 = vmul.f32 %v2613, 1.442695
            %v2619 = vpow.pop %v2618
            %v2620 = vmul.f32 %v2614, 1.442695
            %v2621 = vpow.pop %v2620
            %v2622 = vmul.f32 %v2615, 1.442695
            %v2623 = vpow.pop %v2622
            %v2624 = vadd.f32 %v2617, 1.0
            %v2625 = vadd.f32 %v2619, 1.0
            %v2626 = vadd.f32 %v2621, 1.0
            %v2627 = vadd.f32 %v2623, 1.0
            %v2628 = vrcp.pop %v2624
            %v2629 = vmul.f32 1.0, %v2628
            %v2630 = vrcp.pop %v2625
            %v2631 = vmul.f32 1.0, %v2630
            %v2632 = vrcp.pop %v2626
            %v2633 = vmul.f32 1.0, %v2632
            %v2634 = vrcp.pop %v2627
            %v2635 = vmul.f32 1.0, %v2634
            // Predicated region
            $region81: #{tpu_custom_call.1} parent=79 // pred_check
              %p2636 = pneg %p312
            $region82: #{tpu_custom_call.1} parent=79 // pred_check_branch
              %2638 = sbr.rel (%p2636) target = $region84
            $region83: #{tpu_custom_call.1} parent=79 // pred_region
              %vm2639 = vcmask 7168
              %2640 = vst.msk [vmem:[#allocation10] sm:$0xff] %vm2639, 0.0
              %2641 = vst.msk [vmem:[#allocation10 + $0x8] sm:$0xff] %vm2639, 0.0
            $region84: #{tpu_custom_call.1} parent=79 // pred_fallthru
              _
            %v2642 = vld [vmem:[#allocation10] sm:$0xff]
            %v2643 = vld [vmem:[#allocation10 + $0x8] sm:$0xff]
            %v2644 = vadd.f32 %v2629, %v2631
            %2645 = vadd.xlane.f32.xlu0 %v2644
            %v2646 = vpop.xlane.xlu0 %2645
            %v2647 = vadd.f32 %v2633, %v2635
            %2648 = vadd.xlane.f32.xlu0 %v2647
            %v2649 = vpop.xlane.xlu0 %2648
            %v2650 = vadd.f32 %v2642, %v2646
            %v2651 = vadd.f32 %v2643, %v2649
            %vm2652 = vcmask 7168
            %2653 = vst.msk [vmem:[#allocation10] sm:$0xff] %vm2652, %v2650
            %2654 = vst.msk [vmem:[#allocation10 + $0x8] sm:$0xff] %vm2652, %v2651
            // Predicated region
            $region85: #{tpu_custom_call.1} parent=79 // pred_check
              %p2655 = pneg %p312
            $region86: #{tpu_custom_call.1} parent=79 // pred_check_branch
              %2657 = sbr.rel (%p2655) target = $region88
            $region87: #{tpu_custom_call.1} parent=79 // pred_region
              %v2658 = vlaneseq
              %v2659 = vand.u32 %v2658, 127
              %v2660 = vld [vmem:[%s7] sm:$0xff]
              %v2661 = vld [vmem:[%s7 + $0x8] sm:$0xff]
              %v2662 = vstv %s27
              %vm2663 = vcmp.eq.s32.totalorder %v2659, %v2662
              %v2664 = vld [vmem:[#allocation10] sm:$0xff]
              %v2665 = vld [vmem:[#allocation10 + $0x8] sm:$0xff]
              %v2666 = vmul.f32 %v2664, 0.00390625
              %v2667 = vmul.f32 %v2665, 0.00390625
              %2669 = vset.pattern.permute.xlu0 0
              %2670 = vperm.xlu0 %2669, %v2666
              %v2671 = vpop.permute.xlu0 %2670
              %2674 = vset.pattern.permute.xlu0 0
              %2675 = vperm.xlu0 %2674, %v2667
              %v2676 = vpop.permute.xlu0 %2675
              %v2678 = vsel %vm2663, %v2671, 0.0
              %v2679 = vsel %vm2663, %v2676, 0.0
              %v2680 = vadd.f32 %v2660, %v2678
              %v2681 = vadd.f32 %v2661, %v2679
              %vm2682 = vcmask 15360
              %2683 = vst.msk [vmem:[%s7] sm:$0xff] %vm2682, %v2680
              %2684 = vst.msk [vmem:[%s7 + $0x8] sm:$0xff] %vm2682, %v2681
            $region88: #{tpu_custom_call.1} parent=79 // pred_fallthru
              _
          $region80: #{tpu_custom_call.1} parent=67 // pred_fallthru
            _
        $region68: #{tpu_custom_call.1} parent=47 // pred_fallthru
          _
        // Predicated region
        $region89: #{tpu_custom_call.1} parent=47 // pred_check
          %p2685 = pneg %p207
        $region90: #{tpu_custom_call.1} parent=47 // pred_check_branch
          %2687 = sbr.rel (%p2685) target = $region92
        $region91: #{tpu_custom_call.1} parent=47 // pred_region
          _
        $region92: #{tpu_custom_call.1} parent=47 // pred_fallthru
          _
        // Predicated region
        $region93: #{tpu_custom_call.1} parent=47 // pred_check
          %p2688 = pneg %p207
        $region94: #{tpu_custom_call.1} parent=47 // pred_check_branch
          %2690 = sbr.rel (%p2688) target = $region96
        $region95: #{tpu_custom_call.1} parent=47 // pred_region
          _
        $region96: #{tpu_custom_call.1} parent=47 // pred_fallthru
          _
      $region48: #{tpu_custom_call.1} parent=5 // pred_fallthru
        _
      %p2691 = scmp.le.s32.totalorder 2, %s16
      // Predicated region
      $region97: #{tpu_custom_call.1} parent=5 // pred_check
        %p2692 = pneg %p2691
      $region98: #{tpu_custom_call.1} parent=5 // pred_check_branch
        %2694 = sbr.rel (%p2692) target = $region100
      $region99: #{tpu_custom_call.1} parent=5 // pred_region
        %s2695 = ssub.s32 %s16, 2
      $region100: #{tpu_custom_call.1} parent=5 // pred_fallthru
        _
    $region6: #{tpu_custom_call.1} parent=1 // loop_footer
      %s20 = sadd.s32 1, %s16
    $region7: #{tpu_custom_call.1} parent=1 // loop_footer_branch
      %15 = sbr.rel target = $region3
    $region8: #{tpu_custom_call.1} parent=1 // loop_exit
      _
    %2696 = vsyncpa [#allocation12], 1
    %s2697 = scalar_lea.sflag [#allocation12], 1
    %2698 = vsyncpa %s2697, 1

</llo_original>
